<compile_context>
chip_gen: v6e
topology: v6e:2x2x1
jax: 0.10.0
libtpu: 0.0.40
codegen_flags: <defaults>
</compile_context>

<pallas_src>
import functools

import numpy as np
import jax
import jax.numpy as jnp
from jax import lax
from jax.experimental import pallas as pl
from jax.experimental.pallas import tpu as pltpu

_VMEM_LIMIT = 48 * 1024 * 1024   # explicit scoped-VMEM budget (fits v5e/v6e/v7x)


# ----------------------------------------------------------------------------
# Kernel 1: fused (optional BN-apply + ReLU) -> in-VMEM zero pad -> 3x3x3 conv.
# Per grid step (one batch sample): 9 accumulated MXU matmuls, contraction
# K = W*Cin (the kw tap and the W axis are folded into K via banded weights).
# Also emits per-sample channel sum / sum-of-squares for the BN batch stats.
# ----------------------------------------------------------------------------
def _conv_kernel(x_ref, wb_ref, scale_ref, bias_ref, y_ref, s_ref, sq_ref,
                 xpad_ref, *, D, H, W, Cin, Cout, apply_bn_relu):
    # x_ref    : (1, D, H, W*Cin)    raw input tile (conv1: x, conv2: conv1 out)
    # wb_ref   : (9, W*Cin, W*Cout)  block-banded weights (kw + W-pad folded in)
    # scale_ref: (1, W*Cin)          BN scale tiled along W (used for conv2 only)
    # bias_ref : (1, W*Cin)          BN bias  tiled along W (used for conv2 only)
    # y_ref    : (1, D*H, W*Cout)    conv output (no bias: cancelled by BN)
    # s_ref    : (1, 1, W*Cout)      per-sample channel sums     (BN stats)
    # sq_ref   : (1, 1, W*Cout)      per-sample channel sum of squares
    # xpad_ref : (D+2, H+2, W*Cin)   VMEM halo scratch (D/H zero pad; the W pad
    #                                is implicit in the banded weights)
    x = x_ref[0]                                           # (D, H, W*Cin)
    if apply_bn_relu:
        x = jnp.maximum(x * scale_ref[0] + bias_ref[0], 0.0)

    # Zero the halo scratch and write the (activated) tile into its interior.
    # (Full re-zero every step: scratch is tiny and this stays correct even if
    #  the parallel grid axis is split across TensorCores.)
    xpad_ref[...] = jnp.zeros_like(xpad_ref)
    xpad_ref[1:D + 1, 1:H + 1, :] = x

    # 9 accumulated matmuls over (kd, kh); contraction K = W*Cin.
    acc = jnp.zeros((D * H, W * Cout), jnp.float32)
    for kk in range(9):
        kd, kh = kk // 3, kk % 3
        slab = xpad_ref[kd:kd + D, kh:kh + H, :]           # (D, H, W*Cin)
        slab = slab.reshape(D * H, W * Cin)
        acc = acc + jnp.dot(slab, wb_ref[kk],
                            preferred_element_type=jnp.float32)

    y_ref[0] = acc
    # Partial BN statistics; reduced over the batch axis in the wrapper.
    s_ref[0, 0] = jnp.sum(acc, axis=0)
    sq_ref[0, 0] = jnp.sum(acc * acc, axis=0)


def _conv3d_pallas(x_flat, wb, scale_t, bias_t, *, D, H, W, Cin, Cout,
                   apply_bn_relu):
    """x_flat: (N, D, H, W*Cin); wb: (9, W*Cin, W*Cout); scale/bias: (1, W*Cin)."""
    N = x_flat.shape[0]
    kern = functools.partial(_conv_kernel, D=D, H=H, W=W, Cin=Cin, Cout=Cout,
                             apply_bn_relu=apply_bn_relu)
    return pl.pallas_call(
        kern,
        out_shape=(
            jax.ShapeDtypeStruct((N, D * H, W * Cout), jnp.float32),
            jax.ShapeDtypeStruct((N, 1, W * Cout), jnp.float32),
            jax.ShapeDtypeStruct((N, 1, W * Cout), jnp.float32),
        ),
        grid_spec=pltpu.PrefetchScalarGridSpec(
            num_scalar_prefetch=0,
            grid=(N,),
            in_specs=[
                pl.BlockSpec((1, D, H, W * Cin), lambda n: (n, 0, 0, 0)),
                # Full weight block, same index every step -> loaded once.
                pl.BlockSpec((9, W * Cin, W * Cout), lambda n: (0, 0, 0)),
                pl.BlockSpec((1, W * Cin), lambda n: (0, 0)),
                pl.BlockSpec((1, W * Cin), lambda n: (0, 0)),
            ],
            out_specs=[
                pl.BlockSpec((1, D * H, W * Cout), lambda n: (n, 0, 0)),
                pl.BlockSpec((1, 1, W * Cout), lambda n: (n, 0, 0)),
                pl.BlockSpec((1, 1, W * Cout), lambda n: (n, 0, 0)),
            ],
            scratch_shapes=[pltpu.VMEM((D + 2, H + 2, W * Cin), jnp.float32)],
        ),
        compiler_params=pltpu.CompilerParams(
            dimension_semantics=("parallel",),
            vmem_limit_bytes=_VMEM_LIMIT),
    )(x_flat, wb, scale_t, bias_t)


# ----------------------------------------------------------------------------
# Kernel 2: fused BN-apply + ReLU + 2x2x2 maxpool (stride 2), lane-dense.
# Input is viewed as (N*D, H, W/2, 2*C) so the W-pair pooling is a static lane
# slice and the last dim is 2*C wide; no pooling windows touch HBM.  The H-pair
# pooling is a leading-dim reshape + max, so the out tile is stored in one
# unmasked write (no per-row masked stores).
# ----------------------------------------------------------------------------
def _bn_relu_pool_kernel(x_ref, scale_ref, bias_ref, res_ref, out_ref, *, Ho, C):
    # x_ref/res_ref: (2, H, Wo, 2*C)  (one D-pair);  out_ref: (1, Ho, Wo, C)
    act = jnp.maximum(x_ref[...] * scale_ref[0] + bias_ref[0], 0.0)
    res_ref[...] = act
    m = jnp.maximum(act[0], act[1])                        # pool over the D pair
    wo = m.shape[1]
    m = m.reshape(Ho, 2, wo, 2 * C)                        # split H into pairs
    m = jnp.maximum(m[:, 0], m[:, 1])                      # pool over the H pair
    out_ref[0] = jnp.maximum(m[..., :C], m[..., C:])       # pool over the W pair


def _bn_relu_maxpool_pallas(yv, scale_t, bias_t, *, H, W, C):
    """yv: (N*D, H, W//2, 2*C) — free reshape of the conv2 output."""
    ND = yv.shape[0]
    Ho, Wo = H // 2, W // 2
    kern = functools.partial(_bn_relu_pool_kernel, Ho=Ho, C=C)
    res, out = pl.pallas_call(
        kern,
        out_shape=(
            jax.ShapeDtypeStruct((ND, H, Wo, 2 * C), jnp.float32),
            jax.ShapeDtypeStruct((ND // 2, Ho, Wo, C), jnp.float32),
        ),
        grid_spec=pltpu.PrefetchScalarGridSpec(
            num_scalar_prefetch=0,
            grid=(ND // 2,),
            in_specs=[
                pl.BlockSpec((2, H, Wo, 2 * C), lambda i: (i, 0, 0, 0)),
                pl.BlockSpec((1, 2 * C), lambda i: (0, 0)),
                pl.BlockSpec((1, 2 * C), lambda i: (0, 0)),
            ],
            out_specs=[
                pl.BlockSpec((2, H, Wo, 2 * C), lambda i: (i, 0, 0, 0)),
                pl.BlockSpec((1, Ho, Wo, C), lambda i: (i, 0, 0, 0)),
            ],
        ),
        compiler_params=pltpu.CompilerParams(
            dimension_semantics=("parallel",),
            vmem_limit_bytes=_VMEM_LIMIT),
    )(yv, scale_t, bias_t)
    return res, out


# ----------------------------------------------------------------------------
# Host-side glue: banded weights and BN-stat finalization (tiny, trace-time /
# O(channels) work — intentionally plain JAX).
# ----------------------------------------------------------------------------
def _band_weights(w, W):
    """(3,3,3,Cin,Cout) -> (9, W*Cin, W*Cout) block-banded weight.

    Folds the kw tap (and its implicit zero padding along W) into the matmul:
      out[., wp*Cout + o] += in[., (wp+kw-1)*Cin + c] * w[kd, kh, kw, c, o]
    """
    K, _, _, Cin, Cout = w.shape
    wb = jnp.zeros((K, K, W * Cin, W * Cout), w.dtype)
    for kw in range(K):
        for wp in range(W):
            wi = wp + kw - 1
            if 0 <= wi < W:
                wb = wb.at[:, :, wi * Cin:(wi + 1) * Cin,
                           wp * Cout:(wp + 1) * Cout].set(w[:, :, kw])
    return wb.reshape(K * K, W * Cin, W * Cout)


def _bn_affine(s, sq, gamma, beta, *, count, W, C, eps=1e-5):
    """Finalize BN batch stats from the conv kernel's partial sums."""
    ssum = jnp.sum(s, axis=(0, 1)).reshape(W, C).sum(axis=0)
    sqsum = jnp.sum(sq, axis=(0, 1)).reshape(W, C).sum(axis=0)
    mean = ssum / count
    var = jnp.maximum(sqsum / count - mean * mean, 0.0)   # biased (training BN)
    scale = gamma * lax.rsqrt(var + eps)
    bias = beta - mean * scale
    return scale, bias


# ----------------------------------------------------------------------------
# ConvBlock forward (use_batch_norm=True, is_bottleneck=False)
# ----------------------------------------------------------------------------
def conv_block_forward(x, params, eps=1e-5):
    """x: (N, D, H, W, Cin) NDHWC.  Returns (out, res) like ConvBlock.forward."""
    N, D, H, W, Cin = x.shape
    Cmid = params["w1"].shape[-1]
    Cout = params["w2"].shape[-1]
    count = N * D * H * W

    wb1 = _band_weights(params["w1"], W)
    wb2 = _band_weights(params["w2"], W)

    # conv1.  Bias omitted: it is exactly cancelled by the training-mode BN
    # that follows (verified against the with-bias reference below).
    ones = jnp.ones((1, W * Cin), jnp.float32)
    zeros = jnp.zeros((1, W * Cin), jnp.float32)
    y1, s1, q1 = _conv3d_pallas(x.reshape(N, D, H, W * Cin), wb1, ones, zeros,
                                D=D, H=H, W=W, Cin=Cin, Cout=Cmid,
                                apply_bn_relu=False)
    scale1, bias1 = _bn_affine(s1, q1, params["g1"], params["be1"],
                               count=count, W=W, C=Cmid, eps=eps)

    # conv2 with BN1-apply + ReLU fused into the kernel prologue.
    y2, s2, q2 = _conv3d_pallas(y1.reshape(N, D, H, W * Cmid), wb2,
                                jnp.tile(scale1, W)[None],
                                jnp.tile(bias1, W)[None],
                                D=D, H=H, W=W, Cin=Cmid, Cout=Cout,
                                apply_bn_relu=True)
    scale2, bias2 = _bn_affine(s2, q2, params["g2"], params["be2"],
                               count=count, W=W, C=Cout, eps=eps)

    # BN2-apply + ReLU + 2x2x2 maxpool, lane-dense (last dim = 2*Cout).
    res4, out4 = _bn_relu_maxpool_pallas(
        y2.reshape(N * D, H, W // 2, 2 * Cout),
        jnp.tile(scale2, 2)[None], jnp.tile(bias2, 2)[None],
        H=H, W=W, C=Cout)

    res = res4.reshape(N, D, H, W, Cout)
    out = out4.reshape(N, D // 2, H // 2, W // 2, Cout)
    return out, res


# ----------------------------------------------------------------------------
# Pure-JAX reference (faithful to the PyTorch module, including conv bias).
# ----------------------------------------------------------------------------
def _ref_conv3d(x, w, b):
    y = lax.conv_general_dilated(
        x, w, window_strides=(1, 1, 1),
        padding=((1, 1), (1, 1), (1, 1)),
        dimension_numbers=("NDHWC", "DHWIO", "NDHWC"))
    return y + b


def _ref_bn_relu(x, gamma, beta, eps=1e-5):
    mean = jnp.mean(x, axis=(0, 1, 2, 3))
    var = jnp.var(x, axis=(0, 1, 2, 3))
    y = (x - mean) / jnp.sqrt(var + eps) * gamma + beta
    return jnp.maximum(y, 0.0)


def _ref_maxpool(x):
    N, D, H, W, C = x.shape
    return x.reshape(N, D // 2, 2, H // 2, 2, W // 2, 2, C).max(axis=(2, 4, 6))


def _ref_forward(x, p):
    h = _ref_bn_relu(_ref_conv3d(x, p["w1"], p["b1"]), p["g1"], p["be1"])
    res = _ref_bn_relu(_ref_conv3d(h, p["w2"], p["b2"]), p["g2"], p["be2"])
    return _ref_maxpool(res), res


if __name__ == "__main__":
    # Small shapes: batch=2, in_channels=4, out_channels=8 (mid=4), spatial 8^3.
    # Equivalent PyTorch NCDHW input shape: (2, 4, 8, 8, 8).
    N, D, H, W = 2, 8, 8, 8
    Cin, Cout = 4, 8
    Cmid = Cout // 2

    key = jax.random.PRNGKey(0)
    k1, k2, k3, k4, kx = jax.random.split(key, 5)
    params = {
        "w1": 0.1 * jax.random.normal(k1, (3, 3, 3, Cin, Cmid), jnp.float32),
        "b1": 0.1 * jax.random.normal(k2, (Cmid,), jnp.float32),
        "g1": jnp.ones((Cmid,), jnp.float32),
        "be1": jnp.zeros((Cmid,), jnp.float32),
        "w2": 0.1 * jax.random.normal(k3, (3, 3, 3, Cmid, Cout), jnp.float32),
        "b2": 0.1 * jax.random.normal(k4, (Cout,), jnp.float32),
        "g2": jnp.ones((Cout,), jnp.float32),
        "be2": jnp.zeros((Cout,), jnp.float32),
    }
    x = jax.random.normal(kx, (N, D, H, W, Cin), jnp.float32)

    fwd = jax.jit(conv_block_forward)
    out, res = fwd(x, params)
    out = jax.block_until_ready(out)
    res = jax.block_until_ready(res)

    out_ref, res_ref = _ref_forward(x, params)
    np.testing.assert_allclose(np.asarray(res), np.asarray(res_ref),
                               rtol=1e-4, atol=1e-4)
    np.testing.assert_allclose(np.asarray(out), np.asarray(out_ref),
                               rtol=1e-4, atol=1e-4)
    assert out.shape == (N, D // 2, H // 2, W // 2, Cout)
    assert res.shape == (N, D, H, W, Cout)

    print("KERNEL_OK")
</pallas_src>

<mosaic_0001>
module attributes {stable_mosaic.version = 11 : i64} {
  func.func @_conv_kernel(%arg0: i32, %arg1: memref<1x8x8x32xf32, #tpu.memory_space<vmem>>, %arg2: memref<9x32x32xf32, #tpu.memory_space<vmem>>, %arg3: memref<1x32xf32, #tpu.memory_space<vmem>>, %arg4: memref<1x32xf32, #tpu.memory_space<vmem>>, %arg5: memref<1x64x32xf32, #tpu.memory_space<vmem>>, %arg6: memref<1x1x32xf32, #tpu.memory_space<vmem>>, %arg7: memref<1x1x32xf32, #tpu.memory_space<vmem>>, %arg8: memref<10x10x32xf32, #tpu.memory_space<vmem>>) attributes {dimension_semantics = [#tpu.dimension_semantics<parallel>], iteration_bounds = array<i64: 2>, scalar_prefetch = 0 : i64, scratch_operands = 1 : i64, tpu.core_type = #tpu.core_type<tc>, window_params = [{transform_indices = @transform_0, window_bounds = array<i64: 1, 8, 8, 32>}, {pipeline_mode = #tpu.pipeline_mode<synchronous>, transform_indices = @transform_1, window_bounds = array<i64: 9, 32, 32>}, {pipeline_mode = #tpu.pipeline_mode<synchronous>, transform_indices = @transform_2, window_bounds = array<i64: 1, 32>}, {pipeline_mode = #tpu.pipeline_mode<synchronous>, transform_indices = @transform_3, window_bounds = array<i64: 1, 32>}, {transform_indices = @transform_4, window_bounds = array<i64: 1, 64, 32>}, {transform_indices = @transform_5, window_bounds = array<i64: 1, 1, 32>}, {transform_indices = @transform_6, window_bounds = array<i64: 1, 1, 32>}]} {
    %c0 = arith.constant 0 : index
    %c0_0 = arith.constant 0 : index
    %c0_1 = arith.constant 0 : index
    %c0_2 = arith.constant 0 : index
    %0 = vector.load %arg1[%c0, %c0_0, %c0_1, %c0_2] : memref<1x8x8x32xf32, #tpu.memory_space<vmem>>, vector<1x8x8x32xf32>
    %1 = vector.shape_cast %0 : vector<1x8x8x32xf32> to vector<8x8x32xf32>
    %cst = arith.constant 0.000000e+00 : f32
    %2 = vector.broadcast %cst : f32 to vector<10x10x32xf32>
    %c0_3 = arith.constant 0 : index
    %c0_4 = arith.constant 0 : index
    %c0_5 = arith.constant 0 : index
    %3 = vector.load %arg8[%c0_3, %c0_4, %c0_5] : memref<10x10x32xf32, #tpu.memory_space<vmem>>, vector<10x10x32xf32>
    tpu.vector_store %arg8[%c0_3, %c0_4, %c0_5], %2 {strides = array<i32>} : memref<10x10x32xf32, #tpu.memory_space<vmem>>, vector<10x10x32xf32>,
    %c1 = arith.constant 1 : index
    %c1_6 = arith.constant 1 : index
    %c0_7 = arith.constant 0 : index
    %4 = vector.load %arg8[%c1, %c1_6, %c0_7] : memref<10x10x32xf32, #tpu.memory_space<vmem>>, vector<8x8x32xf32>
    tpu.vector_store %arg8[%c1, %c1_6, %c0_7], %1 {strides = array<i32>} : memref<10x10x32xf32, #tpu.memory_space<vmem>>, vector<8x8x32xf32>,
    %cst_8 = arith.constant 0.000000e+00 : f32
    %5 = vector.broadcast %cst_8 : f32 to vector<64x32xf32>
    %c0_9 = arith.constant 0 : index
    %c0_10 = arith.constant 0 : index
    %c0_11 = arith.constant 0 : index
    %6 = vector.load %arg8[%c0_9, %c0_10, %c0_11] : memref<10x10x32xf32, #tpu.memory_space<vmem>>, vector<8x8x32xf32>
    %7 = vector.shape_cast %6 : vector<8x8x32xf32> to vector<64x32xf32>
    %c0_12 = arith.constant 0 : index
    %c0_13 = arith.constant 0 : index
    %c0_14 = arith.constant 0 : index
    %8 = vector.load %arg2[%c0_12, %c0_13, %c0_14] : memref<9x32x32xf32, #tpu.memory_space<vmem>>, vector<1x32x32xf32>
    %9 = vector.shape_cast %8 : vector<1x32x32xf32> to vector<32x32xf32>
    %cst_15 = arith.constant dense<0.000000e+00> : vector<64x32xf32>
    %10 = tpu.matmul %7, %9, %cst_15 {dimension_numbers = #tpu.dot_dimension_numbers<[1], [0], [0], [1], [0, 0, 1, 1], [], []>} : vector<64x32xf32>, vector<32x32xf32>, vector<64x32xf32> -> vector<64x32xf32>
    %11 = arith.addf %5, %10 : vector<64x32xf32>
    %c0_16 = arith.constant 0 : index
    %c1_17 = arith.constant 1 : index
    %c0_18 = arith.constant 0 : index
    %12 = vector.load %arg8[%c0_16, %c1_17, %c0_18] : memref<10x10x32xf32, #tpu.memory_space<vmem>>, vector<8x8x32xf32>
    %13 = vector.shape_cast %12 : vector<8x8x32xf32> to vector<64x32xf32>
    %c1_19 = arith.constant 1 : index
    %c0_20 = arith.constant 0 : index
    %c0_21 = arith.constant 0 : index
    %14 = vector.load %arg2[%c1_19, %c0_20, %c0_21] : memref<9x32x32xf32, #tpu.memory_space<vmem>>, vector<1x32x32xf32>
    %15 = vector.shape_cast %14 : vector<1x32x32xf32> to vector<32x32xf32>
    %cst_22 = arith.constant dense<0.000000e+00> : vector<64x32xf32>
    %16 = tpu.matmul %13, %15, %cst_22 {dimension_numbers = #tpu.dot_dimension_numbers<[1], [0], [0], [1], [0, 0, 1, 1], [], []>} : vector<64x32xf32>, vector<32x32xf32>, vector<64x32xf32> -> vector<64x32xf32>
    %17 = arith.addf %11, %16 : vector<64x32xf32>
    %c0_23 = arith.constant 0 : index
    %c2 = arith.constant 2 : index
    %c0_24 = arith.constant 0 : index
    %18 = vector.load %arg8[%c0_23, %c2, %c0_24] : memref<10x10x32xf32, #tpu.memory_space<vmem>>, vector<8x8x32xf32>
    %19 = vector.shape_cast %18 : vector<8x8x32xf32> to vector<64x32xf32>
    %c2_25 = arith.constant 2 : index
    %c0_26 = arith.constant 0 : index
    %c0_27 = arith.constant 0 : index
    %20 = vector.load %arg2[%c2_25, %c0_26, %c0_27] : memref<9x32x32xf32, #tpu.memory_space<vmem>>, vector<1x32x32xf32>
    %21 = vector.shape_cast %20 : vector<1x32x32xf32> to vector<32x32xf32>
    %cst_28 = arith.constant dense<0.000000e+00> : vector<64x32xf32>
    %22 = tpu.matmul %19, %21, %cst_28 {dimension_numbers = #tpu.dot_dimension_numbers<[1], [0], [0], [1], [0, 0, 1, 1], [], []>} : vector<64x32xf32>, vector<32x32xf32>, vector<64x32xf32> -> vector<64x32xf32>
    %23 = arith.addf %17, %22 : vector<64x32xf32>
    %c1_29 = arith.constant 1 : index
    %c0_30 = arith.constant 0 : index
    %c0_31 = arith.constant 0 : index
    %24 = vector.load %arg8[%c1_29, %c0_30, %c0_31] : memref<10x10x32xf32, #tpu.memory_space<vmem>>, vector<8x8x32xf32>
    %25 = vector.shape_cast %24 : vector<8x8x32xf32> to vector<64x32xf32>
    %c3 = arith.constant 3 : index
    %c0_32 = arith.constant 0 : index
    %c0_33 = arith.constant 0 : index
    %26 = vector.load %arg2[%c3, %c0_32, %c0_33] : memref<9x32x32xf32, #tpu.memory_space<vmem>>, vector<1x32x32xf32>
    %27 = vector.shape_cast %26 : vector<1x32x32xf32> to vector<32x32xf32>
    %cst_34 = arith.constant dense<0.000000e+00> : vector<64x32xf32>
    %28 = tpu.matmul %25, %27, %cst_34 {dimension_numbers = #tpu.dot_dimension_numbers<[1], [0], [0], [1], [0, 0, 1, 1], [], []>} : vector<64x32xf32>, vector<32x32xf32>, vector<64x32xf32> -> vector<64x32xf32>
    %29 = arith.addf %23, %28 : vector<64x32xf32>
    %c1_35 = arith.constant 1 : index
    %c1_36 = arith.constant 1 : index
    %c0_37 = arith.constant 0 : index
    %30 = vector.load %arg8[%c1_35, %c1_36, %c0_37] : memref<10x10x32xf32, #tpu.memory_space<vmem>>, vector<8x8x32xf32>
    %31 = vector.shape_cast %30 : vector<8x8x32xf32> to vector<64x32xf32>
    %c4 = arith.constant 4 : index
    %c0_38 = arith.constant 0 : index
    %c0_39 = arith.constant 0 : index
    %32 = vector.load %arg2[%c4, %c0_38, %c0_39] : memref<9x32x32xf32, #tpu.memory_space<vmem>>, vector<1x32x32xf32>
    %33 = vector.shape_cast %32 : vector<1x32x32xf32> to vector<32x32xf32>
    %cst_40 = arith.constant dense<0.000000e+00> : vector<64x32xf32>
    %34 = tpu.matmul %31, %33, %cst_40 {dimension_numbers = #tpu.dot_dimension_numbers<[1], [0], [0], [1], [0, 0, 1, 1], [], []>} : vector<64x32xf32>, vector<32x32xf32>, vector<64x32xf32> -> vector<64x32xf32>
    %35 = arith.addf %29, %34 : vector<64x32xf32>
    %c1_41 = arith.constant 1 : index
    %c2_42 = arith.constant 2 : index
    %c0_43 = arith.constant 0 : index
    %36 = vector.load %arg8[%c1_41, %c2_42, %c0_43] : memref<10x10x32xf32, #tpu.memory_space<vmem>>, vector<8x8x32xf32>
    %37 = vector.shape_cast %36 : vector<8x8x32xf32> to vector<64x32xf32>
    %c5 = arith.constant 5 : index
    %c0_44 = arith.constant 0 : index
    %c0_45 = arith.constant 0 : index
    %38 = vector.load %arg2[%c5, %c0_44, %c0_45] : memref<9x32x32xf32, #tpu.memory_space<vmem>>, vector<1x32x32xf32>
    %39 = vector.shape_cast %38 : vector<1x32x32xf32> to vector<32x32xf32>
    %cst_46 = arith.constant dense<0.000000e+00> : vector<64x32xf32>
    %40 = tpu.matmul %37, %39, %cst_46 {dimension_numbers = #tpu.dot_dimension_numbers<[1], [0], [0], [1], [0, 0, 1, 1], [], []>} : vector<64x32xf32>, vector<32x32xf32>, vector<64x32xf32> -> vector<64x32xf32>
    %41 = arith.addf %35, %40 : vector<64x32xf32>
    %c2_47 = arith.constant 2 : index
    %c0_48 = arith.constant 0 : index
    %c0_49 = arith.constant 0 : index
    %42 = vector.load %arg8[%c2_47, %c0_48, %c0_49] : memref<10x10x32xf32, #tpu.memory_space<vmem>>, vector<8x8x32xf32>
    %43 = vector.shape_cast %42 : vector<8x8x32xf32> to vector<64x32xf32>
    %c6 = arith.constant 6 : index
    %c0_50 = arith.constant 0 : index
    %c0_51 = arith.constant 0 : index
    %44 = vector.load %arg2[%c6, %c0_50, %c0_51] : memref<9x32x32xf32, #tpu.memory_space<vmem>>, vector<1x32x32xf32>
    %45 = vector.shape_cast %44 : vector<1x32x32xf32> to vector<32x32xf32>
    %cst_52 = arith.constant dense<0.000000e+00> : vector<64x32xf32>
    %46 = tpu.matmul %43, %45, %cst_52 {dimension_numbers = #tpu.dot_dimension_numbers<[1], [0], [0], [1], [0, 0, 1, 1], [], []>} : vector<64x32xf32>, vector<32x32xf32>, vector<64x32xf32> -> vector<64x32xf32>
    %47 = arith.addf %41, %46 : vector<64x32xf32>
    %c2_53 = arith.constant 2 : index
    %c1_54 = arith.constant 1 : index
    %c0_55 = arith.constant 0 : index
    %48 = vector.load %arg8[%c2_53, %c1_54, %c0_55] : memref<10x10x32xf32, #tpu.memory_space<vmem>>, vector<8x8x32xf32>
    %49 = vector.shape_cast %48 : vector<8x8x32xf32> to vector<64x32xf32>
    %c7 = arith.constant 7 : index
    %c0_56 = arith.constant 0 : index
    %c0_57 = arith.constant 0 : index
    %50 = vector.load %arg2[%c7, %c0_56, %c0_57] : memref<9x32x32xf32, #tpu.memory_space<vmem>>, vector<1x32x32xf32>
    %51 = vector.shape_cast %50 : vector<1x32x32xf32> to vector<32x32xf32>
    %cst_58 = arith.constant dense<0.000000e+00> : vector<64x32xf32>
    %52 = tpu.matmul %49, %51, %cst_58 {dimension_numbers = #tpu.dot_dimension_numbers<[1], [0], [0], [1], [0, 0, 1, 1], [], []>} : vector<64x32xf32>, vector<32x32xf32>, vector<64x32xf32> -> vector<64x32xf32>
    %53 = arith.addf %47, %52 : vector<64x32xf32>
    %c2_59 = arith.constant 2 : index
    %c2_60 = arith.constant 2 : index
    %c0_61 = arith.constant 0 : index
    %54 = vector.load %arg8[%c2_59, %c2_60, %c0_61] : memref<10x10x32xf32, #tpu.memory_space<vmem>>, vector<8x8x32xf32>
    %55 = vector.shape_cast %54 : vector<8x8x32xf32> to vector<64x32xf32>
    %c8 = arith.constant 8 : index
    %c0_62 = arith.constant 0 : index
    %c0_63 = arith.constant 0 : index
    %56 = vector.load %arg2[%c8, %c0_62, %c0_63] : memref<9x32x32xf32, #tpu.memory_space<vmem>>, vector<1x32x32xf32>
    %57 = vector.shape_cast %56 : vector<1x32x32xf32> to vector<32x32xf32>
    %cst_64 = arith.constant dense<0.000000e+00> : vector<64x32xf32>
    %58 = tpu.matmul %55, %57, %cst_64 {dimension_numbers = #tpu.dot_dimension_numbers<[1], [0], [0], [1], [0, 0, 1, 1], [], []>} : vector<64x32xf32>, vector<32x32xf32>, vector<64x32xf32> -> vector<64x32xf32>
    %59 = arith.addf %53, %58 : vector<64x32xf32>
    %c0_65 = arith.constant 0 : index
    %c0_66 = arith.constant 0 : index
    %c0_67 = arith.constant 0 : index
    %60 = vector.load %arg5[%c0_65, %c0_66, %c0_67] : memref<1x64x32xf32, #tpu.memory_space<vmem>>, vector<1x64x32xf32>
    %61 = vector.shape_cast %60 : vector<1x64x32xf32> to vector<64x32xf32>
    %62 = vector.shape_cast %59 : vector<64x32xf32> to vector<1x64x32xf32>
    tpu.vector_store %arg5[%c0_65, %c0_66, %c0_67], %62 {strides = array<i32>} : memref<1x64x32xf32, #tpu.memory_space<vmem>>, vector<1x64x32xf32>,
    %cst_68 = arith.constant dense<0.000000e+00> : vector<32xf32>
    %63 = vector.multi_reduction <add>, %59, %cst_68 [0] : vector<64x32xf32> to vector<32xf32>
    %c0_69 = arith.constant 0 : index
    %c0_70 = arith.constant 0 : index
    %c0_71 = arith.constant 0 : index
    %64 = vector.load %arg6[%c0_69, %c0_70, %c0_71] : memref<1x1x32xf32, #tpu.memory_space<vmem>>, vector<1x1x32xf32>
    %65 = vector.shape_cast %64 : vector<1x1x32xf32> to vector<32xf32>
    %66 = vector.shape_cast %63 : vector<32xf32> to vector<1x1x32xf32>
    tpu.vector_store %arg6[%c0_69, %c0_70, %c0_71], %66 {strides = array<i32>} : memref<1x1x32xf32, #tpu.memory_space<vmem>>, vector<1x1x32xf32>,
    %67 = arith.mulf %59, %59 : vector<64x32xf32>
    %cst_72 = arith.constant dense<0.000000e+00> : vector<32xf32>
    %68 = vector.multi_reduction <add>, %67, %cst_72 [0] : vector<64x32xf32> to vector<32xf32>
    %c0_73 = arith.constant 0 : index
    %c0_74 = arith.constant 0 : index
    %c0_75 = arith.constant 0 : index
    %69 = vector.load %arg7[%c0_73, %c0_74, %c0_75] : memref<1x1x32xf32, #tpu.memory_space<vmem>>, vector<1x1x32xf32>
    %70 = vector.shape_cast %69 : vector<1x1x32xf32> to vector<32xf32>
    %71 = vector.shape_cast %68 : vector<32xf32> to vector<1x1x32xf32>
    tpu.vector_store %arg7[%c0_73, %c0_74, %c0_75], %71 {strides = array<i32>} : memref<1x1x32xf32, #tpu.memory_space<vmem>>, vector<1x1x32xf32>,
    return
  }
  func.func @transform_0(%arg0: i32) -> (i32, i32, i32, i32) {
    %c0_i32 = arith.constant 0 : i32
    %c0_i32_0 = arith.constant 0 : i32
    %c0_i32_1 = arith.constant 0 : i32
    %c0_i32_2 = arith.constant 0 : i32
    return %arg0, %c0_i32, %c0_i32_0, %c0_i32_1 : i32, i32, i32, i32
  }
  func.func @transform_1(%arg0: i32) -> (i32, i32, i32) {
    %c0_i32 = arith.constant 0 : i32
    %c0_i32_0 = arith.constant 0 : i32
    %c0_i32_1 = arith.constant 0 : i32
    %c0_i32_2 = arith.constant 0 : i32
    return %c0_i32, %c0_i32_0, %c0_i32_1 : i32, i32, i32
  }
  func.func @transform_2(%arg0: i32) -> (i32, i32) {
    %c0_i32 = arith.constant 0 : i32
    %c0_i32_0 = arith.constant 0 : i32
    %c0_i32_1 = arith.constant 0 : i32
    return %c0_i32, %c0_i32_0 : i32, i32
  }
  func.func @transform_3(%arg0: i32) -> (i32, i32) {
    %c0_i32 = arith.constant 0 : i32
    %c0_i32_0 = arith.constant 0 : i32
    %c0_i32_1 = arith.constant 0 : i32
    return %c0_i32, %c0_i32_0 : i32, i32
  }
  func.func @transform_4(%arg0: i32) -> (i32, i32, i32) {
    %c0_i32 = arith.constant 0 : i32
    %c0_i32_0 = arith.constant 0 : i32
    %c0_i32_1 = arith.constant 0 : i32
    return %arg0, %c0_i32, %c0_i32_0 : i32, i32, i32
  }
  func.func @transform_5(%arg0: i32) -> (i32, i32, i32) {
    %c0_i32 = arith.constant 0 : i32
    %c0_i32_0 = arith.constant 0 : i32
    %c0_i32_1 = arith.constant 0 : i32
    return %arg0, %c0_i32, %c0_i32_0 : i32, i32, i32
  }
  func.func @transform_6(%arg0: i32) -> (i32, i32, i32) {
    %c0_i32 = arith.constant 0 : i32
    %c0_i32_0 = arith.constant 0 : i32
    %c0_i32_1 = arith.constant 0 : i32
    return %arg0, %c0_i32, %c0_i32_0 : i32, i32, i32
  }
}

module attributes {stable_mosaic.version = 11 : i64} {
  func.func @_conv_kernel(%arg0: i32, %arg1: memref<1x8x8x32xf32, #tpu.memory_space<vmem>>, %arg2: memref<9x32x64xf32, #tpu.memory_space<vmem>>, %arg3: memref<1x32xf32, #tpu.memory_space<vmem>>, %arg4: memref<1x32xf32, #tpu.memory_space<vmem>>, %arg5: memref<1x64x64xf32, #tpu.memory_space<vmem>>, %arg6: memref<1x1x64xf32, #tpu.memory_space<vmem>>, %arg7: memref<1x1x64xf32, #tpu.memory_space<vmem>>, %arg8: memref<10x10x32xf32, #tpu.memory_space<vmem>>) attributes {dimension_semantics = [#tpu.dimension_semantics<parallel>], iteration_bounds = array<i64: 2>, scalar_prefetch = 0 : i64, scratch_operands = 1 : i64, tpu.core_type = #tpu.core_type<tc>, window_params = [{transform_indices = @transform_0, window_bounds = array<i64: 1, 8, 8, 32>}, {pipeline_mode = #tpu.pipeline_mode<synchronous>, transform_indices = @transform_1, window_bounds = array<i64: 9, 32, 64>}, {pipeline_mode = #tpu.pipeline_mode<synchronous>, transform_indices = @transform_2, window_bounds = array<i64: 1, 32>}, {pipeline_mode = #tpu.pipeline_mode<synchronous>, transform_indices = @transform_3, window_bounds = array<i64: 1, 32>}, {transform_indices = @transform_4, window_bounds = array<i64: 1, 64, 64>}, {transform_indices = @transform_5, window_bounds = array<i64: 1, 1, 64>}, {transform_indices = @transform_6, window_bounds = array<i64: 1, 1, 64>}]} {
    %c0 = arith.constant 0 : index
    %c0_0 = arith.constant 0 : index
    %c0_1 = arith.constant 0 : index
    %c0_2 = arith.constant 0 : index
    %0 = vector.load %arg1[%c0, %c0_0, %c0_1, %c0_2] : memref<1x8x8x32xf32, #tpu.memory_space<vmem>>, vector<1x8x8x32xf32>
    %1 = vector.shape_cast %0 : vector<1x8x8x32xf32> to vector<8x8x32xf32>
    %c0_3 = arith.constant 0 : index
    %c0_4 = arith.constant 0 : index
    %2 = vector.load %arg3[%c0_3, %c0_4] : memref<1x32xf32, #tpu.memory_space<vmem>>, vector<1x32xf32>
    %3 = vector.shape_cast %2 : vector<1x32xf32> to vector<32xf32>
    %4 = vector.shape_cast %3 : vector<32xf32> to vector<1x1x32xf32>
    %5 = vector.broadcast %4 : vector<1x1x32xf32> to vector<8x8x32xf32>
    %6 = arith.mulf %1, %5 : vector<8x8x32xf32>
    %c0_5 = arith.constant 0 : index
    %c0_6 = arith.constant 0 : index
    %7 = vector.load %arg4[%c0_5, %c0_6] : memref<1x32xf32, #tpu.memory_space<vmem>>, vector<1x32xf32>
    %8 = vector.shape_cast %7 : vector<1x32xf32> to vector<32xf32>
    %9 = vector.shape_cast %8 : vector<32xf32> to vector<1x1x32xf32>
    %10 = vector.broadcast %9 : vector<1x1x32xf32> to vector<8x8x32xf32>
    %11 = arith.addf %6, %10 : vector<8x8x32xf32>
    %cst = arith.constant 0.000000e+00 : f32
    %12 = vector.broadcast %cst : f32 to vector<8x8x32xf32>
    %13 = arith.maximumf %11, %12 : vector<8x8x32xf32>
    %cst_7 = arith.constant 0.000000e+00 : f32
    %14 = vector.broadcast %cst_7 : f32 to vector<10x10x32xf32>
    %c0_8 = arith.constant 0 : index
    %c0_9 = arith.constant 0 : index
    %c0_10 = arith.constant 0 : index
    %15 = vector.load %arg8[%c0_8, %c0_9, %c0_10] : memref<10x10x32xf32, #tpu.memory_space<vmem>>, vector<10x10x32xf32>
    tpu.vector_store %arg8[%c0_8, %c0_9, %c0_10], %14 {strides = array<i32>} : memref<10x10x32xf32, #tpu.memory_space<vmem>>, vector<10x10x32xf32>,
    %c1 = arith.constant 1 : index
    %c1_11 = arith.constant 1 : index
    %c0_12 = arith.constant 0 : index
    %16 = vector.load %arg8[%c1, %c1_11, %c0_12] : memref<10x10x32xf32, #tpu.memory_space<vmem>>, vector<8x8x32xf32>
    tpu.vector_store %arg8[%c1, %c1_11, %c0_12], %13 {strides = array<i32>} : memref<10x10x32xf32, #tpu.memory_space<vmem>>, vector<8x8x32xf32>,
    %cst_13 = arith.constant 0.000000e+00 : f32
    %17 = vector.broadcast %cst_13 : f32 to vector<64x64xf32>
    %c0_14 = arith.constant 0 : index
    %c0_15 = arith.constant 0 : index
    %c0_16 = arith.constant 0 : index
    %18 = vector.load %arg8[%c0_14, %c0_15, %c0_16] : memref<10x10x32xf32, #tpu.memory_space<vmem>>, vector<8x8x32xf32>
    %19 = vector.shape_cast %18 : vector<8x8x32xf32> to vector<64x32xf32>
    %c0_17 = arith.constant 0 : index
    %c0_18 = arith.constant 0 : index
    %c0_19 = arith.constant 0 : index
    %20 = vector.load %arg2[%c0_17, %c0_18, %c0_19] : memref<9x32x64xf32, #tpu.memory_space<vmem>>, vector<1x32x64xf32>
    %21 = vector.shape_cast %20 : vector<1x32x64xf32> to vector<32x64xf32>
    %cst_20 = arith.constant dense<0.000000e+00> : vector<64x64xf32>
    %22 = tpu.matmul %19, %21, %cst_20 {dimension_numbers = #tpu.dot_dimension_numbers<[1], [0], [0], [1], [0, 0, 1, 1], [], []>} : vector<64x32xf32>, vector<32x64xf32>, vector<64x64xf32> -> vector<64x64xf32>
    %23 = arith.addf %17, %22 : vector<64x64xf32>
    %c0_21 = arith.constant 0 : index
    %c1_22 = arith.constant 1 : index
    %c0_23 = arith.constant 0 : index
    %24 = vector.load %arg8[%c0_21, %c1_22, %c0_23] : memref<10x10x32xf32, #tpu.memory_space<vmem>>, vector<8x8x32xf32>
    %25 = vector.shape_cast %24 : vector<8x8x32xf32> to vector<64x32xf32>
    %c1_24 = arith.constant 1 : index
    %c0_25 = arith.constant 0 : index
    %c0_26 = arith.constant 0 : index
    %26 = vector.load %arg2[%c1_24, %c0_25, %c0_26] : memref<9x32x64xf32, #tpu.memory_space<vmem>>, vector<1x32x64xf32>
    %27 = vector.shape_cast %26 : vector<1x32x64xf32> to vector<32x64xf32>
    %cst_27 = arith.constant dense<0.000000e+00> : vector<64x64xf32>
    %28 = tpu.matmul %25, %27, %cst_27 {dimension_numbers = #tpu.dot_dimension_numbers<[1], [0], [0], [1], [0, 0, 1, 1], [], []>} : vector<64x32xf32>, vector<32x64xf32>, vector<64x64xf32> -> vector<64x64xf32>
    %29 = arith.addf %23, %28 : vector<64x64xf32>
    %c0_28 = arith.constant 0 : index
    %c2 = arith.constant 2 : index
    %c0_29 = arith.constant 0 : index
    %30 = vector.load %arg8[%c0_28, %c2, %c0_29] : memref<10x10x32xf32, #tpu.memory_space<vmem>>, vector<8x8x32xf32>
    %31 = vector.shape_cast %30 : vector<8x8x32xf32> to vector<64x32xf32>
    %c2_30 = arith.constant 2 : index
    %c0_31 = arith.constant 0 : index
    %c0_32 = arith.constant 0 : index
    %32 = vector.load %arg2[%c2_30, %c0_31, %c0_32] : memref<9x32x64xf32, #tpu.memory_space<vmem>>, vector<1x32x64xf32>
    %33 = vector.shape_cast %32 : vector<1x32x64xf32> to vector<32x64xf32>
    %cst_33 = arith.constant dense<0.000000e+00> : vector<64x64xf32>
    %34 = tpu.matmul %31, %33, %cst_33 {dimension_numbers = #tpu.dot_dimension_numbers<[1], [0], [0], [1], [0, 0, 1, 1], [], []>} : vector<64x32xf32>, vector<32x64xf32>, vector<64x64xf32> -> vector<64x64xf32>
    %35 = arith.addf %29, %34 : vector<64x64xf32>
    %c1_34 = arith.constant 1 : index
    %c0_35 = arith.constant 0 : index
    %c0_36 = arith.constant 0 : index
    %36 = vector.load %arg8[%c1_34, %c0_35, %c0_36] : memref<10x10x32xf32, #tpu.memory_space<vmem>>, vector<8x8x32xf32>
    %37 = vector.shape_cast %36 : vector<8x8x32xf32> to vector<64x32xf32>
    %c3 = arith.constant 3 : index
    %c0_37 = arith.constant 0 : index
    %c0_38 = arith.constant 0 : index
    %38 = vector.load %arg2[%c3, %c0_37, %c0_38] : memref<9x32x64xf32, #tpu.memory_space<vmem>>, vector<1x32x64xf32>
    %39 = vector.shape_cast %38 : vector<1x32x64xf32> to vector<32x64xf32>
    %cst_39 = arith.constant dense<0.000000e+00> : vector<64x64xf32>
    %40 = tpu.matmul %37, %39, %cst_39 {dimension_numbers = #tpu.dot_dimension_numbers<[1], [0], [0], [1], [0, 0, 1, 1], [], []>} : vector<64x32xf32>, vector<32x64xf32>, vector<64x64xf32> -> vector<64x64xf32>
    %41 = arith.addf %35, %40 : vector<64x64xf32>
    %c1_40 = arith.constant 1 : index
    %c1_41 = arith.constant 1 : index
    %c0_42 = arith.constant 0 : index
    %42 = vector.load %arg8[%c1_40, %c1_41, %c0_42] : memref<10x10x32xf32, #tpu.memory_space<vmem>>, vector<8x8x32xf32>
    %43 = vector.shape_cast %42 : vector<8x8x32xf32> to vector<64x32xf32>
    %c4 = arith.constant 4 : index
    %c0_43 = arith.constant 0 : index
    %c0_44 = arith.constant 0 : index
    %44 = vector.load %arg2[%c4, %c0_43, %c0_44] : memref<9x32x64xf32, #tpu.memory_space<vmem>>, vector<1x32x64xf32>
    %45 = vector.shape_cast %44 : vector<1x32x64xf32> to vector<32x64xf32>
    %cst_45 = arith.constant dense<0.000000e+00> : vector<64x64xf32>
    %46 = tpu.matmul %43, %45, %cst_45 {dimension_numbers = #tpu.dot_dimension_numbers<[1], [0], [0], [1], [0, 0, 1, 1], [], []>} : vector<64x32xf32>, vector<32x64xf32>, vector<64x64xf32> -> vector<64x64xf32>
    %47 = arith.addf %41, %46 : vector<64x64xf32>
    %c1_46 = arith.constant 1 : index
    %c2_47 = arith.constant 2 : index
    %c0_48 = arith.constant 0 : index
    %48 = vector.load %arg8[%c1_46, %c2_47, %c0_48] : memref<10x10x32xf32, #tpu.memory_space<vmem>>, vector<8x8x32xf32>
    %49 = vector.shape_cast %48 : vector<8x8x32xf32> to vector<64x32xf32>
    %c5 = arith.constant 5 : index
    %c0_49 = arith.constant 0 : index
    %c0_50 = arith.constant 0 : index
    %50 = vector.load %arg2[%c5, %c0_49, %c0_50] : memref<9x32x64xf32, #tpu.memory_space<vmem>>, vector<1x32x64xf32>
    %51 = vector.shape_cast %50 : vector<1x32x64xf32> to vector<32x64xf32>
    %cst_51 = arith.constant dense<0.000000e+00> : vector<64x64xf32>
    %52 = tpu.matmul %49, %51, %cst_51 {dimension_numbers = #tpu.dot_dimension_numbers<[1], [0], [0], [1], [0, 0, 1, 1], [], []>} : vector<64x32xf32>, vector<32x64xf32>, vector<64x64xf32> -> vector<64x64xf32>
    %53 = arith.addf %47, %52 : vector<64x64xf32>
    %c2_52 = arith.constant 2 : index
    %c0_53 = arith.constant 0 : index
    %c0_54 = arith.constant 0 : index
    %54 = vector.load %arg8[%c2_52, %c0_53, %c0_54] : memref<10x10x32xf32, #tpu.memory_space<vmem>>, vector<8x8x32xf32>
    %55 = vector.shape_cast %54 : vector<8x8x32xf32> to vector<64x32xf32>
    %c6 = arith.constant 6 : index
    %c0_55 = arith.constant 0 : index
    %c0_56 = arith.constant 0 : index
    %56 = vector.load %arg2[%c6, %c0_55, %c0_56] : memref<9x32x64xf32, #tpu.memory_space<vmem>>, vector<1x32x64xf32>
    %57 = vector.shape_cast %56 : vector<1x32x64xf32> to vector<32x64xf32>
    %cst_57 = arith.constant dense<0.000000e+00> : vector<64x64xf32>
    %58 = tpu.matmul %55, %57, %cst_57 {dimension_numbers = #tpu.dot_dimension_numbers<[1], [0], [0], [1], [0, 0, 1, 1], [], []>} : vector<64x32xf32>, vector<32x64xf32>, vector<64x64xf32> -> vector<64x64xf32>
    %59 = arith.addf %53, %58 : vector<64x64xf32>
    %c2_58 = arith.constant 2 : index
    %c1_59 = arith.constant 1 : index
    %c0_60 = arith.constant 0 : index
    %60 = vector.load %arg8[%c2_58, %c1_59, %c0_60] : memref<10x10x32xf32, #tpu.memory_space<vmem>>, vector<8x8x32xf32>
    %61 = vector.shape_cast %60 : vector<8x8x32xf32> to vector<64x32xf32>
    %c7 = arith.constant 7 : index
    %c0_61 = arith.constant 0 : index
    %c0_62 = arith.constant 0 : index
    %62 = vector.load %arg2[%c7, %c0_61, %c0_62] : memref<9x32x64xf32, #tpu.memory_space<vmem>>, vector<1x32x64xf32>
    %63 = vector.shape_cast %62 : vector<1x32x64xf32> to vector<32x64xf32>
    %cst_63 = arith.constant dense<0.000000e+00> : vector<64x64xf32>
    %64 = tpu.matmul %61, %63, %cst_63 {dimension_numbers = #tpu.dot_dimension_numbers<[1], [0], [0], [1], [0, 0, 1, 1], [], []>} : vector<64x32xf32>, vector<32x64xf32>, vector<64x64xf32> -> vector<64x64xf32>
    %65 = arith.addf %59, %64 : vector<64x64xf32>
    %c2_64 = arith.constant 2 : index
    %c2_65 = arith.constant 2 : index
    %c0_66 = arith.constant 0 : index
    %66 = vector.load %arg8[%c2_64, %c2_65, %c0_66] : memref<10x10x32xf32, #tpu.memory_space<vmem>>, vector<8x8x32xf32>
    %67 = vector.shape_cast %66 : vector<8x8x32xf32> to vector<64x32xf32>
    %c8 = arith.constant 8 : index
    %c0_67 = arith.constant 0 : index
    %c0_68 = arith.constant 0 : index
    %68 = vector.load %arg2[%c8, %c0_67, %c0_68] : memref<9x32x64xf32, #tpu.memory_space<vmem>>, vector<1x32x64xf32>
    %69 = vector.shape_cast %68 : vector<1x32x64xf32> to vector<32x64xf32>
    %cst_69 = arith.constant dense<0.000000e+00> : vector<64x64xf32>
    %70 = tpu.matmul %67, %69, %cst_69 {dimension_numbers = #tpu.dot_dimension_numbers<[1], [0], [0], [1], [0, 0, 1, 1], [], []>} : vector<64x32xf32>, vector<32x64xf32>, vector<64x64xf32> -> vector<64x64xf32>
    %71 = arith.addf %65, %70 : vector<64x64xf32>
    %c0_70 = arith.constant 0 : index
    %c0_71 = arith.constant 0 : index
    %c0_72 = arith.constant 0 : index
    %72 = vector.load %arg5[%c0_70, %c0_71, %c0_72] : memref<1x64x64xf32, #tpu.memory_space<vmem>>, vector<1x64x64xf32>
    %73 = vector.shape_cast %72 : vector<1x64x64xf32> to vector<64x64xf32>
    %74 = vector.shape_cast %71 : vector<64x64xf32> to vector<1x64x64xf32>
    tpu.vector_store %arg5[%c0_70, %c0_71, %c0_72], %74 {strides = array<i32>} : memref<1x64x64xf32, #tpu.memory_space<vmem>>, vector<1x64x64xf32>,
    %cst_73 = arith.constant dense<0.000000e+00> : vector<64xf32>
    %75 = vector.multi_reduction <add>, %71, %cst_73 [0] : vector<64x64xf32> to vector<64xf32>
    %c0_74 = arith.constant 0 : index
    %c0_75 = arith.constant 0 : index
    %c0_76 = arith.constant 0 : index
    %76 = vector.load %arg6[%c0_74, %c0_75, %c0_76] : memref<1x1x64xf32, #tpu.memory_space<vmem>>, vector<1x1x64xf32>
    %77 = vector.shape_cast %76 : vector<1x1x64xf32> to vector<64xf32>
    %78 = vector.shape_cast %75 : vector<64xf32> to vector<1x1x64xf32>
    tpu.vector_store %arg6[%c0_74, %c0_75, %c0_76], %78 {strides = array<i32>} : memref<1x1x64xf32, #tpu.memory_space<vmem>>, vector<1x1x64xf32>,
    %79 = arith.mulf %71, %71 : vector<64x64xf32>
    %cst_77 = arith.constant dense<0.000000e+00> : vector<64xf32>
    %80 = vector.multi_reduction <add>, %79, %cst_77 [0] : vector<64x64xf32> to vector<64xf32>
    %c0_78 = arith.constant 0 : index
    %c0_79 = arith.constant 0 : index
    %c0_80 = arith.constant 0 : index
    %81 = vector.load %arg7[%c0_78, %c0_79, %c0_80] : memref<1x1x64xf32, #tpu.memory_space<vmem>>, vector<1x1x64xf32>
    %82 = vector.shape_cast %81 : vector<1x1x64xf32> to vector<64xf32>
    %83 = vector.shape_cast %80 : vector<64xf32> to vector<1x1x64xf32>
    tpu.vector_store %arg7[%c0_78, %c0_79, %c0_80], %83 {strides = array<i32>} : memref<1x1x64xf32, #tpu.memory_space<vmem>>, vector<1x1x64xf32>,
    return
  }
  func.func @transform_0(%arg0: i32) -> (i32, i32, i32, i32) {
    %c0_i32 = arith.constant 0 : i32
    %c0_i32_0 = arith.constant 0 : i32
    %c0_i32_1 = arith.constant 0 : i32
    %c0_i32_2 = arith.constant 0 : i32
    return %arg0, %c0_i32, %c0_i32_0, %c0_i32_1 : i32, i32, i32, i32
  }
  func.func @transform_1(%arg0: i32) -> (i32, i32, i32) {
    %c0_i32 = arith.constant 0 : i32
    %c0_i32_0 = arith.constant 0 : i32
    %c0_i32_1 = arith.constant 0 : i32
    %c0_i32_2 = arith.constant 0 : i32
    return %c0_i32, %c0_i32_0, %c0_i32_1 : i32, i32, i32
  }
  func.func @transform_2(%arg0: i32) -> (i32, i32) {
    %c0_i32 = arith.constant 0 : i32
    %c0_i32_0 = arith.constant 0 : i32
    %c0_i32_1 = arith.constant 0 : i32
    return %c0_i32, %c0_i32_0 : i32, i32
  }
  func.func @transform_3(%arg0: i32) -> (i32, i32) {
    %c0_i32 = arith.constant 0 : i32
    %c0_i32_0 = arith.constant 0 : i32
    %c0_i32_1 = arith.constant 0 : i32
    return %c0_i32, %c0_i32_0 : i32, i32
  }
  func.func @transform_4(%arg0: i32) -> (i32, i32, i32) {
    %c0_i32 = arith.constant 0 : i32
    %c0_i32_0 = arith.constant 0 : i32
    %c0_i32_1 = arith.constant 0 : i32
    return %arg0, %c0_i32, %c0_i32_0 : i32, i32, i32
  }
  func.func @transform_5(%arg0: i32) -> (i32, i32, i32) {
    %c0_i32 = arith.constant 0 : i32
    %c0_i32_0 = arith.constant 0 : i32
    %c0_i32_1 = arith.constant 0 : i32
    return %arg0, %c0_i32, %c0_i32_0 : i32, i32, i32
  }
  func.func @transform_6(%arg0: i32) -> (i32, i32, i32) {
    %c0_i32 = arith.constant 0 : i32
    %c0_i32_0 = arith.constant 0 : i32
    %c0_i32_1 = arith.constant 0 : i32
    return %arg0, %c0_i32, %c0_i32_0 : i32, i32, i32
  }
}

module attributes {stable_mosaic.version = 11 : i64} {
  func.func @_bn_relu_pool_kernel(%arg0: i32, %arg1: memref<2x8x4x16xf32, #tpu.memory_space<vmem>>, %arg2: memref<1x16xf32, #tpu.memory_space<vmem>>, %arg3: memref<1x16xf32, #tpu.memory_space<vmem>>, %arg4: memref<2x8x4x16xf32, #tpu.memory_space<vmem>>, %arg5: memref<1x4x4x8xf32, #tpu.memory_space<vmem>>) attributes {dimension_semantics = [#tpu.dimension_semantics<parallel>], iteration_bounds = array<i64: 8>, scalar_prefetch = 0 : i64, scratch_operands = 0 : i64, tpu.core_type = #tpu.core_type<tc>, window_params = [{transform_indices = @transform_0, window_bounds = array<i64: 2, 8, 4, 16>}, {pipeline_mode = #tpu.pipeline_mode<synchronous>, transform_indices = @transform_1, window_bounds = array<i64: 1, 16>}, {pipeline_mode = #tpu.pipeline_mode<synchronous>, transform_indices = @transform_2, window_bounds = array<i64: 1, 16>}, {transform_indices = @transform_3, window_bounds = array<i64: 2, 8, 4, 16>}, {transform_indices = @transform_4, window_bounds = array<i64: 1, 4, 4, 8>}]} {
    %c0 = arith.constant 0 : index
    %c0_0 = arith.constant 0 : index
    %c0_1 = arith.constant 0 : index
    %c0_2 = arith.constant 0 : index
    %0 = vector.load %arg1[%c0, %c0_0, %c0_1, %c0_2] : memref<2x8x4x16xf32, #tpu.memory_space<vmem>>, vector<2x8x4x16xf32>
    %c0_3 = arith.constant 0 : index
    %c0_4 = arith.constant 0 : index
    %1 = vector.load %arg2[%c0_3, %c0_4] : memref<1x16xf32, #tpu.memory_space<vmem>>, vector<1x16xf32>
    %2 = vector.shape_cast %1 : vector<1x16xf32> to vector<16xf32>
    %3 = vector.shape_cast %2 : vector<16xf32> to vector<1x1x1x16xf32>
    %4 = vector.broadcast %3 : vector<1x1x1x16xf32> to vector<2x8x4x16xf32>
    %5 = arith.mulf %0, %4 : vector<2x8x4x16xf32>
    %c0_5 = arith.constant 0 : index
    %c0_6 = arith.constant 0 : index
    %6 = vector.load %arg3[%c0_5, %c0_6] : memref<1x16xf32, #tpu.memory_space<vmem>>, vector<1x16xf32>
    %7 = vector.shape_cast %6 : vector<1x16xf32> to vector<16xf32>
    %8 = vector.shape_cast %7 : vector<16xf32> to vector<1x1x1x16xf32>
    %9 = vector.broadcast %8 : vector<1x1x1x16xf32> to vector<2x8x4x16xf32>
    %10 = arith.addf %5, %9 : vector<2x8x4x16xf32>
    %cst = arith.constant 0.000000e+00 : f32
    %11 = vector.broadcast %cst : f32 to vector<2x8x4x16xf32>
    %12 = arith.maximumf %10, %11 : vector<2x8x4x16xf32>
    %c0_7 = arith.constant 0 : index
    %c0_8 = arith.constant 0 : index
    %c0_9 = arith.constant 0 : index
    %c0_10 = arith.constant 0 : index
    %13 = vector.load %arg4[%c0_7, %c0_8, %c0_9, %c0_10] : memref<2x8x4x16xf32, #tpu.memory_space<vmem>>, vector<2x8x4x16xf32>
    tpu.vector_store %arg4[%c0_7, %c0_8, %c0_9, %c0_10], %12 {strides = array<i32>} : memref<2x8x4x16xf32, #tpu.memory_space<vmem>>, vector<2x8x4x16xf32>,
    %14 = vector.extract_strided_slice %12 {offsets = [0, 0, 0, 0], sizes = [1, 8, 4, 16], strides = [1, 1, 1, 1]} : vector<2x8x4x16xf32> to vector<1x8x4x16xf32>
    %15 = vector.shape_cast %14 : vector<1x8x4x16xf32> to vector<8x4x16xf32>
    %16 = vector.extract_strided_slice %12 {offsets = [1, 0, 0, 0], sizes = [1, 8, 4, 16], strides = [1, 1, 1, 1]} : vector<2x8x4x16xf32> to vector<1x8x4x16xf32>
    %17 = vector.shape_cast %16 : vector<1x8x4x16xf32> to vector<8x4x16xf32>
    %18 = arith.maximumf %15, %17 : vector<8x4x16xf32>
    %19 = vector.shape_cast %18 : vector<8x4x16xf32> to vector<4x2x4x16xf32>
    %20 = vector.extract_strided_slice %19 {offsets = [0, 0, 0, 0], sizes = [4, 1, 4, 16], strides = [1, 1, 1, 1]} : vector<4x2x4x16xf32> to vector<4x1x4x16xf32>
    %21 = vector.shape_cast %20 : vector<4x1x4x16xf32> to vector<4x4x16xf32>
    %22 = vector.extract_strided_slice %19 {offsets = [0, 1, 0, 0], sizes = [4, 1, 4, 16], strides = [1, 1, 1, 1]} : vector<4x2x4x16xf32> to vector<4x1x4x16xf32>
    %23 = vector.shape_cast %22 : vector<4x1x4x16xf32> to vector<4x4x16xf32>
    %24 = arith.maximumf %21, %23 : vector<4x4x16xf32>
    %25 = vector.extract_strided_slice %24 {offsets = [0, 0, 0], sizes = [4, 4, 8], strides = [1, 1, 1]} : vector<4x4x16xf32> to vector<4x4x8xf32>
    %26 = vector.extract_strided_slice %24 {offsets = [0, 0, 8], sizes = [4, 4, 8], strides = [1, 1, 1]} : vector<4x4x16xf32> to vector<4x4x8xf32>
    %27 = arith.maximumf %25, %26 : vector<4x4x8xf32>
    %c0_11 = arith.constant 0 : index
    %c0_12 = arith.constant 0 : index
    %c0_13 = arith.constant 0 : index
    %c0_14 = arith.constant 0 : index
    %28 = vector.load %arg5[%c0_11, %c0_12, %c0_13, %c0_14] : memref<1x4x4x8xf32, #tpu.memory_space<vmem>>, vector<1x4x4x8xf32>
    %29 = vector.shape_cast %28 : vector<1x4x4x8xf32> to vector<4x4x8xf32>
    %30 = vector.shape_cast %27 : vector<4x4x8xf32> to vector<1x4x4x8xf32>
    tpu.vector_store %arg5[%c0_11, %c0_12, %c0_13, %c0_14], %30 {strides = array<i32>} : memref<1x4x4x8xf32, #tpu.memory_space<vmem>>, vector<1x4x4x8xf32>,
    return
  }
  func.func @transform_0(%arg0: i32) -> (i32, i32, i32, i32) {
    %c0_i32 = arith.constant 0 : i32
    %c0_i32_0 = arith.constant 0 : i32
    %c0_i32_1 = arith.constant 0 : i32
    %c0_i32_2 = arith.constant 0 : i32
    return %arg0, %c0_i32, %c0_i32_0, %c0_i32_1 : i32, i32, i32, i32
  }
  func.func @transform_1(%arg0: i32) -> (i32, i32) {
    %c0_i32 = arith.constant 0 : i32
    %c0_i32_0 = arith.constant 0 : i32
    %c0_i32_1 = arith.constant 0 : i32
    return %c0_i32, %c0_i32_0 : i32, i32
  }
  func.func @transform_2(%arg0: i32) -> (i32, i32) {
    %c0_i32 = arith.constant 0 : i32
    %c0_i32_0 = arith.constant 0 : i32
    %c0_i32_1 = arith.constant 0 : i32
    return %c0_i32, %c0_i32_0 : i32, i32
  }
  func.func @transform_3(%arg0: i32) -> (i32, i32, i32, i32) {
    %c0_i32 = arith.constant 0 : i32
    %c0_i32_0 = arith.constant 0 : i32
    %c0_i32_1 = arith.constant 0 : i32
    %c0_i32_2 = arith.constant 0 : i32
    return %arg0, %c0_i32, %c0_i32_0, %c0_i32_1 : i32, i32, i32, i32
  }
  func.func @transform_4(%arg0: i32) -> (i32, i32, i32, i32) {
    %c0_i32 = arith.constant 0 : i32
    %c0_i32_0 = arith.constant 0 : i32
    %c0_i32_1 = arith.constant 0 : i32
    %c0_i32_2 = arith.constant 0 : i32
    return %arg0, %c0_i32, %c0_i32_0, %c0_i32_1 : i32, i32, i32, i32
  }
}

</mosaic_0001>

<llo_original>
// kernel: tile.28
$region0: #{tile.28}
  #allocation0 [shape = 's32[1]{0}', space=sflag, size = 0x4, scoped, tag = 'scoped memory for tile.28']
  %s0 = inlined_call_operand.vmem [shape: f32[4], index: 0, kind: input, shape index: {}]
  %s1 = inlined_call_operand.vmem [shape: f32[8,4], index: 1, kind: output, shape index: {}]
  // Predicated region
  $region2: #{tile.28} parent=0 // pred_check
    _
  $region3: #{tile.28} parent=0 // pred_check_branch
    %3 = sbr.rel (0) target = $region5
  $region4: #{tile.28} parent=0 // pred_region
    _
  $region5: #{tile.28} parent=0 // pred_fallthru
    _
  %v4 = vld [vmem:[%s0] ss:$0 sm:$0xff]
  %5 = vst [vmem:[%s1] sm:$0xff] %v4

// kernel: tile.29
$region0: #{tile.29}
  %s0 = inlined_call_operand.vmem [shape: f32[8,4], index: 0, kind: input, shape index: {}]
  %s1 = inlined_call_operand.vmem [shape: f32[1,32], index: 1, kind: output, shape index: {}]
  $region1: #{tile.29} parent=0
    #allocation0 [shape = 'u8[4096]{0}', space=vmem, size = 0x1000, scoped, tag = 'scoped mem for output reshape']
    %v2 = vld [vmem:[%s0] sm:$0x1]
    %vm3 = vcmask 31744
    %4 = vst.msk [vmem:[#allocation0] sm:$0x1] %vm3, %v2
    %s5 = scalar_lea.vmem %s0, 7
    %v6 = vld [vmem:[%s5] sm:$0x1]
    %7 = vrot.lane.b32.xlu0 %v6, 28
    %v8 = vpop.permute.xlu0 %7
    %vm9 = vcmask 261344
    %10 = vst.msk [vmem:[#allocation0] sm:$0x1] %vm9, %v8
    %s11 = scalar_lea.vmem %s0, 6
    %v12 = vld [vmem:[%s11] sm:$0x1]
    %13 = vrot.lane.b32.xlu0 %v12, 24
    %v14 = vpop.permute.xlu0 %13
    %vm15 = vcmask 228544
    %16 = vst.msk [vmem:[#allocation0] sm:$0x1] %vm15, %v14
    %s17 = scalar_lea.vmem %s0, 5
    %v18 = vld [vmem:[%s17] sm:$0x1]
    %19 = vrot.lane.b32.xlu0 %v18, 20
    %v20 = vpop.permute.xlu0 %19
    %vm21 = vcmask 195744
    %22 = vst.msk [vmem:[#allocation0] sm:$0x1] %vm21, %v20
    %s23 = scalar_lea.vmem %s0, 4
    %v24 = vld [vmem:[%s23] sm:$0x1]
    %25 = vrot.lane.b32.xlu0 %v24, 16
    %v26 = vpop.permute.xlu0 %25
    %vm27 = vcmask 162944
    %28 = vst.msk [vmem:[#allocation0] sm:$0x1] %vm27, %v26
    %s29 = scalar_lea.vmem %s0, 3
    %v30 = vld [vmem:[%s29] sm:$0x1]
    %31 = vrot.lane.b32.xlu0 %v30, 12
    %v32 = vpop.permute.xlu0 %31
    %vm33 = vcmask 130144
    %34 = vst.msk [vmem:[#allocation0] sm:$0x1] %vm33, %v32
    %s35 = scalar_lea.vmem %s0, 2
    %v36 = vld [vmem:[%s35] sm:$0x1]
    %37 = vrot.lane.b32.xlu0 %v36, 8
    %v38 = vpop.permute.xlu0 %37
    %vm39 = vcmask 97344
    %40 = vst.msk [vmem:[#allocation0] sm:$0x1] %vm39, %v38
    %s41 = scalar_lea.vmem %s0, 1
    %v42 = vld [vmem:[%s41] sm:$0x1]
    %43 = vrot.lane.b32.xlu0 %v42, 4
    %v44 = vpop.permute.xlu0 %43
    %vm45 = vcmask 64544
    %46 = vst.msk [vmem:[#allocation0] sm:$0x1] %vm45, %v44
    %s48 = sshll.u32 1, 1
    %s49 = ssub.s32 %s48, 1
    %v51 = vld [vmem:[#allocation0] sm:%s49]
    %s52 = sshll.u32 1, 1
    %s53 = ssub.s32 %s52, 1
    %54 = vst [vmem:[%s1] sm:%s53] %v51

// kernel: tile.38
$region0: #{tile.38}
  #allocation0 [shape = 's32[1]{0}', space=sflag, size = 0x4, scoped, tag = 'scoped memory for tile.38']
  %s0 = inlined_call_operand.vmem [shape: f32[8], index: 0, kind: input, shape index: {}]
  %s1 = inlined_call_operand.vmem [shape: f32[2,8], index: 1, kind: output, shape index: {}]
  // Predicated region
  $region2: #{tile.38} parent=0 // pred_check
    _
  $region3: #{tile.38} parent=0 // pred_check_branch
    %3 = sbr.rel (0) target = $region5
  $region4: #{tile.38} parent=0 // pred_region
    _
  $region5: #{tile.38} parent=0 // pred_fallthru
    _
  %v4 = vld [vmem:[%s0] ss:$0 sm:$0xff]
  %5 = vst [vmem:[%s1] sm:$0x3] %v4

// kernel: tile.39
$region0: #{tile.39}
  %s0 = inlined_call_operand.vmem [shape: f32[2,8], index: 0, kind: input, shape index: {}]
  %s1 = inlined_call_operand.vmem [shape: f32[1,16], index: 1, kind: output, shape index: {}]
  $region1: #{tile.39} parent=0
    #allocation0 [shape = 'u8[4096]{0}', space=vmem, size = 0x1000, scoped, tag = 'scoped mem for output reshape']
    #allocation1 [shape = 'u8[4096]{0}', space=vmem, size = 0x1000, scoped, tag = 'scoped mem for input reshape']
    %s3 = sshll.u32 1, 2
    %s4 = ssub.s32 %s3, 1
    %v5 = vld [vmem:[%s0] sm:%s4]
    %6 = vst [vmem:[#allocation1] sm:%s4] %v5
    %v7 = vld [vmem:[#allocation1] sm:$0x1]
    %vm8 = vcmask 64512
    %9 = vst.msk [vmem:[#allocation0] sm:$0x1] %vm8, %v7
    %s10 = scalar_lea.vmem [#allocation1], 1
    %v11 = vld [vmem:[%s10] sm:$0x1]
    %12 = vrot.lane.b32.xlu0 %v11, 8
    %v13 = vpop.permute.xlu0 %12
    %vm14 = vcmask 130112
    %15 = vst.msk [vmem:[#allocation0] sm:$0x1] %vm14, %v13
    %s17 = sshll.u32 1, 1
    %s18 = ssub.s32 %s17, 1
    %v20 = vld [vmem:[#allocation0] sm:%s18]
    %s21 = sshll.u32 1, 1
    %s22 = ssub.s32 %s21, 1
    %23 = vst [vmem:[%s1] sm:%s22] %v20

// kernel: conv_block_forward.5
$region0: #{conv_block_forward.5}
  #allocation0 [shape = 'u32[]', space=smem, size = 0x4, offset = 0x4, fixed_abs, tag = 'smem constant byte address 0x4 - core index']
  #allocation1 [shape = 'u32[144,128]{1,0:T(1,128)}', space=vmem, size = 0x12000, scoped, tag = 'internal scratch']
  %s0 = inlined_call_operand.vmem [shape: f32[16,8,4,16], index: 0, kind: input, shape index: {}]
  %s1 = inlined_call_operand.vmem [shape: f32[1,16], index: 1, kind: input, shape index: {}]
  %s2 = inlined_call_operand.vmem [shape: f32[1,16], index: 2, kind: input, shape index: {}]
  %s3 = inlined_call_operand.vmem [shape: f32[16,8,4,16], index: 3, kind: output, shape index: {0}]
  %s4 = inlined_call_operand.hbm [shape: f32[8,4,4,8], index: 4, kind: output, shape index: {1}]
  %5 = xla_tuple %s3, %s4
  %s6 = sld [smem:[#allocation0]]
  $region53: #{conv_block_forward.5} parent=0
    _
  %s8 = ssub.s32 1, %s6
  %s9 = scalar_select 0, %s8, %s6
  $region1: #{conv_block_forward.5} parent=0
    #allocation2 [shape = 'u8[16384]{0}', space=vmem, size = 0x4000, scoped, tag = 'output window, operand 1']
    #allocation3 [shape = 's32[2]{0}', space=sflag, size = 0x8, scoped, tag = 'scoped memory for conv_block_forward.5']
    %10 = vsyncpa [#allocation3], 0
    %s11 = scalar_lea.sflag [#allocation3], 1
    %12 = vsyncpa %s11, 0
    loop: start=0, step=1, limit=10
    $region2: #{conv_block_forward.5} parent=1 // loop_pre_header
      _
    $region3: #{conv_block_forward.5} parent=1 // loop_header
      %s14 = sphi 0, %s18
      %p15 = scmp.ge.s32.totalorder %s14, 10
      %s24 = sphi 0, %s26
      %s27 = sphi 0, %s24
      %s28 = sphi 0, %s27
      %s44 = sphi 0, %s28
      %s48 = sphi 0, %s48
      %s50 = sphi 0, %s48
      %s51 = sphi 0, %s50
      %s65 = sphi 0, %s51
      %s69 = sphi 0, %s69
      %s71 = sphi 0, %s69
      %s72 = sphi 0, %s71
      %s86 = sphi 0, %s72
      %s92 = sphi 0, %s94
      %s95 = sphi 0, %s92
      %s96 = sphi 0, %s95
      %s112 = sphi 0, %s96
      %s118 = sphi 0, %s120
      %s121 = sphi 0, %s118
      %s122 = sphi 0, %s121
      %s138 = sphi 0, %s122
    $region4: #{conv_block_forward.5} parent=1 // loop_header_branch
      %17 = sbr.rel (%p15) target = $region8
    $region5: #{conv_block_forward.5} parent=1 // loop_body
      %s19 = ssub.s32 %s14, 1
      %s20 = ssub.s32 %s14, 2
      %s21 = sadd.s32 %s14, 1
      %s22 = ssub.s32 %s14, %s21
      %p23 = scmp.eq.s32.totalorder %s22, 0
      %s25 = sadd.s32 %s24, 1
      %s26 = scalar_select %p23, %s24, %s25
      %p29 = pneg %p23
      %p30 = scmp.eq.s32.totalorder %s14, 7
      %p31 = por %p29, %p30
      %p32 = scmp.ne.s32.totalorder %s24, %s27
      %p33 = scmp.eq.s32.totalorder %s14, 0
      %p34 = por %p32, %p33
      %p35 = scmp.ne.s32.totalorder %s24, %s27
      %p36 = scmp.eq.s32.totalorder %s19, 7
      %p37 = por %p35, %p36
      %p38 = scmp.ne.s32.totalorder %s27, %s28
      %p39 = scmp.eq.s32.totalorder %s19, 0
      %p40 = por %p38, %p39
      %p41 = scmp.ne.s32.totalorder %s27, %s28
      %p42 = scmp.eq.s32.totalorder %s20, 7
      %p43 = por %p41, %p42
      %p45 = scmp.ne.s32.totalorder %s28, %s44
      %p46 = scmp.eq.s32.totalorder %s20, 0
      %p47 = por %p45, %p46
      %s49 = sadd.s32 %s48, 1
      %p52 = scmp.eq.s32.totalorder %s14, 7
      %p53 = scmp.ne.s32.totalorder %s48, %s50
      %p54 = scmp.eq.s32.totalorder %s14, 0
      %p55 = por %p53, %p54
      %p56 = scmp.ne.s32.totalorder %s48, %s50
      %p57 = scmp.eq.s32.totalorder %s19, 7
      %p58 = por %p56, %p57
      %p59 = scmp.ne.s32.totalorder %s50, %s51
      %p60 = scmp.eq.s32.totalorder %s19, 0
      %p61 = por %p59, %p60
      %p62 = scmp.ne.s32.totalorder %s50, %s51
      %p63 = scmp.eq.s32.totalorder %s20, 7
      %p64 = por %p62, %p63
      %p66 = scmp.ne.s32.totalorder %s51, %s65
      %p67 = scmp.eq.s32.totalorder %s20, 0
      %p68 = por %p66, %p67
      %s70 = sadd.s32 %s69, 1
      %p73 = scmp.eq.s32.totalorder %s14, 7
      %p74 = scmp.ne.s32.totalorder %s69, %s71
      %p75 = scmp.eq.s32.totalorder %s14, 0
      %p76 = por %p74, %p75
      %p77 = scmp.ne.s32.totalorder %s69, %s71
      %p78 = scmp.eq.s32.totalorder %s19, 7
      %p79 = por %p77, %p78
      %p80 = scmp.ne.s32.totalorder %s71, %s72
      %p81 = scmp.eq.s32.totalorder %s19, 0
      %p82 = por %p80, %p81
      %p83 = scmp.ne.s32.totalorder %s71, %s72
      %p84 = scmp.eq.s32.totalorder %s20, 7
      %p85 = por %p83, %p84
      %p87 = scmp.ne.s32.totalorder %s72, %s86
      %p88 = scmp.eq.s32.totalorder %s20, 0
      %p89 = por %p87, %p88
      %s90 = ssub.s32 %s14, %s21
      %p91 = scmp.eq.s32.totalorder %s90, 0
      %s93 = sadd.s32 %s92, 1
      %s94 = scalar_select %p91, %s92, %s93
      %p97 = pneg %p91
      %p98 = scmp.eq.s32.totalorder %s14, 7
      %p99 = por %p97, %p98
      %p100 = scmp.ne.s32.totalorder %s92, %s95
      %p101 = scmp.eq.s32.totalorder %s14, 0
      %p102 = por %p100, %p101
      %p103 = scmp.ne.s32.totalorder %s92, %s95
      %p104 = scmp.eq.s32.totalorder %s19, 7
      %p105 = por %p103, %p104
      %p106 = scmp.ne.s32.totalorder %s95, %s96
      %p107 = scmp.eq.s32.totalorder %s19, 0
      %p108 = por %p106, %p107
      %p109 = scmp.ne.s32.totalorder %s95, %s96
      %p110 = scmp.eq.s32.totalorder %s20, 7
      %p111 = por %p109, %p110
      %p113 = scmp.ne.s32.totalorder %s96, %s112
      %p114 = scmp.eq.s32.totalorder %s20, 0
      %p115 = por %p113, %p114
      %s116 = ssub.s32 %s14, %s21
      %p117 = scmp.eq.s32.totalorder %s116, 0
      %s119 = sadd.s32 %s118, 1
      %s120 = scalar_select %p117, %s118, %s119
      %p123 = pneg %p117
      %p124 = scmp.eq.s32.totalorder %s14, 7
      %p125 = por %p123, %p124
      %p126 = scmp.ne.s32.totalorder %s118, %s121
      %p127 = scmp.eq.s32.totalorder %s14, 0
      %p128 = por %p126, %p127
      %p129 = scmp.ne.s32.totalorder %s118, %s121
      %p130 = scmp.eq.s32.totalorder %s19, 7
      %p131 = por %p129, %p130
      %p132 = scmp.ne.s32.totalorder %s121, %s122
      %p133 = scmp.eq.s32.totalorder %s19, 0
      %p134 = por %p132, %p133
      %p135 = scmp.ne.s32.totalorder %s121, %s122
      %p136 = scmp.eq.s32.totalorder %s20, 7
      %p137 = por %p135, %p136
      %p139 = scmp.ne.s32.totalorder %s122, %s138
      %p140 = scmp.eq.s32.totalorder %s20, 0
      %p141 = por %p139, %p140
      %p142 = scmp.le.s32.totalorder 1, %s14
      %p143 = scmp.lt.s32.totalorder %s14, 9
      %p144 = pnand %p142, %p143
      %p145 = pneg %p144
      // Predicated region
      $region9: #{conv_block_forward.5} parent=5 // pred_check
        _
      $region10: #{conv_block_forward.5} parent=5 // pred_check_branch
        %147 = sbr.rel (%p144) target = $region12
      $region11: #{conv_block_forward.5} parent=5 // pred_region
        %s148 = ssub.s32 %s14, 1
        // Predicated region
        $region13: #{conv_block_forward.5} parent=11 // pred_check
          %p149 = pneg %p61
        $region14: #{conv_block_forward.5} parent=11 // pred_check_branch
          %151 = sbr.rel (%p149) target = $region16
        $region15: #{conv_block_forward.5} parent=11 // pred_region
          _
        $region16: #{conv_block_forward.5} parent=11 // pred_fallthru
          _
        // Predicated region
        $region17: #{conv_block_forward.5} parent=11 // pred_check
          %p152 = pneg %p82
        $region18: #{conv_block_forward.5} parent=11 // pred_check_branch
          %154 = sbr.rel (%p152) target = $region20
        $region19: #{conv_block_forward.5} parent=11 // pred_region
          _
        $region20: #{conv_block_forward.5} parent=11 // pred_fallthru
          _
      $region12: #{conv_block_forward.5} parent=5 // pred_fallthru
        _
      %p155 = scmp.lt.s32.totalorder %s14, 8
      // Predicated region
      $region21: #{conv_block_forward.5} parent=5 // pred_check
        %p156 = pneg %p155
      $region22: #{conv_block_forward.5} parent=5 // pred_check_branch
        %158 = sbr.rel (%p156) target = $region24
      $region23: #{conv_block_forward.5} parent=5 // pred_region
        // Predicated region
        $region25: #{conv_block_forward.5} parent=23 // pred_check
          %p159 = pneg %p34
        $region26: #{conv_block_forward.5} parent=23 // pred_check_branch
          %161 = sbr.rel (%p159) target = $region28
        $region27: #{conv_block_forward.5} parent=23 // pred_region
          %s162 = smul.u32 2, %s14
          %p163 = scmp.lt.s32.totalorder %s162, 15
          %s164 = scalar_select %p163, %s162, 15
          %s165 = smul.addr %s164, 8
          %s166 = smul.addr %s165, 4
          %s167 = scalar_lea.vmem %s0, %s166
          %s168 = smul.u32 2, %s14
        $region28: #{conv_block_forward.5} parent=23 // pred_fallthru
          _
      $region24: #{conv_block_forward.5} parent=5 // pred_fallthru
        _
      %p169 = scmp.le.s32.totalorder 1, %s14
      %p170 = scmp.lt.s32.totalorder %s14, 9
      %p171 = pnand %p169, %p170
      %p172 = pneg %p171
      // Predicated region
      $region29: #{conv_block_forward.5} parent=5 // pred_check
        _
      $region30: #{conv_block_forward.5} parent=5 // pred_check_branch
        %174 = sbr.rel (%p171) target = $region32
      $region31: #{conv_block_forward.5} parent=5 // pred_region
        %s175 = ssub.s32 %s14, 1
        %s176 = smul.u32 2, %s19
        %p177 = scmp.lt.s32.totalorder %s176, 15
        %s178 = scalar_select %p177, %s176, 15
        %s179 = smul.addr %s178, 8
        %s180 = smul.addr %s179, 4
        %s181 = scalar_lea.vmem %s0, %s180
        %p182 = pneg %p40
        %p183 = pneg %p37
        %p184 = pneg %p61
        %p185 = pneg %p58
        %p186 = pneg %p82
        %p187 = pneg %p79
        %p188 = pneg %p108
        %p189 = pneg %p105
        %s190 = smul.u32 2, %s19
        %p191 = scmp.lt.s32.totalorder %s190, 15
        %s192 = scalar_select %p191, %s190, 15
        %s193 = smul.addr %s192, 8
        %s194 = smul.addr %s193, 4
        %s195 = scalar_lea.vmem %s3, %s194
        %p196 = pneg %p134
        %p197 = pneg %p131
        %s198 = sand.u32 %s121, 1
        %s199 = scalar_lea.sflag [#allocation3], %s198
        %s200 = sand.u32 %s121, 1
        %s201 = smul.addr %s200, 16
        %s202 = scalar_lea.vmem [#allocation2], %s201
        %s203 = smul.u32 2, %s19
        %p204 = scmp.lt.s32.totalorder %s203, 15
        %s205 = scalar_select %p204, %s203, 15
        %s206 = smul.addr %s205, 8
        %s207 = smul.addr %s206, 4
        %s208 = scalar_lea.vmem %s0, %s207
        %s209 = smul.u32 2, %s19
        %s210 = smul.u32 2, %s19
        %p211 = scmp.lt.s32.totalorder %s210, 15
        %s212 = scalar_select %p211, %s210, 15
        %s213 = smul.addr %s212, 8
        %s214 = smul.addr %s213, 4
        %s215 = scalar_lea.vmem %s3, %s214
        %s216 = smul.u32 2, %s19
        %v217 = vld [vmem:[%s208] sm:$0xf]
        %v218 = vld [vmem:[%s208 + $0x4] sm:$0xf]
        %v219 = vld [vmem:[%s208 + $0x8] sm:$0xf]
        %v220 = vld [vmem:[%s208 + $0xc] sm:$0xf]
        %v221 = vld [vmem:[%s208 + $0x10] sm:$0xf]
        %v222 = vld [vmem:[%s208 + $0x14] sm:$0xf]
        %v223 = vld [vmem:[%s208 + $0x18] sm:$0xf]
        %v224 = vld [vmem:[%s208 + $0x1c] sm:$0xf]
        %v225 = vld [vmem:[%s208 + $0x20] sm:$0xf]
        %v226 = vld [vmem:[%s208 + $0x24] sm:$0xf]
        %v227 = vld [vmem:[%s208 + $0x28] sm:$0xf]
        %v228 = vld [vmem:[%s208 + $0x2c] sm:$0xf]
        %v229 = vld [vmem:[%s208 + $0x30] sm:$0xf]
        %v230 = vld [vmem:[%s208 + $0x34] sm:$0xf]
        %v231 = vld [vmem:[%s208 + $0x38] sm:$0xf]
        %v232 = vld [vmem:[%s208 + $0x3c] sm:$0xf]
        %v233 = vld [vmem:[%s1] sm:$0x1]
        %v235 = vlaneseq
        %v236 = vshrl.u32 %v235, 7
        %v237 = vsub.s32 0, %v236
        %v238 = vrot.slane %v233, %v237
        %v240 = vmul.f32 %v217, %v238
        %v241 = vmul.f32 %v218, %v238
        %v242 = vmul.f32 %v219, %v238
        %v243 = vmul.f32 %v220, %v238
        %v244 = vmul.f32 %v221, %v238
        %v245 = vmul.f32 %v222, %v238
        %v246 = vmul.f32 %v223, %v238
        %v247 = vmul.f32 %v224, %v238
        %v248 = vmul.f32 %v225, %v238
        %v249 = vmul.f32 %v226, %v238
        %v250 = vmul.f32 %v227, %v238
        %v251 = vmul.f32 %v228, %v238
        %v252 = vmul.f32 %v229, %v238
        %v253 = vmul.f32 %v230, %v238
        %v254 = vmul.f32 %v231, %v238
        %v255 = vmul.f32 %v232, %v238
        %v256 = vld [vmem:[%s2] sm:$0x1]
        %v258 = vlaneseq
        %v259 = vshrl.u32 %v258, 7
        %v260 = vsub.s32 0, %v259
        %v261 = vrot.slane %v256, %v260
        %v263 = vadd.f32 %v240, %v261
        %v264 = vadd.f32 %v241, %v261
        %v265 = vadd.f32 %v242, %v261
        %v266 = vadd.f32 %v243, %v261
        %v267 = vadd.f32 %v244, %v261
        %v268 = vadd.f32 %v245, %v261
        %v269 = vadd.f32 %v246, %v261
        %v270 = vadd.f32 %v247, %v261
        %v271 = vadd.f32 %v248, %v261
        %v272 = vadd.f32 %v249, %v261
        %v273 = vadd.f32 %v250, %v261
        %v274 = vadd.f32 %v251, %v261
        %v275 = vadd.f32 %v252, %v261
        %v276 = vadd.f32 %v253, %v261
        %v277 = vadd.f32 %v254, %v261
        %v278 = vadd.f32 %v255, %v261
        %v279 = vmax.f32 %v263, 0.0
        %v280 = vmax.f32 %v264, 0.0
        %v281 = vmax.f32 %v265, 0.0
        %v282 = vmax.f32 %v266, 0.0
        %v283 = vmax.f32 %v267, 0.0
        %v284 = vmax.f32 %v268, 0.0
        %v285 = vmax.f32 %v269, 0.0
        %v286 = vmax.f32 %v270, 0.0
        %v287 = vmax.f32 %v271, 0.0
        %v288 = vmax.f32 %v272, 0.0
        %v289 = vmax.f32 %v273, 0.0
        %v290 = vmax.f32 %v274, 0.0
        %v291 = vmax.f32 %v275, 0.0
        %v292 = vmax.f32 %v276, 0.0
        %v293 = vmax.f32 %v277, 0.0
        %v294 = vmax.f32 %v278, 0.0
        %vm295 = vcmask 125952
        %296 = vst.msk [vmem:[%s215] sm:$0xf] %vm295, %v279
        %297 = vst.msk [vmem:[%s215 + $0x4] sm:$0xf] %vm295, %v280
        %298 = vst.msk [vmem:[%s215 + $0x8] sm:$0xf] %vm295, %v281
        %299 = vst.msk [vmem:[%s215 + $0xc] sm:$0xf] %vm295, %v282
        %300 = vst.msk [vmem:[%s215 + $0x10] sm:$0xf] %vm295, %v283
        %301 = vst.msk [vmem:[%s215 + $0x14] sm:$0xf] %vm295, %v284
        %302 = vst.msk [vmem:[%s215 + $0x18] sm:$0xf] %vm295, %v285
        %303 = vst.msk [vmem:[%s215 + $0x1c] sm:$0xf] %vm295, %v286
        %304 = vst.msk [vmem:[%s215 + $0x20] sm:$0xf] %vm295, %v287
        %305 = vst.msk [vmem:[%s215 + $0x24] sm:$0xf] %vm295, %v288
        %306 = vst.msk [vmem:[%s215 + $0x28] sm:$0xf] %vm295, %v289
        %307 = vst.msk [vmem:[%s215 + $0x2c] sm:$0xf] %vm295, %v290
        %308 = vst.msk [vmem:[%s215 + $0x30] sm:$0xf] %vm295, %v291
        %309 = vst.msk [vmem:[%s215 + $0x34] sm:$0xf] %vm295, %v292
        %310 = vst.msk [vmem:[%s215 + $0x38] sm:$0xf] %vm295, %v293
        %311 = vst.msk [vmem:[%s215 + $0x3c] sm:$0xf] %vm295, %v294
        %v312 = vmax.f32 %v279, %v287
        %v313 = vmax.f32 %v280, %v288
        %v314 = vmax.f32 %v281, %v289
        %v315 = vmax.f32 %v282, %v290
        %v316 = vmax.f32 %v283, %v291
        %v317 = vmax.f32 %v284, %v292
        %v318 = vmax.f32 %v285, %v293
        %v319 = vmax.f32 %v286, %v294
        %v320 = vmax.f32 %v312, %v313
        %v321 = vmax.f32 %v314, %v315
        %v322 = vmax.f32 %v316, %v317
        %v323 = vmax.f32 %v318, %v319
        %328 = vrot.lane.b32.xlu0 %v320, 120
        %v329 = vpop.permute.xlu0 %328
        %330 = vrot.lane.b32.xlu0 %v321, 120
        %v331 = vpop.permute.xlu0 %330
        %332 = vrot.lane.b32.xlu0 %v322, 120
        %v333 = vpop.permute.xlu0 %332
        %334 = vrot.lane.b32.xlu0 %v323, 120
        %v335 = vpop.permute.xlu0 %334
        %v340 = vmax.f32 %v320, %v329
        %v341 = vmax.f32 %v321, %v331
        %v342 = vmax.f32 %v322, %v333
        %v343 = vmax.f32 %v323, %v335
        %vm344 = vcmask 60416
        %345 = vst.msk [vmem:[%s202] sm:$0xf] %vm344, %v340
        %346 = vst.msk [vmem:[%s202 + $0x4] sm:$0xf] %vm344, %v341
        %347 = vst.msk [vmem:[%s202 + $0x8] sm:$0xf] %vm344, %v342
        %348 = vst.msk [vmem:[%s202 + $0xc] sm:$0xf] %vm344, %v343
        %s349 = smul.u32 2, %s19
        %p350 = scmp.lt.s32.totalorder %s349, 15
        %s351 = scalar_select %p350, %s349, 15
        %s352 = smul.addr %s351, 8
        %s353 = smul.addr %s352, 4
        %s354 = scalar_lea.vmem %s3, %s353
        %s355 = sand.u32 %s121, 1
        %s356 = scalar_lea.sflag [#allocation3], %s355
        %s357 = sand.u32 %s121, 1
        %s358 = smul.addr %s357, 16
        %s359 = scalar_lea.vmem [#allocation2], %s358
        // Predicated region
        $region33: #{conv_block_forward.5} parent=31 // pred_check
          %p360 = pneg %p105
        $region34: #{conv_block_forward.5} parent=31 // pred_check_branch
          %362 = sbr.rel (%p360) target = $region36
        $region35: #{conv_block_forward.5} parent=31 // pred_region
          %s363 = smul.u32 2, %s19
        $region36: #{conv_block_forward.5} parent=31 // pred_fallthru
          _
        // Predicated region
        $region37: #{conv_block_forward.5} parent=31 // pred_check
          %p364 = pneg %p131
        $region38: #{conv_block_forward.5} parent=31 // pred_check_branch
          %366 = sbr.rel (%p364) target = $region40
        $region39: #{conv_block_forward.5} parent=31 // pred_region
          %s368 = ssub.s32 256, 256
          %369 = vsyncadd %s356, %s368
          %s370 = smul.addr %s19, 4
          %s371 = smul.addr %s370, 64
          %s372 = scalar_lea.hbm %s4, %s371
          %s373 = sshll.u32 %s359, 4
          %s374 = int_to_ptr.vmem [resolvable:$true] %s373
          %379 = dma.vmem_to_hbm [thread:$0]  %s374, 256, %s372, %s356, 64, 64, 4
        $region40: #{conv_block_forward.5} parent=31 // pred_fallthru
          _
      $region32: #{conv_block_forward.5} parent=5 // pred_fallthru
        _
      %p380 = scmp.le.s32.totalorder 2, %s14
      // Predicated region
      $region41: #{conv_block_forward.5} parent=5 // pred_check
        %p381 = pneg %p380
      $region42: #{conv_block_forward.5} parent=5 // pred_check_branch
        %383 = sbr.rel (%p381) target = $region44
      $region43: #{conv_block_forward.5} parent=5 // pred_region
        %s384 = ssub.s32 %s14, 2
        // Predicated region
        $region45: #{conv_block_forward.5} parent=43 // pred_check
          %p385 = pneg %p111
        $region46: #{conv_block_forward.5} parent=43 // pred_check_branch
          %387 = sbr.rel (%p385) target = $region48
        $region47: #{conv_block_forward.5} parent=43 // pred_region
          %s388 = smul.u32 2, %s20
          %p389 = scmp.lt.s32.totalorder %s388, 15
          %s390 = scalar_select %p389, %s388, 15
          %s391 = smul.addr %s390, 8
          %s392 = smul.addr %s391, 4
          %s393 = scalar_lea.vmem %s3, %s392
        $region48: #{conv_block_forward.5} parent=43 // pred_fallthru
          _
        // Predicated region
        $region49: #{conv_block_forward.5} parent=43 // pred_check
          %p394 = pneg %p137
        $region50: #{conv_block_forward.5} parent=43 // pred_check_branch
          %396 = sbr.rel (%p394) target = $region52
        $region51: #{conv_block_forward.5} parent=43 // pred_region
          %s397 = sand.u32 %s122, 1
          %s398 = scalar_lea.sflag [#allocation3], %s397
          %s399 = sand.u32 %s122, 1
          %s400 = smul.addr %s399, 16
          %s401 = scalar_lea.vmem [#allocation2], %s400
          %402 = dma.done %s398, 256
        $region52: #{conv_block_forward.5} parent=43 // pred_fallthru
          _
      $region44: #{conv_block_forward.5} parent=5 // pred_fallthru
        _
    $region6: #{conv_block_forward.5} parent=1 // loop_footer
      %s18 = sadd.s32 1, %s14
    $region7: #{conv_block_forward.5} parent=1 // loop_footer_branch
      %13 = sbr.rel target = $region3
    $region8: #{conv_block_forward.5} parent=1 // loop_exit
      _
    %403 = vsyncpa [#allocation3], 1
    %s404 = scalar_lea.sflag [#allocation3], 1
    %405 = vsyncpa %s404, 1

// kernel: conv_block_forward.3
$region0: #{conv_block_forward.3}
  #allocation0 [shape = 'u32[]', space=smem, size = 0x4, offset = 0x4, fixed_abs, tag = 'smem constant byte address 0x4 - core index']
  #allocation1 [shape = 'u32[144,128]{1,0:T(1,128)}', space=vmem, size = 0x12000, scoped, tag = 'internal scratch']
  #allocation2 [shape = 'f32[10,10,32]{2,1,0:T(8,128)}', space=vmem, size = 0x14000, scoped, tag = 'scratch operand']
  %s0 = inlined_call_operand.vmem [shape: f32[2,8,8,32], index: 0, kind: input, shape index: {}]
  %s1 = inlined_call_operand.vmem [shape: f32[9,32,32], index: 1, kind: input, shape index: {}]
  %s2 = inlined_call_operand.vmem [shape: f32[1,32], index: 2, kind: input, shape index: {}]
  %s3 = inlined_call_operand.vmem [shape: f32[1,32], index: 3, kind: input, shape index: {}]
  %s4 = inlined_call_operand.vmem [shape: f32[2,64,32], index: 4, kind: output, shape index: {0}]
  %s5 = inlined_call_operand.vmem [shape: f32[2,1,32], index: 5, kind: output, shape index: {1}]
  %s6 = inlined_call_operand.vmem [shape: f32[2,1,32], index: 6, kind: output, shape index: {2}]
  %7 = xla_tuple %s4, %s5, %s6
  %s8 = sld [smem:[#allocation0]]
  $region65: #{conv_block_forward.3} parent=0
    _
  %s10 = ssub.s32 1, %s8
  %s11 = scalar_select 0, %s10, %s8
  loop: start=0, step=1, limit=4
  $region2: #{conv_block_forward.3} parent=0 // loop_pre_header
    _
  $region3: #{conv_block_forward.3} parent=0 // loop_header
    %s13 = sphi 0, %s17
    %p14 = scmp.ge.s32.totalorder %s13, 4
    %s23 = sphi 0, %s25
    %s26 = sphi 0, %s23
    %s27 = sphi 0, %s26
    %s43 = sphi 0, %s27
    %s47 = sphi 0, %s47
    %s49 = sphi 0, %s47
    %s50 = sphi 0, %s49
    %s64 = sphi 0, %s50
    %s68 = sphi 0, %s68
    %s70 = sphi 0, %s68
    %s71 = sphi 0, %s70
    %s85 = sphi 0, %s71
    %s89 = sphi 0, %s89
    %s91 = sphi 0, %s89
    %s92 = sphi 0, %s91
    %s106 = sphi 0, %s92
    %s112 = sphi 0, %s114
    %s115 = sphi 0, %s112
    %s116 = sphi 0, %s115
    %s132 = sphi 0, %s116
    %s138 = sphi 0, %s140
    %s141 = sphi 0, %s138
    %s142 = sphi 0, %s141
    %s158 = sphi 0, %s142
    %s164 = sphi 0, %s166
    %s167 = sphi 0, %s164
    %s168 = sphi 0, %s167
    %s184 = sphi 0, %s168
  $region4: #{conv_block_forward.3} parent=0 // loop_header_branch
    %16 = sbr.rel (%p14) target = $region8
  $region5: #{conv_block_forward.3} parent=0 // loop_body
    %s18 = ssub.s32 %s13, 1
    %s19 = ssub.s32 %s13, 2
    %s20 = sadd.s32 %s13, 1
    %s21 = ssub.s32 %s13, %s20
    %p22 = scmp.eq.s32.totalorder %s21, 0
    %s24 = sadd.s32 %s23, 1
    %s25 = scalar_select %p22, %s23, %s24
    %p28 = pneg %p22
    %p29 = scmp.eq.s32.totalorder %s13, 1
    %p30 = por %p28, %p29
    %p31 = scmp.ne.s32.totalorder %s23, %s26
    %p32 = scmp.eq.s32.totalorder %s13, 0
    %p33 = por %p31, %p32
    %p34 = scmp.ne.s32.totalorder %s23, %s26
    %p35 = scmp.eq.s32.totalorder %s18, 1
    %p36 = por %p34, %p35
    %p37 = scmp.ne.s32.totalorder %s26, %s27
    %p38 = scmp.eq.s32.totalorder %s18, 0
    %p39 = por %p37, %p38
    %p40 = scmp.ne.s32.totalorder %s26, %s27
    %p41 = scmp.eq.s32.totalorder %s19, 1
    %p42 = por %p40, %p41
    %p44 = scmp.ne.s32.totalorder %s27, %s43
    %p45 = scmp.eq.s32.totalorder %s19, 0
    %p46 = por %p44, %p45
    %s48 = sadd.s32 %s47, 1
    %p51 = scmp.eq.s32.totalorder %s13, 1
    %p52 = scmp.ne.s32.totalorder %s47, %s49
    %p53 = scmp.eq.s32.totalorder %s13, 0
    %p54 = por %p52, %p53
    %p55 = scmp.ne.s32.totalorder %s47, %s49
    %p56 = scmp.eq.s32.totalorder %s18, 1
    %p57 = por %p55, %p56
    %p58 = scmp.ne.s32.totalorder %s49, %s50
    %p59 = scmp.eq.s32.totalorder %s18, 0
    %p60 = por %p58, %p59
    %p61 = scmp.ne.s32.totalorder %s49, %s50
    %p62 = scmp.eq.s32.totalorder %s19, 1
    %p63 = por %p61, %p62
    %p65 = scmp.ne.s32.totalorder %s50, %s64
    %p66 = scmp.eq.s32.totalorder %s19, 0
    %p67 = por %p65, %p66
    %s69 = sadd.s32 %s68, 1
    %p72 = scmp.eq.s32.totalorder %s13, 1
    %p73 = scmp.ne.s32.totalorder %s68, %s70
    %p74 = scmp.eq.s32.totalorder %s13, 0
    %p75 = por %p73, %p74
    %p76 = scmp.ne.s32.totalorder %s68, %s70
    %p77 = scmp.eq.s32.totalorder %s18, 1
    %p78 = por %p76, %p77
    %p79 = scmp.ne.s32.totalorder %s70, %s71
    %p80 = scmp.eq.s32.totalorder %s18, 0
    %p81 = por %p79, %p80
    %p82 = scmp.ne.s32.totalorder %s70, %s71
    %p83 = scmp.eq.s32.totalorder %s19, 1
    %p84 = por %p82, %p83
    %p86 = scmp.ne.s32.totalorder %s71, %s85
    %p87 = scmp.eq.s32.totalorder %s19, 0
    %p88 = por %p86, %p87
    %s90 = sadd.s32 %s89, 1
    %p93 = scmp.eq.s32.totalorder %s13, 1
    %p94 = scmp.ne.s32.totalorder %s89, %s91
    %p95 = scmp.eq.s32.totalorder %s13, 0
    %p96 = por %p94, %p95
    %p97 = scmp.ne.s32.totalorder %s89, %s91
    %p98 = scmp.eq.s32.totalorder %s18, 1
    %p99 = por %p97, %p98
    %p100 = scmp.ne.s32.totalorder %s91, %s92
    %p101 = scmp.eq.s32.totalorder %s18, 0
    %p102 = por %p100, %p101
    %p103 = scmp.ne.s32.totalorder %s91, %s92
    %p104 = scmp.eq.s32.totalorder %s19, 1
    %p105 = por %p103, %p104
    %p107 = scmp.ne.s32.totalorder %s92, %s106
    %p108 = scmp.eq.s32.totalorder %s19, 0
    %p109 = por %p107, %p108
    %s110 = ssub.s32 %s13, %s20
    %p111 = scmp.eq.s32.totalorder %s110, 0
    %s113 = sadd.s32 %s112, 1
    %s114 = scalar_select %p111, %s112, %s113
    %p117 = pneg %p111
    %p118 = scmp.eq.s32.totalorder %s13, 1
    %p119 = por %p117, %p118
    %p120 = scmp.ne.s32.totalorder %s112, %s115
    %p121 = scmp.eq.s32.totalorder %s13, 0
    %p122 = por %p120, %p121
    %p123 = scmp.ne.s32.totalorder %s112, %s115
    %p124 = scmp.eq.s32.totalorder %s18, 1
    %p125 = por %p123, %p124
    %p126 = scmp.ne.s32.totalorder %s115, %s116
    %p127 = scmp.eq.s32.totalorder %s18, 0
    %p128 = por %p126, %p127
    %p129 = scmp.ne.s32.totalorder %s115, %s116
    %p130 = scmp.eq.s32.totalorder %s19, 1
    %p131 = por %p129, %p130
    %p133 = scmp.ne.s32.totalorder %s116, %s132
    %p134 = scmp.eq.s32.totalorder %s19, 0
    %p135 = por %p133, %p134
    %s136 = ssub.s32 %s13, %s20
    %p137 = scmp.eq.s32.totalorder %s136, 0
    %s139 = sadd.s32 %s138, 1
    %s140 = scalar_select %p137, %s138, %s139
    %p143 = pneg %p137
    %p144 = scmp.eq.s32.totalorder %s13, 1
    %p145 = por %p143, %p144
    %p146 = scmp.ne.s32.totalorder %s138, %s141
    %p147 = scmp.eq.s32.totalorder %s13, 0
    %p148 = por %p146, %p147
    %p149 = scmp.ne.s32.totalorder %s138, %s141
    %p150 = scmp.eq.s32.totalorder %s18, 1
    %p151 = por %p149, %p150
    %p152 = scmp.ne.s32.totalorder %s141, %s142
    %p153 = scmp.eq.s32.totalorder %s18, 0
    %p154 = por %p152, %p153
    %p155 = scmp.ne.s32.totalorder %s141, %s142
    %p156 = scmp.eq.s32.totalorder %s19, 1
    %p157 = por %p155, %p156
    %p159 = scmp.ne.s32.totalorder %s142, %s158
    %p160 = scmp.eq.s32.totalorder %s19, 0
    %p161 = por %p159, %p160
    %s162 = ssub.s32 %s13, %s20
    %p163 = scmp.eq.s32.totalorder %s162, 0
    %s165 = sadd.s32 %s164, 1
    %s166 = scalar_select %p163, %s164, %s165
    %p169 = pneg %p163
    %p170 = scmp.eq.s32.totalorder %s13, 1
    %p171 = por %p169, %p170
    %p172 = scmp.ne.s32.totalorder %s164, %s167
    %p173 = scmp.eq.s32.totalorder %s13, 0
    %p174 = por %p172, %p173
    %p175 = scmp.ne.s32.totalorder %s164, %s167
    %p176 = scmp.eq.s32.totalorder %s18, 1
    %p177 = por %p175, %p176
    %p178 = scmp.ne.s32.totalorder %s167, %s168
    %p179 = scmp.eq.s32.totalorder %s18, 0
    %p180 = por %p178, %p179
    %p181 = scmp.ne.s32.totalorder %s167, %s168
    %p182 = scmp.eq.s32.totalorder %s19, 1
    %p183 = por %p181, %p182
    %p185 = scmp.ne.s32.totalorder %s168, %s184
    %p186 = scmp.eq.s32.totalorder %s19, 0
    %p187 = por %p185, %p186
    %p188 = scmp.le.s32.totalorder 1, %s13
    %p189 = scmp.lt.s32.totalorder %s13, 3
    %p190 = pnand %p188, %p189
    %p191 = pneg %p190
    // Predicated region
    $region9: #{conv_block_forward.3} parent=5 // pred_check
      _
    $region10: #{conv_block_forward.3} parent=5 // pred_check_branch
      %193 = sbr.rel (%p190) target = $region12
    $region11: #{conv_block_forward.3} parent=5 // pred_region
      %s194 = ssub.s32 %s13, 1
      // Predicated region
      $region13: #{conv_block_forward.3} parent=11 // pred_check
        %p195 = pneg %p60
      $region14: #{conv_block_forward.3} parent=11 // pred_check_branch
        %197 = sbr.rel (%p195) target = $region16
      $region15: #{conv_block_forward.3} parent=11 // pred_region
        _
      $region16: #{conv_block_forward.3} parent=11 // pred_fallthru
        _
      // Predicated region
      $region17: #{conv_block_forward.3} parent=11 // pred_check
        %p198 = pneg %p81
      $region18: #{conv_block_forward.3} parent=11 // pred_check_branch
        %200 = sbr.rel (%p198) target = $region20
      $region19: #{conv_block_forward.3} parent=11 // pred_region
        _
      $region20: #{conv_block_forward.3} parent=11 // pred_fallthru
        _
      // Predicated region
      $region21: #{conv_block_forward.3} parent=11 // pred_check
        %p201 = pneg %p102
      $region22: #{conv_block_forward.3} parent=11 // pred_check_branch
        %203 = sbr.rel (%p201) target = $region24
      $region23: #{conv_block_forward.3} parent=11 // pred_region
        _
      $region24: #{conv_block_forward.3} parent=11 // pred_fallthru
        _
    $region12: #{conv_block_forward.3} parent=5 // pred_fallthru
      _
    %p204 = scmp.lt.s32.totalorder %s13, 2
    // Predicated region
    $region25: #{conv_block_forward.3} parent=5 // pred_check
      %p205 = pneg %p204
    $region26: #{conv_block_forward.3} parent=5 // pred_check_branch
      %207 = sbr.rel (%p205) target = $region28
    $region27: #{conv_block_forward.3} parent=5 // pred_region
      // Predicated region
      $region29: #{conv_block_forward.3} parent=27 // pred_check
        %p208 = pneg %p33
      $region30: #{conv_block_forward.3} parent=27 // pred_check_branch
        %210 = sbr.rel (%p208) target = $region32
      $region31: #{conv_block_forward.3} parent=27 // pred_region
        %p211 = scmp.lt.s32.totalorder %s13, 1
        %s212 = scalar_select %p211, %s13, 1
        %s213 = smul.addr %s212, 8
        %s214 = smul.addr %s213, 8
        %s215 = scalar_lea.vmem %s0, %s214
      $region32: #{conv_block_forward.3} parent=27 // pred_fallthru
        _
    $region28: #{conv_block_forward.3} parent=5 // pred_fallthru
      _
    %p216 = scmp.le.s32.totalorder 1, %s13
    %p217 = scmp.lt.s32.totalorder %s13, 3
    %p218 = pnand %p216, %p217
    %p219 = pneg %p218
    // Predicated region
    $region33: #{conv_block_forward.3} parent=5 // pred_check
      _
    $region34: #{conv_block_forward.3} parent=5 // pred_check_branch
      %221 = sbr.rel (%p218) target = $region36
    $region35: #{conv_block_forward.3} parent=5 // pred_region
      %s222 = ssub.s32 %s13, 1
      %p223 = scmp.lt.s32.totalorder %s18, 1
      %s224 = scalar_select %p223, %s18, 1
      %s225 = smul.addr %s224, 8
      %s226 = smul.addr %s225, 8
      %s227 = scalar_lea.vmem %s0, %s226
      %p228 = pneg %p39
      %p229 = pneg %p36
      %p230 = pneg %p60
      %p231 = pneg %p57
      %p232 = pneg %p81
      %p233 = pneg %p78
      %p234 = pneg %p102
      %p235 = pneg %p99
      %p236 = pneg %p128
      %p237 = pneg %p125
      %p238 = scmp.lt.s32.totalorder %s18, 1
      %s239 = scalar_select %p238, %s18, 1
      %s240 = smul.addr %s239, 8
      %s241 = smul.addr %s240, 8
      %s242 = scalar_lea.vmem %s4, %s241
      %p243 = pneg %p154
      %p244 = pneg %p151
      %p245 = scmp.lt.s32.totalorder %s18, 1
      %s246 = scalar_select %p245, %s18, 1
      %s247 = scalar_lea.vmem %s5, %s246
      %p248 = pneg %p180
      %p249 = pneg %p177
      %p250 = scmp.lt.s32.totalorder %s18, 1
      %s251 = scalar_select %p250, %s18, 1
      %s252 = scalar_lea.vmem %s6, %s251
      %p253 = scmp.lt.s32.totalorder %s18, 1
      %s254 = scalar_select %p253, %s18, 1
      %s255 = smul.addr %s254, 8
      %s256 = smul.addr %s255, 8
      %s257 = scalar_lea.vmem %s0, %s256
      %p258 = scmp.lt.s32.totalorder %s18, 1
      %s259 = scalar_select %p258, %s18, 1
      %s260 = smul.addr %s259, 8
      %s261 = smul.addr %s260, 8
      %s262 = scalar_lea.vmem %s4, %s261
      %p263 = scmp.lt.s32.totalorder %s18, 1
      %s264 = scalar_select %p263, %s18, 1
      %s265 = scalar_lea.vmem %s5, %s264
      %p266 = scmp.lt.s32.totalorder %s18, 1
      %s267 = scalar_select %p266, %s18, 1
      %s268 = scalar_lea.vmem %s6, %s267
      %v269 = vld [vmem:[%s257] sm:$0xff]
      %v270 = vld [vmem:[%s257 + $0x8] sm:$0xff]
      %v271 = vld [vmem:[%s257 + $0x10] sm:$0xff]
      %v272 = vld [vmem:[%s257 + $0x18] sm:$0xff]
      %v273 = vld [vmem:[%s257 + $0x20] sm:$0xff]
      %v274 = vld [vmem:[%s257 + $0x28] sm:$0xff]
      %v275 = vld [vmem:[%s257 + $0x30] sm:$0xff]
      %v276 = vld [vmem:[%s257 + $0x38] sm:$0xff]
      %vm277 = vcmask 261120
      %278 = vst.msk [vmem:[#allocation2] sm:$0xff] %vm277, 0.0
      %vm279 = vcmask 254976
      %280 = vst.msk [vmem:[#allocation2 + $0x8] sm:$0x3] %vm279, 0.0
      %281 = vst.msk [vmem:[#allocation2 + $0x10] sm:$0xff] %vm277, 0.0
      %282 = vst.msk [vmem:[#allocation2 + $0x18] sm:$0x3] %vm279, 0.0
      %283 = vst.msk [vmem:[#allocation2 + $0x20] sm:$0xff] %vm277, 0.0
      %284 = vst.msk [vmem:[#allocation2 + $0x28] sm:$0x3] %vm279, 0.0
      %285 = vst.msk [vmem:[#allocation2 + $0x30] sm:$0xff] %vm277, 0.0
      %286 = vst.msk [vmem:[#allocation2 + $0x38] sm:$0x3] %vm279, 0.0
      %287 = vst.msk [vmem:[#allocation2 + $0x40] sm:$0xff] %vm277, 0.0
      %288 = vst.msk [vmem:[#allocation2 + $0x48] sm:$0x3] %vm279, 0.0
      %289 = vst.msk [vmem:[#allocation2 + $0x50] sm:$0xff] %vm277, 0.0
      %290 = vst.msk [vmem:[#allocation2 + $0x58] sm:$0x3] %vm279, 0.0
      %291 = vst.msk [vmem:[#allocation2 + $0x60] sm:$0xff] %vm277, 0.0
      %292 = vst.msk [vmem:[#allocation2 + $0x68] sm:$0x3] %vm279, 0.0
      %293 = vst.msk [vmem:[#allocation2 + $0x70] sm:$0xff] %vm277, 0.0
      %294 = vst.msk [vmem:[#allocation2 + $0x78] sm:$0x3] %vm279, 0.0
      %295 = vst.msk [vmem:[#allocation2 + $0x80] sm:$0xff] %vm277, 0.0
      %296 = vst.msk [vmem:[#allocation2 + $0x88] sm:$0x3] %vm279, 0.0
      %297 = vst.msk [vmem:[#allocation2 + $0x90] sm:$0xff] %vm277, 0.0
      %298 = vst.msk [vmem:[#allocation2 + $0x98] sm:$0x3] %vm279, 0.0
      %s299 = scalar_lea.vmem [#allocation2], 16
      %300 = vst.msk [vmem:[%s299 + $0x1] sm:$0xff] %vm277, %v269
      %301 = vst.msk [vmem:[%s299 + $0x11] sm:$0xff] %vm277, %v270
      %302 = vst.msk [vmem:[%s299 + $0x21] sm:$0xff] %vm277, %v271
      %303 = vst.msk [vmem:[%s299 + $0x31] sm:$0xff] %vm277, %v272
      %304 = vst.msk [vmem:[%s299 + $0x41] sm:$0xff] %vm277, %v273
      %305 = vst.msk [vmem:[%s299 + $0x51] sm:$0xff] %vm277, %v274
      %306 = vst.msk [vmem:[%s299 + $0x61] sm:$0xff] %vm277, %v275
      %307 = vst.msk [vmem:[%s299 + $0x71] sm:$0xff] %vm277, %v276
      %v308 = vld [vmem:[#allocation2] sm:$0xff]
      %v309 = vld [vmem:[#allocation2 + $0x10] sm:$0xff]
      %v310 = vld [vmem:[#allocation2 + $0x20] sm:$0xff]
      %v311 = vld [vmem:[#allocation2 + $0x30] sm:$0xff]
      %v312 = vld [vmem:[#allocation2 + $0x40] sm:$0xff]
      %v313 = vld [vmem:[#allocation2 + $0x50] sm:$0xff]
      %v314 = vld [vmem:[#allocation2 + $0x60] sm:$0xff]
      %v315 = vld [vmem:[#allocation2 + $0x70] sm:$0xff]
      %v316 = vld [vmem:[%s1] sm:$0xff]
      %v317 = vld [vmem:[%s1 + $0x8] sm:$0xff]
      %v318 = vld [vmem:[%s1 + $0x10] sm:$0xff]
      %v319 = vld [vmem:[%s1 + $0x18] sm:$0xff]
      %v320 = vld [vmem:[#allocation2 + $0x1] sm:$0xff]
      %v321 = vld [vmem:[#allocation2 + $0x11] sm:$0xff]
      %v322 = vld [vmem:[#allocation2 + $0x21] sm:$0xff]
      %v323 = vld [vmem:[#allocation2 + $0x31] sm:$0xff]
      %v324 = vld [vmem:[#allocation2 + $0x41] sm:$0xff]
      %v325 = vld [vmem:[#allocation2 + $0x51] sm:$0xff]
      %v326 = vld [vmem:[#allocation2 + $0x61] sm:$0xff]
      %v327 = vld [vmem:[#allocation2 + $0x71] sm:$0xff]
      %s328 = scalar_lea.vmem %s1, 32
      %v329 = vld [vmem:[%s328] sm:$0xff]
      %v330 = vld [vmem:[%s328 + $0x8] sm:$0xff]
      %v331 = vld [vmem:[%s328 + $0x10] sm:$0xff]
      %v332 = vld [vmem:[%s328 + $0x18] sm:$0xff]
      %v334 = vsel %vm277, %v320, 0
      %v337 = vsel %vm277, %v321, 0
      %v340 = vsel %vm277, %v322, 0
      %v343 = vsel %vm277, %v323, 0
      %v346 = vsel %vm277, %v324, 0
      %v349 = vsel %vm277, %v325, 0
      %v352 = vsel %vm277, %v326, 0
      %v355 = vsel %vm277, %v327, 0
      %357 = vmatprep.subr.mxu0 0.0
      %358 = vmatpush1.msra.mxu0 0.0
      %359 = vmatprep.subr.mxu0 0.0
      %360 = vmatpush1.msra.mxu0 0.0
      %361 = vmatprep.subr.mxu0 0.0
      %362 = vmatpush1.msra.mxu0 0.0
      %363 = vmatprep.subr.mxu0 0.0
      %364 = vmatpush1.msra.mxu0 0.0
      %365 = vmatprep.subr.mxu0 0.0
      %366 = vmatpush1.msra.mxu0 0.0
      %367 = vmatprep.subr.mxu0 0.0
      %368 = vmatpush1.msra.mxu0 0.0
      %369 = vmatprep.subr.mxu0 0.0
      %370 = vmatpush1.msra.mxu0 0.0
      %371 = vmatprep.subr.mxu0 0.0
      %372 = vmatpush1.msra.mxu0 0.0
      %373 = vmatprep.subr.mxu0 0.0
      %374 = vmatpush1.msra.mxu0 0.0
      %375 = vmatprep.subr.mxu0 0.0
      %376 = vmatpush1.msra.mxu0 0.0
      %377 = vmatprep.subr.mxu0 0.0
      %378 = vmatpush1.msra.mxu0 0.0
      %379 = vmatprep.subr.mxu0 0.0
      %380 = vmatpush1.msra.mxu0 0.0
      %381 = vmatprep.subr.mxu0 0.0
      %382 = vmatpush1.msra.mxu0 %v332
      %383 = vmatprep.subr.mxu0 0.0
      %384 = vmatpush1.msra.mxu0 %v331
      %385 = vmatprep.subr.mxu0 0.0
      %386 = vmatpush1.msra.mxu0 %v330
      %387 = vmatprep.subr.mxu0 0.0
      %388 = vmatpush1.msra.mxu0 %v329
      %389 = vmatprep.subr.mxu0 0.0
      %390 = vmatpush2.msra.mxu0 0.0
      %391 = vmatprep.subr.mxu0 0.0
      %392 = vmatpush2.msra.mxu0 0.0
      %393 = vmatprep.subr.mxu0 0.0
      %394 = vmatpush2.msra.mxu0 0.0
      %395 = vmatprep.subr.mxu0 0.0
      %396 = vmatpush2.msra.mxu0 0.0
      %397 = vmatprep.subr.mxu0 0.0
      %398 = vmatpush2.msra.mxu0 0.0
      %399 = vmatprep.subr.mxu0 0.0
      %400 = vmatpush2.msra.mxu0 0.0
      %401 = vmatprep.subr.mxu0 0.0
      %402 = vmatpush2.msra.mxu0 0.0
      %403 = vmatprep.subr.mxu0 0.0
      %404 = vmatpush2.msra.mxu0 0.0
      %405 = vmatprep.subr.mxu0 0.0
      %406 = vmatpush2.msra.mxu0 0.0
      %407 = vmatprep.subr.mxu0 0.0
      %408 = vmatpush2.msra.mxu0 0.0
      %409 = vmatprep.subr.mxu0 0.0
      %410 = vmatpush2.msra.mxu0 0.0
      %411 = vmatprep.subr.mxu0 0.0
      %412 = vmatpush2.msra.mxu0 0.0
      %413 = vmatprep.subr.mxu0 0.0
      %414 = vmatpush2.msra.mxu0 0.0
      %415 = vmatprep.subr.mxu0 0.0
      %416 = vmatpush2.msra.mxu0 0.0
      %417 = vmatprep.subr.mxu0 0.0
      %418 = vmatpush2.msra.mxu0 0.0
      %419 = vmatprep.subr.mxu0 0.0
      %420 = vmatpush2.msra.mxu0 0.0
      %421 = vmatprep.mubr.f32.mxu0 0.0
      %422 = vmatmul.mubr.f32.gmra.mxu0 %v334
      %v423 = vpop.f32.mrf.mxu0
      %v424 = vadd.f32 0.0, %v423
      %v425 = vpop.f32.mrf.mxu0
      %426 = vmatprep.mubr.f32.mxu0 0.0
      %427 = vmatmul.mubr.f32.gmra.mxu0 %v337
      %v428 = vpop.f32.mrf.mxu0
      %v429 = vadd.f32 0.0, %v428
      %v430 = vpop.f32.mrf.mxu0
      %431 = vmatprep.mubr.f32.mxu0 0.0
      %432 = vmatmul.mubr.f32.gmra.mxu0 %v340
      %v433 = vpop.f32.mrf.mxu0
      %v434 = vadd.f32 0.0, %v433
      %v435 = vpop.f32.mrf.mxu0
      %436 = vmatprep.mubr.f32.mxu0 0.0
      %437 = vmatmul.mubr.f32.gmra.mxu0 %v343
      %v438 = vpop.f32.mrf.mxu0
      %v439 = vadd.f32 0.0, %v438
      %v440 = vpop.f32.mrf.mxu0
      %441 = vmatprep.mubr.f32.mxu0 0.0
      %442 = vmatmul.mubr.f32.gmra.mxu0 %v346
      %v443 = vpop.f32.mrf.mxu0
      %v444 = vadd.f32 0.0, %v443
      %v445 = vpop.f32.mrf.mxu0
      %446 = vmatprep.mubr.f32.mxu0 0.0
      %447 = vmatmul.mubr.f32.gmra.mxu0 %v349
      %v448 = vpop.f32.mrf.mxu0
      %v449 = vadd.f32 0.0, %v448
      %v450 = vpop.f32.mrf.mxu0
      %451 = vmatprep.mubr.f32.mxu0 0.0
      %452 = vmatmul.mubr.f32.gmra.mxu0 %v352
      %v453 = vpop.f32.mrf.mxu0
      %v454 = vadd.f32 0.0, %v453
      %v455 = vpop.f32.mrf.mxu0
      %456 = vmatprep.mubr.f32.mxu0 0.0
      %457 = vmatmul.mubr.f32.gmra.mxu0 %v355
      %v458 = vpop.f32.mrf.mxu0
      %v459 = vadd.f32 0.0, %v458
      %v460 = vpop.f32.mrf.mxu0
      %461 = vdwg.mxu0
      %v463 = vsel %vm277, %v308, 0
      %v466 = vsel %vm277, %v309, 0
      %v469 = vsel %vm277, %v310, 0
      %v472 = vsel %vm277, %v311, 0
      %v475 = vsel %vm277, %v312, 0
      %v478 = vsel %vm277, %v313, 0
      %v481 = vsel %vm277, %v314, 0
      %v484 = vsel %vm277, %v315, 0
      %486 = vmatprep.subr.mxu0 0.0
      %487 = vmatpush1.msra.mxu0 0.0
      %488 = vmatprep.subr.mxu0 0.0
      %489 = vmatpush1.msra.mxu0 0.0
      %490 = vmatprep.subr.mxu0 0.0
      %491 = vmatpush1.msra.mxu0 0.0
      %492 = vmatprep.subr.mxu0 0.0
      %493 = vmatpush1.msra.mxu0 0.0
      %494 = vmatprep.subr.mxu0 0.0
      %495 = vmatpush1.msra.mxu0 0.0
      %496 = vmatprep.subr.mxu0 0.0
      %497 = vmatpush1.msra.mxu0 0.0
      %498 = vmatprep.subr.mxu0 0.0
      %499 = vmatpush1.msra.mxu0 0.0
      %500 = vmatprep.subr.mxu0 0.0
      %501 = vmatpush1.msra.mxu0 0.0
      %502 = vmatprep.subr.mxu0 0.0
      %503 = vmatpush1.msra.mxu0 0.0
      %504 = vmatprep.subr.mxu0 0.0
      %505 = vmatpush1.msra.mxu0 0.0
      %506 = vmatprep.subr.mxu0 0.0
      %507 = vmatpush1.msra.mxu0 0.0
      %508 = vmatprep.subr.mxu0 0.0
      %509 = vmatpush1.msra.mxu0 0.0
      %510 = vmatprep.subr.mxu0 0.0
      %511 = vmatpush1.msra.mxu0 %v319
      %512 = vmatprep.subr.mxu0 0.0
      %513 = vmatpush1.msra.mxu0 %v318
      %514 = vmatprep.subr.mxu0 0.0
      %515 = vmatpush1.msra.mxu0 %v317
      %516 = vmatprep.subr.mxu0 0.0
      %517 = vmatpush1.msra.mxu0 %v316
      %518 = vmatprep.subr.mxu0 0.0
      %519 = vmatpush2.msra.mxu0 0.0
      %520 = vmatprep.subr.mxu0 0.0
      %521 = vmatpush2.msra.mxu0 0.0
      %522 = vmatprep.subr.mxu0 0.0
      %523 = vmatpush2.msra.mxu0 0.0
      %524 = vmatprep.subr.mxu0 0.0
      %525 = vmatpush2.msra.mxu0 0.0
      %526 = vmatprep.subr.mxu0 0.0
      %527 = vmatpush2.msra.mxu0 0.0
      %528 = vmatprep.subr.mxu0 0.0
      %529 = vmatpush2.msra.mxu0 0.0
      %530 = vmatprep.subr.mxu0 0.0
      %531 = vmatpush2.msra.mxu0 0.0
      %532 = vmatprep.subr.mxu0 0.0
      %533 = vmatpush2.msra.mxu0 0.0
      %534 = vmatprep.subr.mxu0 0.0
      %535 = vmatpush2.msra.mxu0 0.0
      %536 = vmatprep.subr.mxu0 0.0
      %537 = vmatpush2.msra.mxu0 0.0
      %538 = vmatprep.subr.mxu0 0.0
      %539 = vmatpush2.msra.mxu0 0.0
      %540 = vmatprep.subr.mxu0 0.0
      %541 = vmatpush2.msra.mxu0 0.0
      %542 = vmatprep.subr.mxu0 0.0
      %543 = vmatpush2.msra.mxu0 0.0
      %544 = vmatprep.subr.mxu0 0.0
      %545 = vmatpush2.msra.mxu0 0.0
      %546 = vmatprep.subr.mxu0 0.0
      %547 = vmatpush2.msra.mxu0 0.0
      %548 = vmatprep.subr.mxu0 0.0
      %549 = vmatpush2.msra.mxu0 0.0
      %550 = vmatprep.mubr.f32.mxu0 0.0
      %551 = vmatmul.mubr.f32.gmra.mxu0 %v463
      %v552 = vpop.f32.mrf.mxu0
      %v553 = vadd.f32 %v424, %v552
      %v554 = vpop.f32.mrf.mxu0
      %555 = vmatprep.mubr.f32.mxu0 0.0
      %556 = vmatmul.mubr.f32.gmra.mxu0 %v466
      %v557 = vpop.f32.mrf.mxu0
      %v558 = vadd.f32 %v429, %v557
      %v559 = vpop.f32.mrf.mxu0
      %560 = vmatprep.mubr.f32.mxu0 0.0
      %561 = vmatmul.mubr.f32.gmra.mxu0 %v469
      %v562 = vpop.f32.mrf.mxu0
      %v563 = vadd.f32 %v434, %v562
      %v564 = vpop.f32.mrf.mxu0
      %565 = vmatprep.mubr.f32.mxu0 0.0
      %566 = vmatmul.mubr.f32.gmra.mxu0 %v472
      %v567 = vpop.f32.mrf.mxu0
      %v568 = vadd.f32 %v439, %v567
      %v569 = vpop.f32.mrf.mxu0
      %570 = vmatprep.mubr.f32.mxu0 0.0
      %571 = vmatmul.mubr.f32.gmra.mxu0 %v475
      %v572 = vpop.f32.mrf.mxu0
      %v573 = vadd.f32 %v444, %v572
      %v574 = vpop.f32.mrf.mxu0
      %575 = vmatprep.mubr.f32.mxu0 0.0
      %576 = vmatmul.mubr.f32.gmra.mxu0 %v478
      %v577 = vpop.f32.mrf.mxu0
      %v578 = vadd.f32 %v449, %v577
      %v579 = vpop.f32.mrf.mxu0
      %580 = vmatprep.mubr.f32.mxu0 0.0
      %581 = vmatmul.mubr.f32.gmra.mxu0 %v481
      %v582 = vpop.f32.mrf.mxu0
      %v583 = vadd.f32 %v454, %v582
      %v584 = vpop.f32.mrf.mxu0
      %585 = vmatprep.mubr.f32.mxu0 0.0
      %586 = vmatmul.mubr.f32.gmra.mxu0 %v484
      %v587 = vpop.f32.mrf.mxu0
      %v588 = vadd.f32 %v459, %v587
      %v589 = vpop.f32.mrf.mxu0
      %590 = vdwg.mxu0
      %v591 = vld [vmem:[#allocation2 + $0x2] sm:$0xff]
      %v592 = vld [vmem:[#allocation2 + $0x12] sm:$0xff]
      %v593 = vld [vmem:[#allocation2 + $0x22] sm:$0xff]
      %v594 = vld [vmem:[#allocation2 + $0x32] sm:$0xff]
      %v595 = vld [vmem:[#allocation2 + $0x42] sm:$0xff]
      %v596 = vld [vmem:[#allocation2 + $0x52] sm:$0xff]
      %v597 = vld [vmem:[#allocation2 + $0x62] sm:$0xff]
      %v598 = vld [vmem:[#allocation2 + $0x72] sm:$0xff]
      %s599 = scalar_lea.vmem %s1, 64
      %v600 = vld [vmem:[%s599] sm:$0xff]
      %v601 = vld [vmem:[%s599 + $0x8] sm:$0xff]
      %v602 = vld [vmem:[%s599 + $0x10] sm:$0xff]
      %v603 = vld [vmem:[%s599 + $0x18] sm:$0xff]
      %v605 = vsel %vm277, %v591, 0
      %v608 = vsel %vm277, %v592, 0
      %v611 = vsel %vm277, %v593, 0
      %v614 = vsel %vm277, %v594, 0
      %v617 = vsel %vm277, %v595, 0
      %v620 = vsel %vm277, %v596, 0
      %v623 = vsel %vm277, %v597, 0
      %v626 = vsel %vm277, %v598, 0
      %628 = vmatprep.subr.mxu0 0.0
      %629 = vmatpush1.msra.mxu0 0.0
      %630 = vmatprep.subr.mxu0 0.0
      %631 = vmatpush1.msra.mxu0 0.0
      %632 = vmatprep.subr.mxu0 0.0
      %633 = vmatpush1.msra.mxu0 0.0
      %634 = vmatprep.subr.mxu0 0.0
      %635 = vmatpush1.msra.mxu0 0.0
      %636 = vmatprep.subr.mxu0 0.0
      %637 = vmatpush1.msra.mxu0 0.0
      %638 = vmatprep.subr.mxu0 0.0
      %639 = vmatpush1.msra.mxu0 0.0
      %640 = vmatprep.subr.mxu0 0.0
      %641 = vmatpush1.msra.mxu0 0.0
      %642 = vmatprep.subr.mxu0 0.0
      %643 = vmatpush1.msra.mxu0 0.0
      %644 = vmatprep.subr.mxu0 0.0
      %645 = vmatpush1.msra.mxu0 0.0
      %646 = vmatprep.subr.mxu0 0.0
      %647 = vmatpush1.msra.mxu0 0.0
      %648 = vmatprep.subr.mxu0 0.0
      %649 = vmatpush1.msra.mxu0 0.0
      %650 = vmatprep.subr.mxu0 0.0
      %651 = vmatpush1.msra.mxu0 0.0
      %652 = vmatprep.subr.mxu0 0.0
      %653 = vmatpush1.msra.mxu0 %v603
      %654 = vmatprep.subr.mxu0 0.0
      %655 = vmatpush1.msra.mxu0 %v602
      %656 = vmatprep.subr.mxu0 0.0
      %657 = vmatpush1.msra.mxu0 %v601
      %658 = vmatprep.subr.mxu0 0.0
      %659 = vmatpush1.msra.mxu0 %v600
      %660 = vmatprep.subr.mxu0 0.0
      %661 = vmatpush2.msra.mxu0 0.0
      %662 = vmatprep.subr.mxu0 0.0
      %663 = vmatpush2.msra.mxu0 0.0
      %664 = vmatprep.subr.mxu0 0.0
      %665 = vmatpush2.msra.mxu0 0.0
      %666 = vmatprep.subr.mxu0 0.0
      %667 = vmatpush2.msra.mxu0 0.0
      %668 = vmatprep.subr.mxu0 0.0
      %669 = vmatpush2.msra.mxu0 0.0
      %670 = vmatprep.subr.mxu0 0.0
      %671 = vmatpush2.msra.mxu0 0.0
      %672 = vmatprep.subr.mxu0 0.0
      %673 = vmatpush2.msra.mxu0 0.0
      %674 = vmatprep.subr.mxu0 0.0
      %675 = vmatpush2.msra.mxu0 0.0
      %676 = vmatprep.subr.mxu0 0.0
      %677 = vmatpush2.msra.mxu0 0.0
      %678 = vmatprep.subr.mxu0 0.0
      %679 = vmatpush2.msra.mxu0 0.0
      %680 = vmatprep.subr.mxu0 0.0
      %681 = vmatpush2.msra.mxu0 0.0
      %682 = vmatprep.subr.mxu0 0.0
      %683 = vmatpush2.msra.mxu0 0.0
      %684 = vmatprep.subr.mxu0 0.0
      %685 = vmatpush2.msra.mxu0 0.0
      %686 = vmatprep.subr.mxu0 0.0
      %687 = vmatpush2.msra.mxu0 0.0
      %688 = vmatprep.subr.mxu0 0.0
      %689 = vmatpush2.msra.mxu0 0.0
      %690 = vmatprep.subr.mxu0 0.0
      %691 = vmatpush2.msra.mxu0 0.0
      %692 = vmatprep.mubr.f32.mxu0 0.0
      %693 = vmatmul.mubr.f32.gmra.mxu0 %v605
      %v694 = vpop.f32.mrf.mxu0
      %v695 = vadd.f32 0.0, %v694
      %v696 = vpop.f32.mrf.mxu0
      %697 = vmatprep.mubr.f32.mxu0 0.0
      %698 = vmatmul.mubr.f32.gmra.mxu0 %v608
      %v699 = vpop.f32.mrf.mxu0
      %v700 = vadd.f32 0.0, %v699
      %v701 = vpop.f32.mrf.mxu0
      %702 = vmatprep.mubr.f32.mxu0 0.0
      %703 = vmatmul.mubr.f32.gmra.mxu0 %v611
      %v704 = vpop.f32.mrf.mxu0
      %v705 = vadd.f32 0.0, %v704
      %v706 = vpop.f32.mrf.mxu0
      %707 = vmatprep.mubr.f32.mxu0 0.0
      %708 = vmatmul.mubr.f32.gmra.mxu0 %v614
      %v709 = vpop.f32.mrf.mxu0
      %v710 = vadd.f32 0.0, %v709
      %v711 = vpop.f32.mrf.mxu0
      %712 = vmatprep.mubr.f32.mxu0 0.0
      %713 = vmatmul.mubr.f32.gmra.mxu0 %v617
      %v714 = vpop.f32.mrf.mxu0
      %v715 = vadd.f32 0.0, %v714
      %v716 = vpop.f32.mrf.mxu0
      %717 = vmatprep.mubr.f32.mxu0 0.0
      %718 = vmatmul.mubr.f32.gmra.mxu0 %v620
      %v719 = vpop.f32.mrf.mxu0
      %v720 = vadd.f32 0.0, %v719
      %v721 = vpop.f32.mrf.mxu0
      %722 = vmatprep.mubr.f32.mxu0 0.0
      %723 = vmatmul.mubr.f32.gmra.mxu0 %v623
      %v724 = vpop.f32.mrf.mxu0
      %v725 = vadd.f32 0.0, %v724
      %v726 = vpop.f32.mrf.mxu0
      %727 = vmatprep.mubr.f32.mxu0 0.0
      %728 = vmatmul.mubr.f32.gmra.mxu0 %v626
      %v729 = vpop.f32.mrf.mxu0
      %v730 = vadd.f32 0.0, %v729
      %v731 = vpop.f32.mrf.mxu0
      %732 = vdwg.mxu0
      %v733 = vadd.f32 %v553, %v695
      %v734 = vadd.f32 %v558, %v700
      %v735 = vadd.f32 %v563, %v705
      %v736 = vadd.f32 %v568, %v710
      %v737 = vadd.f32 %v573, %v715
      %v738 = vadd.f32 %v578, %v720
      %v739 = vadd.f32 %v583, %v725
      %v740 = vadd.f32 %v588, %v730
      %v741 = vld [vmem:[%s299] sm:$0xff]
      %v742 = vld [vmem:[%s299 + $0x10] sm:$0xff]
      %v743 = vld [vmem:[%s299 + $0x20] sm:$0xff]
      %v744 = vld [vmem:[%s299 + $0x30] sm:$0xff]
      %v745 = vld [vmem:[%s299 + $0x40] sm:$0xff]
      %v746 = vld [vmem:[%s299 + $0x50] sm:$0xff]
      %v747 = vld [vmem:[%s299 + $0x60] sm:$0xff]
      %v748 = vld [vmem:[%s299 + $0x70] sm:$0xff]
      %s749 = scalar_lea.vmem %s1, 96
      %v750 = vld [vmem:[%s749] sm:$0xff]
      %v751 = vld [vmem:[%s749 + $0x8] sm:$0xff]
      %v752 = vld [vmem:[%s749 + $0x10] sm:$0xff]
      %v753 = vld [vmem:[%s749 + $0x18] sm:$0xff]
      %v755 = vsel %vm277, %v741, 0
      %v758 = vsel %vm277, %v742, 0
      %v761 = vsel %vm277, %v743, 0
      %v764 = vsel %vm277, %v744, 0
      %v767 = vsel %vm277, %v745, 0
      %v770 = vsel %vm277, %v746, 0
      %v773 = vsel %vm277, %v747, 0
      %v776 = vsel %vm277, %v748, 0
      %778 = vmatprep.subr.mxu0 0.0
      %779 = vmatpush1.msra.mxu0 0.0
      %780 = vmatprep.subr.mxu0 0.0
      %781 = vmatpush1.msra.mxu0 0.0
      %782 = vmatprep.subr.mxu0 0.0
      %783 = vmatpush1.msra.mxu0 0.0
      %784 = vmatprep.subr.mxu0 0.0
      %785 = vmatpush1.msra.mxu0 0.0
      %786 = vmatprep.subr.mxu0 0.0
      %787 = vmatpush1.msra.mxu0 0.0
      %788 = vmatprep.subr.mxu0 0.0
      %789 = vmatpush1.msra.mxu0 0.0
      %790 = vmatprep.subr.mxu0 0.0
      %791 = vmatpush1.msra.mxu0 0.0
      %792 = vmatprep.subr.mxu0 0.0
      %793 = vmatpush1.msra.mxu0 0.0
      %794 = vmatprep.subr.mxu0 0.0
      %795 = vmatpush1.msra.mxu0 0.0
      %796 = vmatprep.subr.mxu0 0.0
      %797 = vmatpush1.msra.mxu0 0.0
      %798 = vmatprep.subr.mxu0 0.0
      %799 = vmatpush1.msra.mxu0 0.0
      %800 = vmatprep.subr.mxu0 0.0
      %801 = vmatpush1.msra.mxu0 0.0
      %802 = vmatprep.subr.mxu0 0.0
      %803 = vmatpush1.msra.mxu0 %v753
      %804 = vmatprep.subr.mxu0 0.0
      %805 = vmatpush1.msra.mxu0 %v752
      %806 = vmatprep.subr.mxu0 0.0
      %807 = vmatpush1.msra.mxu0 %v751
      %808 = vmatprep.subr.mxu0 0.0
      %809 = vmatpush1.msra.mxu0 %v750
      %810 = vmatprep.subr.mxu0 0.0
      %811 = vmatpush2.msra.mxu0 0.0
      %812 = vmatprep.subr.mxu0 0.0
      %813 = vmatpush2.msra.mxu0 0.0
      %814 = vmatprep.subr.mxu0 0.0
      %815 = vmatpush2.msra.mxu0 0.0
      %816 = vmatprep.subr.mxu0 0.0
      %817 = vmatpush2.msra.mxu0 0.0
      %818 = vmatprep.subr.mxu0 0.0
      %819 = vmatpush2.msra.mxu0 0.0
      %820 = vmatprep.subr.mxu0 0.0
      %821 = vmatpush2.msra.mxu0 0.0
      %822 = vmatprep.subr.mxu0 0.0
      %823 = vmatpush2.msra.mxu0 0.0
      %824 = vmatprep.subr.mxu0 0.0
      %825 = vmatpush2.msra.mxu0 0.0
      %826 = vmatprep.subr.mxu0 0.0
      %827 = vmatpush2.msra.mxu0 0.0
      %828 = vmatprep.subr.mxu0 0.0
      %829 = vmatpush2.msra.mxu0 0.0
      %830 = vmatprep.subr.mxu0 0.0
      %831 = vmatpush2.msra.mxu0 0.0
      %832 = vmatprep.subr.mxu0 0.0
      %833 = vmatpush2.msra.mxu0 0.0
      %834 = vmatprep.subr.mxu0 0.0
      %835 = vmatpush2.msra.mxu0 0.0
      %836 = vmatprep.subr.mxu0 0.0
      %837 = vmatpush2.msra.mxu0 0.0
      %838 = vmatprep.subr.mxu0 0.0
      %839 = vmatpush2.msra.mxu0 0.0
      %840 = vmatprep.subr.mxu0 0.0
      %841 = vmatpush2.msra.mxu0 0.0
      %842 = vmatprep.mubr.f32.mxu0 0.0
      %843 = vmatmul.mubr.f32.gmra.mxu0 %v755
      %v844 = vpop.f32.mrf.mxu0
      %v845 = vadd.f32 0.0, %v844
      %v846 = vpop.f32.mrf.mxu0
      %847 = vmatprep.mubr.f32.mxu0 0.0
      %848 = vmatmul.mubr.f32.gmra.mxu0 %v758
      %v849 = vpop.f32.mrf.mxu0
      %v850 = vadd.f32 0.0, %v849
      %v851 = vpop.f32.mrf.mxu0
      %852 = vmatprep.mubr.f32.mxu0 0.0
      %853 = vmatmul.mubr.f32.gmra.mxu0 %v761
      %v854 = vpop.f32.mrf.mxu0
      %v855 = vadd.f32 0.0, %v854
      %v856 = vpop.f32.mrf.mxu0
      %857 = vmatprep.mubr.f32.mxu0 0.0
      %858 = vmatmul.mubr.f32.gmra.mxu0 %v764
      %v859 = vpop.f32.mrf.mxu0
      %v860 = vadd.f32 0.0, %v859
      %v861 = vpop.f32.mrf.mxu0
      %862 = vmatprep.mubr.f32.mxu0 0.0
      %863 = vmatmul.mubr.f32.gmra.mxu0 %v767
      %v864 = vpop.f32.mrf.mxu0
      %v865 = vadd.f32 0.0, %v864
      %v866 = vpop.f32.mrf.mxu0
      %867 = vmatprep.mubr.f32.mxu0 0.0
      %868 = vmatmul.mubr.f32.gmra.mxu0 %v770
      %v869 = vpop.f32.mrf.mxu0
      %v870 = vadd.f32 0.0, %v869
      %v871 = vpop.f32.mrf.mxu0
      %872 = vmatprep.mubr.f32.mxu0 0.0
      %873 = vmatmul.mubr.f32.gmra.mxu0 %v773
      %v874 = vpop.f32.mrf.mxu0
      %v875 = vadd.f32 0.0, %v874
      %v876 = vpop.f32.mrf.mxu0
      %877 = vmatprep.mubr.f32.mxu0 0.0
      %878 = vmatmul.mubr.f32.gmra.mxu0 %v776
      %v879 = vpop.f32.mrf.mxu0
      %v880 = vadd.f32 0.0, %v879
      %v881 = vpop.f32.mrf.mxu0
      %882 = vdwg.mxu0
      %v883 = vadd.f32 %v733, %v845
      %v884 = vadd.f32 %v734, %v850
      %v885 = vadd.f32 %v735, %v855
      %v886 = vadd.f32 %v736, %v860
      %v887 = vadd.f32 %v737, %v865
      %v888 = vadd.f32 %v738, %v870
      %v889 = vadd.f32 %v739, %v875
      %v890 = vadd.f32 %v740, %v880
      %v891 = vld [vmem:[%s299 + $0x1] sm:$0xff]
      %v892 = vld [vmem:[%s299 + $0x11] sm:$0xff]
      %v893 = vld [vmem:[%s299 + $0x21] sm:$0xff]
      %v894 = vld [vmem:[%s299 + $0x31] sm:$0xff]
      %v895 = vld [vmem:[%s299 + $0x41] sm:$0xff]
      %v896 = vld [vmem:[%s299 + $0x51] sm:$0xff]
      %v897 = vld [vmem:[%s299 + $0x61] sm:$0xff]
      %v898 = vld [vmem:[%s299 + $0x71] sm:$0xff]
      %s899 = scalar_lea.vmem %s1, 128
      %v900 = vld [vmem:[%s899] sm:$0xff]
      %v901 = vld [vmem:[%s899 + $0x8] sm:$0xff]
      %v902 = vld [vmem:[%s899 + $0x10] sm:$0xff]
      %v903 = vld [vmem:[%s899 + $0x18] sm:$0xff]
      %v905 = vsel %vm277, %v891, 0
      %v908 = vsel %vm277, %v892, 0
      %v911 = vsel %vm277, %v893, 0
      %v914 = vsel %vm277, %v894, 0
      %v917 = vsel %vm277, %v895, 0
      %v920 = vsel %vm277, %v896, 0
      %v923 = vsel %vm277, %v897, 0
      %v926 = vsel %vm277, %v898, 0
      %928 = vmatprep.subr.mxu0 0.0
      %929 = vmatpush1.msra.mxu0 0.0
      %930 = vmatprep.subr.mxu0 0.0
      %931 = vmatpush1.msra.mxu0 0.0
      %932 = vmatprep.subr.mxu0 0.0
      %933 = vmatpush1.msra.mxu0 0.0
      %934 = vmatprep.subr.mxu0 0.0
      %935 = vmatpush1.msra.mxu0 0.0
      %936 = vmatprep.subr.mxu0 0.0
      %937 = vmatpush1.msra.mxu0 0.0
      %938 = vmatprep.subr.mxu0 0.0
      %939 = vmatpush1.msra.mxu0 0.0
      %940 = vmatprep.subr.mxu0 0.0
      %941 = vmatpush1.msra.mxu0 0.0
      %942 = vmatprep.subr.mxu0 0.0
      %943 = vmatpush1.msra.mxu0 0.0
      %944 = vmatprep.subr.mxu0 0.0
      %945 = vmatpush1.msra.mxu0 0.0
      %946 = vmatprep.subr.mxu0 0.0
      %947 = vmatpush1.msra.mxu0 0.0
      %948 = vmatprep.subr.mxu0 0.0
      %949 = vmatpush1.msra.mxu0 0.0
      %950 = vmatprep.subr.mxu0 0.0
      %951 = vmatpush1.msra.mxu0 0.0
      %952 = vmatprep.subr.mxu0 0.0
      %953 = vmatpush1.msra.mxu0 %v903
      %954 = vmatprep.subr.mxu0 0.0
      %955 = vmatpush1.msra.mxu0 %v902
      %956 = vmatprep.subr.mxu0 0.0
      %957 = vmatpush1.msra.mxu0 %v901
      %958 = vmatprep.subr.mxu0 0.0
      %959 = vmatpush1.msra.mxu0 %v900
      %960 = vmatprep.subr.mxu0 0.0
      %961 = vmatpush2.msra.mxu0 0.0
      %962 = vmatprep.subr.mxu0 0.0
      %963 = vmatpush2.msra.mxu0 0.0
      %964 = vmatprep.subr.mxu0 0.0
      %965 = vmatpush2.msra.mxu0 0.0
      %966 = vmatprep.subr.mxu0 0.0
      %967 = vmatpush2.msra.mxu0 0.0
      %968 = vmatprep.subr.mxu0 0.0
      %969 = vmatpush2.msra.mxu0 0.0
      %970 = vmatprep.subr.mxu0 0.0
      %971 = vmatpush2.msra.mxu0 0.0
      %972 = vmatprep.subr.mxu0 0.0
      %973 = vmatpush2.msra.mxu0 0.0
      %974 = vmatprep.subr.mxu0 0.0
      %975 = vmatpush2.msra.mxu0 0.0
      %976 = vmatprep.subr.mxu0 0.0
      %977 = vmatpush2.msra.mxu0 0.0
      %978 = vmatprep.subr.mxu0 0.0
      %979 = vmatpush2.msra.mxu0 0.0
      %980 = vmatprep.subr.mxu0 0.0
      %981 = vmatpush2.msra.mxu0 0.0
      %982 = vmatprep.subr.mxu0 0.0
      %983 = vmatpush2.msra.mxu0 0.0
      %984 = vmatprep.subr.mxu0 0.0
      %985 = vmatpush2.msra.mxu0 0.0
      %986 = vmatprep.subr.mxu0 0.0
      %987 = vmatpush2.msra.mxu0 0.0
      %988 = vmatprep.subr.mxu0 0.0
      %989 = vmatpush2.msra.mxu0 0.0
      %990 = vmatprep.subr.mxu0 0.0
      %991 = vmatpush2.msra.mxu0 0.0
      %992 = vmatprep.mubr.f32.mxu0 0.0
      %993 = vmatmul.mubr.f32.gmra.mxu0 %v905
      %v994 = vpop.f32.mrf.mxu0
      %v995 = vadd.f32 0.0, %v994
      %v996 = vpop.f32.mrf.mxu0
      %997 = vmatprep.mubr.f32.mxu0 0.0
      %998 = vmatmul.mubr.f32.gmra.mxu0 %v908
      %v999 = vpop.f32.mrf.mxu0
      %v1000 = vadd.f32 0.0, %v999
      %v1001 = vpop.f32.mrf.mxu0
      %1002 = vmatprep.mubr.f32.mxu0 0.0
      %1003 = vmatmul.mubr.f32.gmra.mxu0 %v911
      %v1004 = vpop.f32.mrf.mxu0
      %v1005 = vadd.f32 0.0, %v1004
      %v1006 = vpop.f32.mrf.mxu0
      %1007 = vmatprep.mubr.f32.mxu0 0.0
      %1008 = vmatmul.mubr.f32.gmra.mxu0 %v914
      %v1009 = vpop.f32.mrf.mxu0
      %v1010 = vadd.f32 0.0, %v1009
      %v1011 = vpop.f32.mrf.mxu0
      %1012 = vmatprep.mubr.f32.mxu0 0.0
      %1013 = vmatmul.mubr.f32.gmra.mxu0 %v917
      %v1014 = vpop.f32.mrf.mxu0
      %v1015 = vadd.f32 0.0, %v1014
      %v1016 = vpop.f32.mrf.mxu0
      %1017 = vmatprep.mubr.f32.mxu0 0.0
      %1018 = vmatmul.mubr.f32.gmra.mxu0 %v920
      %v1019 = vpop.f32.mrf.mxu0
      %v1020 = vadd.f32 0.0, %v1019
      %v1021 = vpop.f32.mrf.mxu0
      %1022 = vmatprep.mubr.f32.mxu0 0.0
      %1023 = vmatmul.mubr.f32.gmra.mxu0 %v923
      %v1024 = vpop.f32.mrf.mxu0
      %v1025 = vadd.f32 0.0, %v1024
      %v1026 = vpop.f32.mrf.mxu0
      %1027 = vmatprep.mubr.f32.mxu0 0.0
      %1028 = vmatmul.mubr.f32.gmra.mxu0 %v926
      %v1029 = vpop.f32.mrf.mxu0
      %v1030 = vadd.f32 0.0, %v1029
      %v1031 = vpop.f32.mrf.mxu0
      %1032 = vdwg.mxu0
      %v1033 = vadd.f32 %v883, %v995
      %v1034 = vadd.f32 %v884, %v1000
      %v1035 = vadd.f32 %v885, %v1005
      %v1036 = vadd.f32 %v886, %v1010
      %v1037 = vadd.f32 %v887, %v1015
      %v1038 = vadd.f32 %v888, %v1020
      %v1039 = vadd.f32 %v889, %v1025
      %v1040 = vadd.f32 %v890, %v1030
      %v1041 = vld [vmem:[%s299 + $0x2] sm:$0xff]
      %v1042 = vld [vmem:[%s299 + $0x12] sm:$0xff]
      %v1043 = vld [vmem:[%s299 + $0x22] sm:$0xff]
      %v1044 = vld [vmem:[%s299 + $0x32] sm:$0xff]
      %v1045 = vld [vmem:[%s299 + $0x42] sm:$0xff]
      %v1046 = vld [vmem:[%s299 + $0x52] sm:$0xff]
      %v1047 = vld [vmem:[%s299 + $0x62] sm:$0xff]
      %v1048 = vld [vmem:[%s299 + $0x72] sm:$0xff]
      %s1049 = scalar_lea.vmem %s1, 160
      %v1050 = vld [vmem:[%s1049] sm:$0xff]
      %v1051 = vld [vmem:[%s1049 + $0x8] sm:$0xff]
      %v1052 = vld [vmem:[%s1049 + $0x10] sm:$0xff]
      %v1053 = vld [vmem:[%s1049 + $0x18] sm:$0xff]
      %v1055 = vsel %vm277, %v1041, 0
      %v1058 = vsel %vm277, %v1042, 0
      %v1061 = vsel %vm277, %v1043, 0
      %v1064 = vsel %vm277, %v1044, 0
      %v1067 = vsel %vm277, %v1045, 0
      %v1070 = vsel %vm277, %v1046, 0
      %v1073 = vsel %vm277, %v1047, 0
      %v1076 = vsel %vm277, %v1048, 0
      %1078 = vmatprep.subr.mxu0 0.0
      %1079 = vmatpush1.msra.mxu0 0.0
      %1080 = vmatprep.subr.mxu0 0.0
      %1081 = vmatpush1.msra.mxu0 0.0
      %1082 = vmatprep.subr.mxu0 0.0
      %1083 = vmatpush1.msra.mxu0 0.0
      %1084 = vmatprep.subr.mxu0 0.0
      %1085 = vmatpush1.msra.mxu0 0.0
      %1086 = vmatprep.subr.mxu0 0.0
      %1087 = vmatpush1.msra.mxu0 0.0
      %1088 = vmatprep.subr.mxu0 0.0
      %1089 = vmatpush1.msra.mxu0 0.0
      %1090 = vmatprep.subr.mxu0 0.0
      %1091 = vmatpush1.msra.mxu0 0.0
      %1092 = vmatprep.subr.mxu0 0.0
      %1093 = vmatpush1.msra.mxu0 0.0
      %1094 = vmatprep.subr.mxu0 0.0
      %1095 = vmatpush1.msra.mxu0 0.0
      %1096 = vmatprep.subr.mxu0 0.0
      %1097 = vmatpush1.msra.mxu0 0.0
      %1098 = vmatprep.subr.mxu0 0.0
      %1099 = vmatpush1.msra.mxu0 0.0
      %1100 = vmatprep.subr.mxu0 0.0
      %1101 = vmatpush1.msra.mxu0 0.0
      %1102 = vmatprep.subr.mxu0 0.0
      %1103 = vmatpush1.msra.mxu0 %v1053
      %1104 = vmatprep.subr.mxu0 0.0
      %1105 = vmatpush1.msra.mxu0 %v1052
      %1106 = vmatprep.subr.mxu0 0.0
      %1107 = vmatpush1.msra.mxu0 %v1051
      %1108 = vmatprep.subr.mxu0 0.0
      %1109 = vmatpush1.msra.mxu0 %v1050
      %1110 = vmatprep.subr.mxu0 0.0
      %1111 = vmatpush2.msra.mxu0 0.0
      %1112 = vmatprep.subr.mxu0 0.0
      %1113 = vmatpush2.msra.mxu0 0.0
      %1114 = vmatprep.subr.mxu0 0.0
      %1115 = vmatpush2.msra.mxu0 0.0
      %1116 = vmatprep.subr.mxu0 0.0
      %1117 = vmatpush2.msra.mxu0 0.0
      %1118 = vmatprep.subr.mxu0 0.0
      %1119 = vmatpush2.msra.mxu0 0.0
      %1120 = vmatprep.subr.mxu0 0.0
      %1121 = vmatpush2.msra.mxu0 0.0
      %1122 = vmatprep.subr.mxu0 0.0
      %1123 = vmatpush2.msra.mxu0 0.0
      %1124 = vmatprep.subr.mxu0 0.0
      %1125 = vmatpush2.msra.mxu0 0.0
      %1126 = vmatprep.subr.mxu0 0.0
      %1127 = vmatpush2.msra.mxu0 0.0
      %1128 = vmatprep.subr.mxu0 0.0
      %1129 = vmatpush2.msra.mxu0 0.0
      %1130 = vmatprep.subr.mxu0 0.0
      %1131 = vmatpush2.msra.mxu0 0.0
      %1132 = vmatprep.subr.mxu0 0.0
      %1133 = vmatpush2.msra.mxu0 0.0
      %1134 = vmatprep.subr.mxu0 0.0
      %1135 = vmatpush2.msra.mxu0 0.0
      %1136 = vmatprep.subr.mxu0 0.0
      %1137 = vmatpush2.msra.mxu0 0.0
      %1138 = vmatprep.subr.mxu0 0.0
      %1139 = vmatpush2.msra.mxu0 0.0
      %1140 = vmatprep.subr.mxu0 0.0
      %1141 = vmatpush2.msra.mxu0 0.0
      %1142 = vmatprep.mubr.f32.mxu0 0.0
      %1143 = vmatmul.mubr.f32.gmra.mxu0 %v1055
      %v1144 = vpop.f32.mrf.mxu0
      %v1145 = vadd.f32 0.0, %v1144
      %v1146 = vpop.f32.mrf.mxu0
      %1147 = vmatprep.mubr.f32.mxu0 0.0
      %1148 = vmatmul.mubr.f32.gmra.mxu0 %v1058
      %v1149 = vpop.f32.mrf.mxu0
      %v1150 = vadd.f32 0.0, %v1149
      %v1151 = vpop.f32.mrf.mxu0
      %1152 = vmatprep.mubr.f32.mxu0 0.0
      %1153 = vmatmul.mubr.f32.gmra.mxu0 %v1061
      %v1154 = vpop.f32.mrf.mxu0
      %v1155 = vadd.f32 0.0, %v1154
      %v1156 = vpop.f32.mrf.mxu0
      %1157 = vmatprep.mubr.f32.mxu0 0.0
      %1158 = vmatmul.mubr.f32.gmra.mxu0 %v1064
      %v1159 = vpop.f32.mrf.mxu0
      %v1160 = vadd.f32 0.0, %v1159
      %v1161 = vpop.f32.mrf.mxu0
      %1162 = vmatprep.mubr.f32.mxu0 0.0
      %1163 = vmatmul.mubr.f32.gmra.mxu0 %v1067
      %v1164 = vpop.f32.mrf.mxu0
      %v1165 = vadd.f32 0.0, %v1164
      %v1166 = vpop.f32.mrf.mxu0
      %1167 = vmatprep.mubr.f32.mxu0 0.0
      %1168 = vmatmul.mubr.f32.gmra.mxu0 %v1070
      %v1169 = vpop.f32.mrf.mxu0
      %v1170 = vadd.f32 0.0, %v1169
      %v1171 = vpop.f32.mrf.mxu0
      %1172 = vmatprep.mubr.f32.mxu0 0.0
      %1173 = vmatmul.mubr.f32.gmra.mxu0 %v1073
      %v1174 = vpop.f32.mrf.mxu0
      %v1175 = vadd.f32 0.0, %v1174
      %v1176 = vpop.f32.mrf.mxu0
      %1177 = vmatprep.mubr.f32.mxu0 0.0
      %1178 = vmatmul.mubr.f32.gmra.mxu0 %v1076
      %v1179 = vpop.f32.mrf.mxu0
      %v1180 = vadd.f32 0.0, %v1179
      %v1181 = vpop.f32.mrf.mxu0
      %1182 = vdwg.mxu0
      %v1183 = vadd.f32 %v1033, %v1145
      %v1184 = vadd.f32 %v1034, %v1150
      %v1185 = vadd.f32 %v1035, %v1155
      %v1186 = vadd.f32 %v1036, %v1160
      %v1187 = vadd.f32 %v1037, %v1165
      %v1188 = vadd.f32 %v1038, %v1170
      %v1189 = vadd.f32 %v1039, %v1175
      %v1190 = vadd.f32 %v1040, %v1180
      %s1191 = scalar_lea.vmem [#allocation2], 32
      %v1192 = vld [vmem:[%s1191] sm:$0xff]
      %v1193 = vld [vmem:[%s1191 + $0x10] sm:$0xff]
      %v1194 = vld [vmem:[%s1191 + $0x20] sm:$0xff]
      %v1195 = vld [vmem:[%s1191 + $0x30] sm:$0xff]
      %v1196 = vld [vmem:[%s1191 + $0x40] sm:$0xff]
      %v1197 = vld [vmem:[%s1191 + $0x50] sm:$0xff]
      %v1198 = vld [vmem:[%s1191 + $0x60] sm:$0xff]
      %v1199 = vld [vmem:[%s1191 + $0x70] sm:$0xff]
      %s1200 = scalar_lea.vmem %s1, 192
      %v1201 = vld [vmem:[%s1200] sm:$0xff]
      %v1202 = vld [vmem:[%s1200 + $0x8] sm:$0xff]
      %v1203 = vld [vmem:[%s1200 + $0x10] sm:$0xff]
      %v1204 = vld [vmem:[%s1200 + $0x18] sm:$0xff]
      %v1206 = vsel %vm277, %v1192, 0
      %v1209 = vsel %vm277, %v1193, 0
      %v1212 = vsel %vm277, %v1194, 0
      %v1215 = vsel %vm277, %v1195, 0
      %v1218 = vsel %vm277, %v1196, 0
      %v1221 = vsel %vm277, %v1197, 0
      %v1224 = vsel %vm277, %v1198, 0
      %v1227 = vsel %vm277, %v1199, 0
      %1229 = vmatprep.subr.mxu0 0.0
      %1230 = vmatpush1.msra.mxu0 0.0
      %1231 = vmatprep.subr.mxu0 0.0
      %1232 = vmatpush1.msra.mxu0 0.0
      %1233 = vmatprep.subr.mxu0 0.0
      %1234 = vmatpush1.msra.mxu0 0.0
      %1235 = vmatprep.subr.mxu0 0.0
      %1236 = vmatpush1.msra.mxu0 0.0
      %1237 = vmatprep.subr.mxu0 0.0
      %1238 = vmatpush1.msra.mxu0 0.0
      %1239 = vmatprep.subr.mxu0 0.0
      %1240 = vmatpush1.msra.mxu0 0.0
      %1241 = vmatprep.subr.mxu0 0.0
      %1242 = vmatpush1.msra.mxu0 0.0
      %1243 = vmatprep.subr.mxu0 0.0
      %1244 = vmatpush1.msra.mxu0 0.0
      %1245 = vmatprep.subr.mxu0 0.0
      %1246 = vmatpush1.msra.mxu0 0.0
      %1247 = vmatprep.subr.mxu0 0.0
      %1248 = vmatpush1.msra.mxu0 0.0
      %1249 = vmatprep.subr.mxu0 0.0
      %1250 = vmatpush1.msra.mxu0 0.0
      %1251 = vmatprep.subr.mxu0 0.0
      %1252 = vmatpush1.msra.mxu0 0.0
      %1253 = vmatprep.subr.mxu0 0.0
      %1254 = vmatpush1.msra.mxu0 %v1204
      %1255 = vmatprep.subr.mxu0 0.0
      %1256 = vmatpush1.msra.mxu0 %v1203
      %1257 = vmatprep.subr.mxu0 0.0
      %1258 = vmatpush1.msra.mxu0 %v1202
      %1259 = vmatprep.subr.mxu0 0.0
      %1260 = vmatpush1.msra.mxu0 %v1201
      %1261 = vmatprep.subr.mxu0 0.0
      %1262 = vmatpush2.msra.mxu0 0.0
      %1263 = vmatprep.subr.mxu0 0.0
      %1264 = vmatpush2.msra.mxu0 0.0
      %1265 = vmatprep.subr.mxu0 0.0
      %1266 = vmatpush2.msra.mxu0 0.0
      %1267 = vmatprep.subr.mxu0 0.0
      %1268 = vmatpush2.msra.mxu0 0.0
      %1269 = vmatprep.subr.mxu0 0.0
      %1270 = vmatpush2.msra.mxu0 0.0
      %1271 = vmatprep.subr.mxu0 0.0
      %1272 = vmatpush2.msra.mxu0 0.0
      %1273 = vmatprep.subr.mxu0 0.0
      %1274 = vmatpush2.msra.mxu0 0.0
      %1275 = vmatprep.subr.mxu0 0.0
      %1276 = vmatpush2.msra.mxu0 0.0
      %1277 = vmatprep.subr.mxu0 0.0
      %1278 = vmatpush2.msra.mxu0 0.0
      %1279 = vmatprep.subr.mxu0 0.0
      %1280 = vmatpush2.msra.mxu0 0.0
      %1281 = vmatprep.subr.mxu0 0.0
      %1282 = vmatpush2.msra.mxu0 0.0
      %1283 = vmatprep.subr.mxu0 0.0
      %1284 = vmatpush2.msra.mxu0 0.0
      %1285 = vmatprep.subr.mxu0 0.0
      %1286 = vmatpush2.msra.mxu0 0.0
      %1287 = vmatprep.subr.mxu0 0.0
      %1288 = vmatpush2.msra.mxu0 0.0
      %1289 = vmatprep.subr.mxu0 0.0
      %1290 = vmatpush2.msra.mxu0 0.0
      %1291 = vmatprep.subr.mxu0 0.0
      %1292 = vmatpush2.msra.mxu0 0.0
      %1293 = vmatprep.mubr.f32.mxu0 0.0
      %1294 = vmatmul.mubr.f32.gmra.mxu0 %v1206
      %v1295 = vpop.f32.mrf.mxu0
      %v1296 = vadd.f32 0.0, %v1295
      %v1297 = vpop.f32.mrf.mxu0
      %1298 = vmatprep.mubr.f32.mxu0 0.0
      %1299 = vmatmul.mubr.f32.gmra.mxu0 %v1209
      %v1300 = vpop.f32.mrf.mxu0
      %v1301 = vadd.f32 0.0, %v1300
      %v1302 = vpop.f32.mrf.mxu0
      %1303 = vmatprep.mubr.f32.mxu0 0.0
      %1304 = vmatmul.mubr.f32.gmra.mxu0 %v1212
      %v1305 = vpop.f32.mrf.mxu0
      %v1306 = vadd.f32 0.0, %v1305
      %v1307 = vpop.f32.mrf.mxu0
      %1308 = vmatprep.mubr.f32.mxu0 0.0
      %1309 = vmatmul.mubr.f32.gmra.mxu0 %v1215
      %v1310 = vpop.f32.mrf.mxu0
      %v1311 = vadd.f32 0.0, %v1310
      %v1312 = vpop.f32.mrf.mxu0
      %1313 = vmatprep.mubr.f32.mxu0 0.0
      %1314 = vmatmul.mubr.f32.gmra.mxu0 %v1218
      %v1315 = vpop.f32.mrf.mxu0
      %v1316 = vadd.f32 0.0, %v1315
      %v1317 = vpop.f32.mrf.mxu0
      %1318 = vmatprep.mubr.f32.mxu0 0.0
      %1319 = vmatmul.mubr.f32.gmra.mxu0 %v1221
      %v1320 = vpop.f32.mrf.mxu0
      %v1321 = vadd.f32 0.0, %v1320
      %v1322 = vpop.f32.mrf.mxu0
      %1323 = vmatprep.mubr.f32.mxu0 0.0
      %1324 = vmatmul.mubr.f32.gmra.mxu0 %v1224
      %v1325 = vpop.f32.mrf.mxu0
      %v1326 = vadd.f32 0.0, %v1325
      %v1327 = vpop.f32.mrf.mxu0
      %1328 = vmatprep.mubr.f32.mxu0 0.0
      %1329 = vmatmul.mubr.f32.gmra.mxu0 %v1227
      %v1330 = vpop.f32.mrf.mxu0
      %v1331 = vadd.f32 0.0, %v1330
      %v1332 = vpop.f32.mrf.mxu0
      %1333 = vdwg.mxu0
      %v1334 = vadd.f32 %v1183, %v1296
      %v1335 = vadd.f32 %v1184, %v1301
      %v1336 = vadd.f32 %v1185, %v1306
      %v1337 = vadd.f32 %v1186, %v1311
      %v1338 = vadd.f32 %v1187, %v1316
      %v1339 = vadd.f32 %v1188, %v1321
      %v1340 = vadd.f32 %v1189, %v1326
      %v1341 = vadd.f32 %v1190, %v1331
      %v1342 = vld [vmem:[%s1191 + $0x1] sm:$0xff]
      %v1343 = vld [vmem:[%s1191 + $0x11] sm:$0xff]
      %v1344 = vld [vmem:[%s1191 + $0x21] sm:$0xff]
      %v1345 = vld [vmem:[%s1191 + $0x31] sm:$0xff]
      %v1346 = vld [vmem:[%s1191 + $0x41] sm:$0xff]
      %v1347 = vld [vmem:[%s1191 + $0x51] sm:$0xff]
      %v1348 = vld [vmem:[%s1191 + $0x61] sm:$0xff]
      %v1349 = vld [vmem:[%s1191 + $0x71] sm:$0xff]
      %s1350 = scalar_lea.vmem %s1, 224
      %v1351 = vld [vmem:[%s1350] sm:$0xff]
      %v1352 = vld [vmem:[%s1350 + $0x8] sm:$0xff]
      %v1353 = vld [vmem:[%s1350 + $0x10] sm:$0xff]
      %v1354 = vld [vmem:[%s1350 + $0x18] sm:$0xff]
      %v1356 = vsel %vm277, %v1342, 0
      %v1359 = vsel %vm277, %v1343, 0
      %v1362 = vsel %vm277, %v1344, 0
      %v1365 = vsel %vm277, %v1345, 0
      %v1368 = vsel %vm277, %v1346, 0
      %v1371 = vsel %vm277, %v1347, 0
      %v1374 = vsel %vm277, %v1348, 0
      %v1377 = vsel %vm277, %v1349, 0
      %1379 = vmatprep.subr.mxu0 0.0
      %1380 = vmatpush1.msra.mxu0 0.0
      %1381 = vmatprep.subr.mxu0 0.0
      %1382 = vmatpush1.msra.mxu0 0.0
      %1383 = vmatprep.subr.mxu0 0.0
      %1384 = vmatpush1.msra.mxu0 0.0
      %1385 = vmatprep.subr.mxu0 0.0
      %1386 = vmatpush1.msra.mxu0 0.0
      %1387 = vmatprep.subr.mxu0 0.0
      %1388 = vmatpush1.msra.mxu0 0.0
      %1389 = vmatprep.subr.mxu0 0.0
      %1390 = vmatpush1.msra.mxu0 0.0
      %1391 = vmatprep.subr.mxu0 0.0
      %1392 = vmatpush1.msra.mxu0 0.0
      %1393 = vmatprep.subr.mxu0 0.0
      %1394 = vmatpush1.msra.mxu0 0.0
      %1395 = vmatprep.subr.mxu0 0.0
      %1396 = vmatpush1.msra.mxu0 0.0
      %1397 = vmatprep.subr.mxu0 0.0
      %1398 = vmatpush1.msra.mxu0 0.0
      %1399 = vmatprep.subr.mxu0 0.0
      %1400 = vmatpush1.msra.mxu0 0.0
      %1401 = vmatprep.subr.mxu0 0.0
      %1402 = vmatpush1.msra.mxu0 0.0
      %1403 = vmatprep.subr.mxu0 0.0
      %1404 = vmatpush1.msra.mxu0 %v1354
      %1405 = vmatprep.subr.mxu0 0.0
      %1406 = vmatpush1.msra.mxu0 %v1353
      %1407 = vmatprep.subr.mxu0 0.0
      %1408 = vmatpush1.msra.mxu0 %v1352
      %1409 = vmatprep.subr.mxu0 0.0
      %1410 = vmatpush1.msra.mxu0 %v1351
      %1411 = vmatprep.subr.mxu0 0.0
      %1412 = vmatpush2.msra.mxu0 0.0
      %1413 = vmatprep.subr.mxu0 0.0
      %1414 = vmatpush2.msra.mxu0 0.0
      %1415 = vmatprep.subr.mxu0 0.0
      %1416 = vmatpush2.msra.mxu0 0.0
      %1417 = vmatprep.subr.mxu0 0.0
      %1418 = vmatpush2.msra.mxu0 0.0
      %1419 = vmatprep.subr.mxu0 0.0
      %1420 = vmatpush2.msra.mxu0 0.0
      %1421 = vmatprep.subr.mxu0 0.0
      %1422 = vmatpush2.msra.mxu0 0.0
      %1423 = vmatprep.subr.mxu0 0.0
      %1424 = vmatpush2.msra.mxu0 0.0
      %1425 = vmatprep.subr.mxu0 0.0
      %1426 = vmatpush2.msra.mxu0 0.0
      %1427 = vmatprep.subr.mxu0 0.0
      %1428 = vmatpush2.msra.mxu0 0.0
      %1429 = vmatprep.subr.mxu0 0.0
      %1430 = vmatpush2.msra.mxu0 0.0
      %1431 = vmatprep.subr.mxu0 0.0
      %1432 = vmatpush2.msra.mxu0 0.0
      %1433 = vmatprep.subr.mxu0 0.0
      %1434 = vmatpush2.msra.mxu0 0.0
      %1435 = vmatprep.subr.mxu0 0.0
      %1436 = vmatpush2.msra.mxu0 0.0
      %1437 = vmatprep.subr.mxu0 0.0
      %1438 = vmatpush2.msra.mxu0 0.0
      %1439 = vmatprep.subr.mxu0 0.0
      %1440 = vmatpush2.msra.mxu0 0.0
      %1441 = vmatprep.subr.mxu0 0.0
      %1442 = vmatpush2.msra.mxu0 0.0
      %1443 = vmatprep.mubr.f32.mxu0 0.0
      %1444 = vmatmul.mubr.f32.gmra.mxu0 %v1356
      %v1445 = vpop.f32.mrf.mxu0
      %v1446 = vadd.f32 0.0, %v1445
      %v1447 = vpop.f32.mrf.mxu0
      %1448 = vmatprep.mubr.f32.mxu0 0.0
      %1449 = vmatmul.mubr.f32.gmra.mxu0 %v1359
      %v1450 = vpop.f32.mrf.mxu0
      %v1451 = vadd.f32 0.0, %v1450
      %v1452 = vpop.f32.mrf.mxu0
      %1453 = vmatprep.mubr.f32.mxu0 0.0
      %1454 = vmatmul.mubr.f32.gmra.mxu0 %v1362
      %v1455 = vpop.f32.mrf.mxu0
      %v1456 = vadd.f32 0.0, %v1455
      %v1457 = vpop.f32.mrf.mxu0
      %1458 = vmatprep.mubr.f32.mxu0 0.0
      %1459 = vmatmul.mubr.f32.gmra.mxu0 %v1365
      %v1460 = vpop.f32.mrf.mxu0
      %v1461 = vadd.f32 0.0, %v1460
      %v1462 = vpop.f32.mrf.mxu0
      %1463 = vmatprep.mubr.f32.mxu0 0.0
      %1464 = vmatmul.mubr.f32.gmra.mxu0 %v1368
      %v1465 = vpop.f32.mrf.mxu0
      %v1466 = vadd.f32 0.0, %v1465
      %v1467 = vpop.f32.mrf.mxu0
      %1468 = vmatprep.mubr.f32.mxu0 0.0
      %1469 = vmatmul.mubr.f32.gmra.mxu0 %v1371
      %v1470 = vpop.f32.mrf.mxu0
      %v1471 = vadd.f32 0.0, %v1470
      %v1472 = vpop.f32.mrf.mxu0
      %1473 = vmatprep.mubr.f32.mxu0 0.0
      %1474 = vmatmul.mubr.f32.gmra.mxu0 %v1374
      %v1475 = vpop.f32.mrf.mxu0
      %v1476 = vadd.f32 0.0, %v1475
      %v1477 = vpop.f32.mrf.mxu0
      %1478 = vmatprep.mubr.f32.mxu0 0.0
      %1479 = vmatmul.mubr.f32.gmra.mxu0 %v1377
      %v1480 = vpop.f32.mrf.mxu0
      %v1481 = vadd.f32 0.0, %v1480
      %v1482 = vpop.f32.mrf.mxu0
      %1483 = vdwg.mxu0
      %v1484 = vadd.f32 %v1334, %v1446
      %v1485 = vadd.f32 %v1335, %v1451
      %v1486 = vadd.f32 %v1336, %v1456
      %v1487 = vadd.f32 %v1337, %v1461
      %v1488 = vadd.f32 %v1338, %v1466
      %v1489 = vadd.f32 %v1339, %v1471
      %v1490 = vadd.f32 %v1340, %v1476
      %v1491 = vadd.f32 %v1341, %v1481
      %v1492 = vld [vmem:[%s1191 + $0x2] sm:$0xff]
      %v1493 = vld [vmem:[%s1191 + $0x12] sm:$0xff]
      %v1494 = vld [vmem:[%s1191 + $0x22] sm:$0xff]
      %v1495 = vld [vmem:[%s1191 + $0x32] sm:$0xff]
      %v1496 = vld [vmem:[%s1191 + $0x42] sm:$0xff]
      %v1497 = vld [vmem:[%s1191 + $0x52] sm:$0xff]
      %v1498 = vld [vmem:[%s1191 + $0x62] sm:$0xff]
      %v1499 = vld [vmem:[%s1191 + $0x72] sm:$0xff]
      %s1500 = scalar_lea.vmem %s1, 256
      %v1501 = vld [vmem:[%s1500] sm:$0xff]
      %v1502 = vld [vmem:[%s1500 + $0x8] sm:$0xff]
      %v1503 = vld [vmem:[%s1500 + $0x10] sm:$0xff]
      %v1504 = vld [vmem:[%s1500 + $0x18] sm:$0xff]
      %v1506 = vsel %vm277, %v1492, 0
      %v1509 = vsel %vm277, %v1493, 0
      %v1512 = vsel %vm277, %v1494, 0
      %v1515 = vsel %vm277, %v1495, 0
      %v1518 = vsel %vm277, %v1496, 0
      %v1521 = vsel %vm277, %v1497, 0
      %v1524 = vsel %vm277, %v1498, 0
      %v1527 = vsel %vm277, %v1499, 0
      %1529 = vmatprep.subr.mxu0 0.0
      %1530 = vmatpush1.msra.mxu0 0.0
      %1531 = vmatprep.subr.mxu0 0.0
      %1532 = vmatpush1.msra.mxu0 0.0
      %1533 = vmatprep.subr.mxu0 0.0
      %1534 = vmatpush1.msra.mxu0 0.0
      %1535 = vmatprep.subr.mxu0 0.0
      %1536 = vmatpush1.msra.mxu0 0.0
      %1537 = vmatprep.subr.mxu0 0.0
      %1538 = vmatpush1.msra.mxu0 0.0
      %1539 = vmatprep.subr.mxu0 0.0
      %1540 = vmatpush1.msra.mxu0 0.0
      %1541 = vmatprep.subr.mxu0 0.0
      %1542 = vmatpush1.msra.mxu0 0.0
      %1543 = vmatprep.subr.mxu0 0.0
      %1544 = vmatpush1.msra.mxu0 0.0
      %1545 = vmatprep.subr.mxu0 0.0
      %1546 = vmatpush1.msra.mxu0 0.0
      %1547 = vmatprep.subr.mxu0 0.0
      %1548 = vmatpush1.msra.mxu0 0.0
      %1549 = vmatprep.subr.mxu0 0.0
      %1550 = vmatpush1.msra.mxu0 0.0
      %1551 = vmatprep.subr.mxu0 0.0
      %1552 = vmatpush1.msra.mxu0 0.0
      %1553 = vmatprep.subr.mxu0 0.0
      %1554 = vmatpush1.msra.mxu0 %v1504
      %1555 = vmatprep.subr.mxu0 0.0
      %1556 = vmatpush1.msra.mxu0 %v1503
      %1557 = vmatprep.subr.mxu0 0.0
      %1558 = vmatpush1.msra.mxu0 %v1502
      %1559 = vmatprep.subr.mxu0 0.0
      %1560 = vmatpush1.msra.mxu0 %v1501
      %1561 = vmatprep.subr.mxu0 0.0
      %1562 = vmatpush2.msra.mxu0 0.0
      %1563 = vmatprep.subr.mxu0 0.0
      %1564 = vmatpush2.msra.mxu0 0.0
      %1565 = vmatprep.subr.mxu0 0.0
      %1566 = vmatpush2.msra.mxu0 0.0
      %1567 = vmatprep.subr.mxu0 0.0
      %1568 = vmatpush2.msra.mxu0 0.0
      %1569 = vmatprep.subr.mxu0 0.0
      %1570 = vmatpush2.msra.mxu0 0.0
      %1571 = vmatprep.subr.mxu0 0.0
      %1572 = vmatpush2.msra.mxu0 0.0
      %1573 = vmatprep.subr.mxu0 0.0
      %1574 = vmatpush2.msra.mxu0 0.0
      %1575 = vmatprep.subr.mxu0 0.0
      %1576 = vmatpush2.msra.mxu0 0.0
      %1577 = vmatprep.subr.mxu0 0.0
      %1578 = vmatpush2.msra.mxu0 0.0
      %1579 = vmatprep.subr.mxu0 0.0
      %1580 = vmatpush2.msra.mxu0 0.0
      %1581 = vmatprep.subr.mxu0 0.0
      %1582 = vmatpush2.msra.mxu0 0.0
      %1583 = vmatprep.subr.mxu0 0.0
      %1584 = vmatpush2.msra.mxu0 0.0
      %1585 = vmatprep.subr.mxu0 0.0
      %1586 = vmatpush2.msra.mxu0 0.0
      %1587 = vmatprep.subr.mxu0 0.0
      %1588 = vmatpush2.msra.mxu0 0.0
      %1589 = vmatprep.subr.mxu0 0.0
      %1590 = vmatpush2.msra.mxu0 0.0
      %1591 = vmatprep.subr.mxu0 0.0
      %1592 = vmatpush2.msra.mxu0 0.0
      %1593 = vmatprep.mubr.f32.mxu0 0.0
      %1594 = vmatmul.mubr.f32.gmra.mxu0 %v1506
      %v1595 = vpop.f32.mrf.mxu0
      %v1596 = vadd.f32 0.0, %v1595
      %v1597 = vpop.f32.mrf.mxu0
      %1598 = vmatprep.mubr.f32.mxu0 0.0
      %1599 = vmatmul.mubr.f32.gmra.mxu0 %v1509
      %v1600 = vpop.f32.mrf.mxu0
      %v1601 = vadd.f32 0.0, %v1600
      %v1602 = vpop.f32.mrf.mxu0
      %1603 = vmatprep.mubr.f32.mxu0 0.0
      %1604 = vmatmul.mubr.f32.gmra.mxu0 %v1512
      %v1605 = vpop.f32.mrf.mxu0
      %v1606 = vadd.f32 0.0, %v1605
      %v1607 = vpop.f32.mrf.mxu0
      %1608 = vmatprep.mubr.f32.mxu0 0.0
      %1609 = vmatmul.mubr.f32.gmra.mxu0 %v1515
      %v1610 = vpop.f32.mrf.mxu0
      %v1611 = vadd.f32 0.0, %v1610
      %v1612 = vpop.f32.mrf.mxu0
      %1613 = vmatprep.mubr.f32.mxu0 0.0
      %1614 = vmatmul.mubr.f32.gmra.mxu0 %v1518
      %v1615 = vpop.f32.mrf.mxu0
      %v1616 = vadd.f32 0.0, %v1615
      %v1617 = vpop.f32.mrf.mxu0
      %1618 = vmatprep.mubr.f32.mxu0 0.0
      %1619 = vmatmul.mubr.f32.gmra.mxu0 %v1521
      %v1620 = vpop.f32.mrf.mxu0
      %v1621 = vadd.f32 0.0, %v1620
      %v1622 = vpop.f32.mrf.mxu0
      %1623 = vmatprep.mubr.f32.mxu0 0.0
      %1624 = vmatmul.mubr.f32.gmra.mxu0 %v1524
      %v1625 = vpop.f32.mrf.mxu0
      %v1626 = vadd.f32 0.0, %v1625
      %v1627 = vpop.f32.mrf.mxu0
      %1628 = vmatprep.mubr.f32.mxu0 0.0
      %1629 = vmatmul.mubr.f32.gmra.mxu0 %v1527
      %v1630 = vpop.f32.mrf.mxu0
      %v1631 = vadd.f32 0.0, %v1630
      %v1632 = vpop.f32.mrf.mxu0
      %1633 = vdwg.mxu0
      %v1634 = vadd.f32 %v1484, %v1596
      %v1635 = vadd.f32 %v1485, %v1601
      %v1636 = vadd.f32 %v1486, %v1606
      %v1637 = vadd.f32 %v1487, %v1611
      %v1638 = vadd.f32 %v1488, %v1616
      %v1639 = vadd.f32 %v1489, %v1621
      %v1640 = vadd.f32 %v1490, %v1626
      %v1641 = vadd.f32 %v1491, %v1631
      %1642 = vst.msk [vmem:[%s262] sm:$0xff] %vm277, %v1634
      %1643 = vst.msk [vmem:[%s262 + $0x8] sm:$0xff] %vm277, %v1635
      %1644 = vst.msk [vmem:[%s262 + $0x10] sm:$0xff] %vm277, %v1636
      %1645 = vst.msk [vmem:[%s262 + $0x18] sm:$0xff] %vm277, %v1637
      %1646 = vst.msk [vmem:[%s262 + $0x20] sm:$0xff] %vm277, %v1638
      %1647 = vst.msk [vmem:[%s262 + $0x28] sm:$0xff] %vm277, %v1639
      %1648 = vst.msk [vmem:[%s262 + $0x30] sm:$0xff] %vm277, %v1640
      %1649 = vst.msk [vmem:[%s262 + $0x38] sm:$0xff] %vm277, %v1641
      %v1650 = vsel %vm277, %v1634, 0.0
      %v1651 = vsel %vm277, %v1635, 0.0
      %v1652 = vadd.f32 %v1650, %v1651
      %v1653 = vsel %vm277, %v1636, 0.0
      %v1654 = vadd.f32 %v1652, %v1653
      %v1655 = vsel %vm277, %v1637, 0.0
      %v1656 = vadd.f32 %v1654, %v1655
      %v1657 = vsel %vm277, %v1638, 0.0
      %v1658 = vadd.f32 %v1656, %v1657
      %v1659 = vsel %vm277, %v1639, 0.0
      %v1660 = vadd.f32 %v1658, %v1659
      %v1661 = vsel %vm277, %v1640, 0.0
      %v1662 = vadd.f32 %v1660, %v1661
      %v1663 = vsel %vm277, %v1641, 0.0
      %v1664 = vadd.f32 %v1662, %v1663
      %v1665 = vrot.slane %v1664, 4
      %v1666 = vadd.f32 %v1664, %v1665
      %v1667 = vrot.slane %v1666, 2
      %v1668 = vadd.f32 %v1666, %v1667
      %v1669 = vrot.slane %v1668, 1
      %v1670 = vadd.f32 %v1668, %v1669
      %vm1671 = vcmask 253952
      %1672 = vst.msk [vmem:[%s265] sm:$0x1] %vm1671, %v1670
      %v1673 = vmul.f32 %v1634, %v1634
      %v1674 = vmul.f32 %v1635, %v1635
      %v1675 = vmul.f32 %v1636, %v1636
      %v1676 = vmul.f32 %v1637, %v1637
      %v1677 = vmul.f32 %v1638, %v1638
      %v1678 = vmul.f32 %v1639, %v1639
      %v1679 = vmul.f32 %v1640, %v1640
      %v1680 = vmul.f32 %v1641, %v1641
      %v1681 = vsel %vm277, %v1673, 0.0
      %v1682 = vsel %vm277, %v1674, 0.0
      %v1683 = vadd.f32 %v1681, %v1682
      %v1684 = vsel %vm277, %v1675, 0.0
      %v1685 = vadd.f32 %v1683, %v1684
      %v1686 = vsel %vm277, %v1676, 0.0
      %v1687 = vadd.f32 %v1685, %v1686
      %v1688 = vsel %vm277, %v1677, 0.0
      %v1689 = vadd.f32 %v1687, %v1688
      %v1690 = vsel %vm277, %v1678, 0.0
      %v1691 = vadd.f32 %v1689, %v1690
      %v1692 = vsel %vm277, %v1679, 0.0
      %v1693 = vadd.f32 %v1691, %v1692
      %v1694 = vsel %vm277, %v1680, 0.0
      %v1695 = vadd.f32 %v1693, %v1694
      %v1696 = vrot.slane %v1695, 4
      %v1697 = vadd.f32 %v1695, %v1696
      %v1698 = vrot.slane %v1697, 2
      %v1699 = vadd.f32 %v1697, %v1698
      %v1700 = vrot.slane %v1699, 1
      %v1701 = vadd.f32 %v1699, %v1700
      %1702 = vst.msk [vmem:[%s268] sm:$0x1] %vm1671, %v1701
      %p1703 = scmp.lt.s32.totalorder %s18, 1
      %s1704 = scalar_select %p1703, %s18, 1
      %s1705 = smul.addr %s1704, 8
      %s1706 = smul.addr %s1705, 8
      %s1707 = scalar_lea.vmem %s4, %s1706
      %p1708 = scmp.lt.s32.totalorder %s18, 1
      %s1709 = scalar_select %p1708, %s18, 1
      %s1710 = scalar_lea.vmem %s5, %s1709
      %p1711 = scmp.lt.s32.totalorder %s18, 1
      %s1712 = scalar_select %p1711, %s18, 1
      %s1713 = scalar_lea.vmem %s6, %s1712
      // Predicated region
      $region37: #{conv_block_forward.3} parent=35 // pred_check
        %p1714 = pneg %p125
      $region38: #{conv_block_forward.3} parent=35 // pred_check_branch
        %1716 = sbr.rel (%p1714) target = $region40
      $region39: #{conv_block_forward.3} parent=35 // pred_region
        _
      $region40: #{conv_block_forward.3} parent=35 // pred_fallthru
        _
      // Predicated region
      $region41: #{conv_block_forward.3} parent=35 // pred_check
        %p1717 = pneg %p151
      $region42: #{conv_block_forward.3} parent=35 // pred_check_branch
        %1719 = sbr.rel (%p1717) target = $region44
      $region43: #{conv_block_forward.3} parent=35 // pred_region
        _
      $region44: #{conv_block_forward.3} parent=35 // pred_fallthru
        _
      // Predicated region
      $region45: #{conv_block_forward.3} parent=35 // pred_check
        %p1720 = pneg %p177
      $region46: #{conv_block_forward.3} parent=35 // pred_check_branch
        %1722 = sbr.rel (%p1720) target = $region48
      $region47: #{conv_block_forward.3} parent=35 // pred_region
        _
      $region48: #{conv_block_forward.3} parent=35 // pred_fallthru
        _
    $region36: #{conv_block_forward.3} parent=5 // pred_fallthru
      _
    %p1723 = scmp.le.s32.totalorder 2, %s13
    // Predicated region
    $region49: #{conv_block_forward.3} parent=5 // pred_check
      %p1724 = pneg %p1723
    $region50: #{conv_block_forward.3} parent=5 // pred_check_branch
      %1726 = sbr.rel (%p1724) target = $region52
    $region51: #{conv_block_forward.3} parent=5 // pred_region
      %s1727 = ssub.s32 %s13, 2
      // Predicated region
      $region53: #{conv_block_forward.3} parent=51 // pred_check
        %p1728 = pneg %p131
      $region54: #{conv_block_forward.3} parent=51 // pred_check_branch
        %1730 = sbr.rel (%p1728) target = $region56
      $region55: #{conv_block_forward.3} parent=51 // pred_region
        %p1731 = scmp.lt.s32.totalorder %s19, 1
        %s1732 = scalar_select %p1731, %s19, 1
        %s1733 = smul.addr %s1732, 8
        %s1734 = smul.addr %s1733, 8
        %s1735 = scalar_lea.vmem %s4, %s1734
      $region56: #{conv_block_forward.3} parent=51 // pred_fallthru
        _
      // Predicated region
      $region57: #{conv_block_forward.3} parent=51 // pred_check
        %p1736 = pneg %p157
      $region58: #{conv_block_forward.3} parent=51 // pred_check_branch
        %1738 = sbr.rel (%p1736) target = $region60
      $region59: #{conv_block_forward.3} parent=51 // pred_region
        %p1739 = scmp.lt.s32.totalorder %s19, 1
        %s1740 = scalar_select %p1739, %s19, 1
        %s1741 = scalar_lea.vmem %s5, %s1740
      $region60: #{conv_block_forward.3} parent=51 // pred_fallthru
        _
      // Predicated region
      $region61: #{conv_block_forward.3} parent=51 // pred_check
        %p1742 = pneg %p183
      $region62: #{conv_block_forward.3} parent=51 // pred_check_branch
        %1744 = sbr.rel (%p1742) target = $region64
      $region63: #{conv_block_forward.3} parent=51 // pred_region
        %p1745 = scmp.lt.s32.totalorder %s19, 1
        %s1746 = scalar_select %p1745, %s19, 1
        %s1747 = scalar_lea.vmem %s6, %s1746
      $region64: #{conv_block_forward.3} parent=51 // pred_fallthru
        _
    $region52: #{conv_block_forward.3} parent=5 // pred_fallthru
      _
  $region6: #{conv_block_forward.3} parent=0 // loop_footer
    %s17 = sadd.s32 1, %s13
  $region7: #{conv_block_forward.3} parent=0 // loop_footer_branch
    %12 = sbr.rel target = $region3
  $region8: #{conv_block_forward.3} parent=0 // loop_exit
    _

// kernel: conv_block_forward.4
$region0: #{conv_block_forward.4}
  #allocation0 [shape = 'u32[]', space=smem, size = 0x4, offset = 0x4, fixed_abs, tag = 'smem constant byte address 0x4 - core index']
  #allocation1 [shape = 'u32[144,128]{1,0:T(1,128)}', space=vmem, size = 0x12000, scoped, tag = 'internal scratch']
  #allocation2 [shape = 'f32[10,10,32]{2,1,0:T(8,128)}', space=vmem, size = 0x14000, scoped, tag = 'scratch operand']
  %s0 = inlined_call_operand.vmem [shape: f32[2,8,8,32], index: 0, kind: input, shape index: {}]
  %s1 = inlined_call_operand.vmem [shape: f32[9,32,64], index: 1, kind: input, shape index: {}]
  %s2 = inlined_call_operand.vmem [shape: f32[1,32], index: 2, kind: input, shape index: {}]
  %s3 = inlined_call_operand.vmem [shape: f32[1,32], index: 3, kind: input, shape index: {}]
  %s4 = inlined_call_operand.vmem [shape: f32[2,64,64], index: 4, kind: output, shape index: {0}]
  %s5 = inlined_call_operand.vmem [shape: f32[2,1,64], index: 5, kind: output, shape index: {1}]
  %s6 = inlined_call_operand.vmem [shape: f32[2,1,64], index: 6, kind: output, shape index: {2}]
  %7 = xla_tuple %s4, %s5, %s6
  %s8 = sld [smem:[#allocation0]]
  $region65: #{conv_block_forward.4} parent=0
    _
  %s10 = ssub.s32 1, %s8
  %s11 = scalar_select 0, %s10, %s8
  loop: start=0, step=1, limit=4
  $region2: #{conv_block_forward.4} parent=0 // loop_pre_header
    _
  $region3: #{conv_block_forward.4} parent=0 // loop_header
    %s13 = sphi 0, %s17
    %p14 = scmp.ge.s32.totalorder %s13, 4
    %s23 = sphi 0, %s25
    %s26 = sphi 0, %s23
    %s27 = sphi 0, %s26
    %s43 = sphi 0, %s27
    %s47 = sphi 0, %s47
    %s49 = sphi 0, %s47
    %s50 = sphi 0, %s49
    %s64 = sphi 0, %s50
    %s68 = sphi 0, %s68
    %s70 = sphi 0, %s68
    %s71 = sphi 0, %s70
    %s85 = sphi 0, %s71
    %s89 = sphi 0, %s89
    %s91 = sphi 0, %s89
    %s92 = sphi 0, %s91
    %s106 = sphi 0, %s92
    %s112 = sphi 0, %s114
    %s115 = sphi 0, %s112
    %s116 = sphi 0, %s115
    %s132 = sphi 0, %s116
    %s138 = sphi 0, %s140
    %s141 = sphi 0, %s138
    %s142 = sphi 0, %s141
    %s158 = sphi 0, %s142
    %s164 = sphi 0, %s166
    %s167 = sphi 0, %s164
    %s168 = sphi 0, %s167
    %s184 = sphi 0, %s168
  $region4: #{conv_block_forward.4} parent=0 // loop_header_branch
    %16 = sbr.rel (%p14) target = $region8
  $region5: #{conv_block_forward.4} parent=0 // loop_body
    %s18 = ssub.s32 %s13, 1
    %s19 = ssub.s32 %s13, 2
    %s20 = sadd.s32 %s13, 1
    %s21 = ssub.s32 %s13, %s20
    %p22 = scmp.eq.s32.totalorder %s21, 0
    %s24 = sadd.s32 %s23, 1
    %s25 = scalar_select %p22, %s23, %s24
    %p28 = pneg %p22
    %p29 = scmp.eq.s32.totalorder %s13, 1
    %p30 = por %p28, %p29
    %p31 = scmp.ne.s32.totalorder %s23, %s26
    %p32 = scmp.eq.s32.totalorder %s13, 0
    %p33 = por %p31, %p32
    %p34 = scmp.ne.s32.totalorder %s23, %s26
    %p35 = scmp.eq.s32.totalorder %s18, 1
    %p36 = por %p34, %p35
    %p37 = scmp.ne.s32.totalorder %s26, %s27
    %p38 = scmp.eq.s32.totalorder %s18, 0
    %p39 = por %p37, %p38
    %p40 = scmp.ne.s32.totalorder %s26, %s27
    %p41 = scmp.eq.s32.totalorder %s19, 1
    %p42 = por %p40, %p41
    %p44 = scmp.ne.s32.totalorder %s27, %s43
    %p45 = scmp.eq.s32.totalorder %s19, 0
    %p46 = por %p44, %p45
    %s48 = sadd.s32 %s47, 1
    %p51 = scmp.eq.s32.totalorder %s13, 1
    %p52 = scmp.ne.s32.totalorder %s47, %s49
    %p53 = scmp.eq.s32.totalorder %s13, 0
    %p54 = por %p52, %p53
    %p55 = scmp.ne.s32.totalorder %s47, %s49
    %p56 = scmp.eq.s32.totalorder %s18, 1
    %p57 = por %p55, %p56
    %p58 = scmp.ne.s32.totalorder %s49, %s50
    %p59 = scmp.eq.s32.totalorder %s18, 0
    %p60 = por %p58, %p59
    %p61 = scmp.ne.s32.totalorder %s49, %s50
    %p62 = scmp.eq.s32.totalorder %s19, 1
    %p63 = por %p61, %p62
    %p65 = scmp.ne.s32.totalorder %s50, %s64
    %p66 = scmp.eq.s32.totalorder %s19, 0
    %p67 = por %p65, %p66
    %s69 = sadd.s32 %s68, 1
    %p72 = scmp.eq.s32.totalorder %s13, 1
    %p73 = scmp.ne.s32.totalorder %s68, %s70
    %p74 = scmp.eq.s32.totalorder %s13, 0
    %p75 = por %p73, %p74
    %p76 = scmp.ne.s32.totalorder %s68, %s70
    %p77 = scmp.eq.s32.totalorder %s18, 1
    %p78 = por %p76, %p77
    %p79 = scmp.ne.s32.totalorder %s70, %s71
    %p80 = scmp.eq.s32.totalorder %s18, 0
    %p81 = por %p79, %p80
    %p82 = scmp.ne.s32.totalorder %s70, %s71
    %p83 = scmp.eq.s32.totalorder %s19, 1
    %p84 = por %p82, %p83
    %p86 = scmp.ne.s32.totalorder %s71, %s85
    %p87 = scmp.eq.s32.totalorder %s19, 0
    %p88 = por %p86, %p87
    %s90 = sadd.s32 %s89, 1
    %p93 = scmp.eq.s32.totalorder %s13, 1
    %p94 = scmp.ne.s32.totalorder %s89, %s91
    %p95 = scmp.eq.s32.totalorder %s13, 0
    %p96 = por %p94, %p95
    %p97 = scmp.ne.s32.totalorder %s89, %s91
    %p98 = scmp.eq.s32.totalorder %s18, 1
    %p99 = por %p97, %p98
    %p100 = scmp.ne.s32.totalorder %s91, %s92
    %p101 = scmp.eq.s32.totalorder %s18, 0
    %p102 = por %p100, %p101
    %p103 = scmp.ne.s32.totalorder %s91, %s92
    %p104 = scmp.eq.s32.totalorder %s19, 1
    %p105 = por %p103, %p104
    %p107 = scmp.ne.s32.totalorder %s92, %s106
    %p108 = scmp.eq.s32.totalorder %s19, 0
    %p109 = por %p107, %p108
    %s110 = ssub.s32 %s13, %s20
    %p111 = scmp.eq.s32.totalorder %s110, 0
    %s113 = sadd.s32 %s112, 1
    %s114 = scalar_select %p111, %s112, %s113
    %p117 = pneg %p111
    %p118 = scmp.eq.s32.totalorder %s13, 1
    %p119 = por %p117, %p118
    %p120 = scmp.ne.s32.totalorder %s112, %s115
    %p121 = scmp.eq.s32.totalorder %s13, 0
    %p122 = por %p120, %p121
    %p123 = scmp.ne.s32.totalorder %s112, %s115
    %p124 = scmp.eq.s32.totalorder %s18, 1
    %p125 = por %p123, %p124
    %p126 = scmp.ne.s32.totalorder %s115, %s116
    %p127 = scmp.eq.s32.totalorder %s18, 0
    %p128 = por %p126, %p127
    %p129 = scmp.ne.s32.totalorder %s115, %s116
    %p130 = scmp.eq.s32.totalorder %s19, 1
    %p131 = por %p129, %p130
    %p133 = scmp.ne.s32.totalorder %s116, %s132
    %p134 = scmp.eq.s32.totalorder %s19, 0
    %p135 = por %p133, %p134
    %s136 = ssub.s32 %s13, %s20
    %p137 = scmp.eq.s32.totalorder %s136, 0
    %s139 = sadd.s32 %s138, 1
    %s140 = scalar_select %p137, %s138, %s139
    %p143 = pneg %p137
    %p144 = scmp.eq.s32.totalorder %s13, 1
    %p145 = por %p143, %p144
    %p146 = scmp.ne.s32.totalorder %s138, %s141
    %p147 = scmp.eq.s32.totalorder %s13, 0
    %p148 = por %p146, %p147
    %p149 = scmp.ne.s32.totalorder %s138, %s141
    %p150 = scmp.eq.s32.totalorder %s18, 1
    %p151 = por %p149, %p150
    %p152 = scmp.ne.s32.totalorder %s141, %s142
    %p153 = scmp.eq.s32.totalorder %s18, 0
    %p154 = por %p152, %p153
    %p155 = scmp.ne.s32.totalorder %s141, %s142
    %p156 = scmp.eq.s32.totalorder %s19, 1
    %p157 = por %p155, %p156
    %p159 = scmp.ne.s32.totalorder %s142, %s158
    %p160 = scmp.eq.s32.totalorder %s19, 0
    %p161 = por %p159, %p160
    %s162 = ssub.s32 %s13, %s20
    %p163 = scmp.eq.s32.totalorder %s162, 0
    %s165 = sadd.s32 %s164, 1
    %s166 = scalar_select %p163, %s164, %s165
    %p169 = pneg %p163
    %p170 = scmp.eq.s32.totalorder %s13, 1
    %p171 = por %p169, %p170
    %p172 = scmp.ne.s32.totalorder %s164, %s167
    %p173 = scmp.eq.s32.totalorder %s13, 0
    %p174 = por %p172, %p173
    %p175 = scmp.ne.s32.totalorder %s164, %s167
    %p176 = scmp.eq.s32.totalorder %s18, 1
    %p177 = por %p175, %p176
    %p178 = scmp.ne.s32.totalorder %s167, %s168
    %p179 = scmp.eq.s32.totalorder %s18, 0
    %p180 = por %p178, %p179
    %p181 = scmp.ne.s32.totalorder %s167, %s168
    %p182 = scmp.eq.s32.totalorder %s19, 1
    %p183 = por %p181, %p182
    %p185 = scmp.ne.s32.totalorder %s168, %s184
    %p186 = scmp.eq.s32.totalorder %s19, 0
    %p187 = por %p185, %p186
    %p188 = scmp.le.s32.totalorder 1, %s13
    %p189 = scmp.lt.s32.totalorder %s13, 3
    %p190 = pnand %p188, %p189
    %p191 = pneg %p190
    // Predicated region
    $region9: #{conv_block_forward.4} parent=5 // pred_check
      _
    $region10: #{conv_block_forward.4} parent=5 // pred_check_branch
      %193 = sbr.rel (%p190) target = $region12
    $region11: #{conv_block_forward.4} parent=5 // pred_region
      %s194 = ssub.s32 %s13, 1
      // Predicated region
      $region13: #{conv_block_forward.4} parent=11 // pred_check
        %p195 = pneg %p60
      $region14: #{conv_block_forward.4} parent=11 // pred_check_branch
        %197 = sbr.rel (%p195) target = $region16
      $region15: #{conv_block_forward.4} parent=11 // pred_region
        _
      $region16: #{conv_block_forward.4} parent=11 // pred_fallthru
        _
      // Predicated region
      $region17: #{conv_block_forward.4} parent=11 // pred_check
        %p198 = pneg %p81
      $region18: #{conv_block_forward.4} parent=11 // pred_check_branch
        %200 = sbr.rel (%p198) target = $region20
      $region19: #{conv_block_forward.4} parent=11 // pred_region
        _
      $region20: #{conv_block_forward.4} parent=11 // pred_fallthru
        _
      // Predicated region
      $region21: #{conv_block_forward.4} parent=11 // pred_check
        %p201 = pneg %p102
      $region22: #{conv_block_forward.4} parent=11 // pred_check_branch
        %203 = sbr.rel (%p201) target = $region24
      $region23: #{conv_block_forward.4} parent=11 // pred_region
        _
      $region24: #{conv_block_forward.4} parent=11 // pred_fallthru
        _
    $region12: #{conv_block_forward.4} parent=5 // pred_fallthru
      _
    %p204 = scmp.lt.s32.totalorder %s13, 2
    // Predicated region
    $region25: #{conv_block_forward.4} parent=5 // pred_check
      %p205 = pneg %p204
    $region26: #{conv_block_forward.4} parent=5 // pred_check_branch
      %207 = sbr.rel (%p205) target = $region28
    $region27: #{conv_block_forward.4} parent=5 // pred_region
      // Predicated region
      $region29: #{conv_block_forward.4} parent=27 // pred_check
        %p208 = pneg %p33
      $region30: #{conv_block_forward.4} parent=27 // pred_check_branch
        %210 = sbr.rel (%p208) target = $region32
      $region31: #{conv_block_forward.4} parent=27 // pred_region
        %p211 = scmp.lt.s32.totalorder %s13, 1
        %s212 = scalar_select %p211, %s13, 1
        %s213 = smul.addr %s212, 8
        %s214 = smul.addr %s213, 8
        %s215 = scalar_lea.vmem %s0, %s214
      $region32: #{conv_block_forward.4} parent=27 // pred_fallthru
        _
    $region28: #{conv_block_forward.4} parent=5 // pred_fallthru
      _
    %p216 = scmp.le.s32.totalorder 1, %s13
    %p217 = scmp.lt.s32.totalorder %s13, 3
    %p218 = pnand %p216, %p217
    %p219 = pneg %p218
    // Predicated region
    $region33: #{conv_block_forward.4} parent=5 // pred_check
      _
    $region34: #{conv_block_forward.4} parent=5 // pred_check_branch
      %221 = sbr.rel (%p218) target = $region36
    $region35: #{conv_block_forward.4} parent=5 // pred_region
      %s222 = ssub.s32 %s13, 1
      %p223 = scmp.lt.s32.totalorder %s18, 1
      %s224 = scalar_select %p223, %s18, 1
      %s225 = smul.addr %s224, 8
      %s226 = smul.addr %s225, 8
      %s227 = scalar_lea.vmem %s0, %s226
      %p228 = pneg %p39
      %p229 = pneg %p36
      %p230 = pneg %p60
      %p231 = pneg %p57
      %p232 = pneg %p81
      %p233 = pneg %p78
      %p234 = pneg %p102
      %p235 = pneg %p99
      %p236 = pneg %p128
      %p237 = pneg %p125
      %p238 = scmp.lt.s32.totalorder %s18, 1
      %s239 = scalar_select %p238, %s18, 1
      %s240 = smul.addr %s239, 8
      %s241 = smul.addr %s240, 8
      %s242 = scalar_lea.vmem %s4, %s241
      %p243 = pneg %p154
      %p244 = pneg %p151
      %p245 = scmp.lt.s32.totalorder %s18, 1
      %s246 = scalar_select %p245, %s18, 1
      %s247 = scalar_lea.vmem %s5, %s246
      %p248 = pneg %p180
      %p249 = pneg %p177
      %p250 = scmp.lt.s32.totalorder %s18, 1
      %s251 = scalar_select %p250, %s18, 1
      %s252 = scalar_lea.vmem %s6, %s251
      %p253 = scmp.lt.s32.totalorder %s18, 1
      %s254 = scalar_select %p253, %s18, 1
      %s255 = smul.addr %s254, 8
      %s256 = smul.addr %s255, 8
      %s257 = scalar_lea.vmem %s0, %s256
      %p258 = scmp.lt.s32.totalorder %s18, 1
      %s259 = scalar_select %p258, %s18, 1
      %s260 = smul.addr %s259, 8
      %s261 = smul.addr %s260, 8
      %s262 = scalar_lea.vmem %s4, %s261
      %p263 = scmp.lt.s32.totalorder %s18, 1
      %s264 = scalar_select %p263, %s18, 1
      %s265 = scalar_lea.vmem %s5, %s264
      %p266 = scmp.lt.s32.totalorder %s18, 1
      %s267 = scalar_select %p266, %s18, 1
      %s268 = scalar_lea.vmem %s6, %s267
      %v269 = vld [vmem:[%s257] sm:$0xff]
      %v270 = vld [vmem:[%s257 + $0x8] sm:$0xff]
      %v271 = vld [vmem:[%s257 + $0x10] sm:$0xff]
      %v272 = vld [vmem:[%s257 + $0x18] sm:$0xff]
      %v273 = vld [vmem:[%s257 + $0x20] sm:$0xff]
      %v274 = vld [vmem:[%s257 + $0x28] sm:$0xff]
      %v275 = vld [vmem:[%s257 + $0x30] sm:$0xff]
      %v276 = vld [vmem:[%s257 + $0x38] sm:$0xff]
      %v277 = vld [vmem:[%s2] sm:$0x1]
      %v279 = vlaneseq
      %v280 = vshrl.u32 %v279, 7
      %v281 = vsub.s32 0, %v280
      %v282 = vrot.slane %v277, %v281
      %v284 = vmul.f32 %v269, %v282
      %v285 = vmul.f32 %v270, %v282
      %v286 = vmul.f32 %v271, %v282
      %v287 = vmul.f32 %v272, %v282
      %v288 = vmul.f32 %v273, %v282
      %v289 = vmul.f32 %v274, %v282
      %v290 = vmul.f32 %v275, %v282
      %v291 = vmul.f32 %v276, %v282
      %v292 = vld [vmem:[%s3] sm:$0x1]
      %v294 = vlaneseq
      %v295 = vshrl.u32 %v294, 7
      %v296 = vsub.s32 0, %v295
      %v297 = vrot.slane %v292, %v296
      %v299 = vadd.f32 %v284, %v297
      %v300 = vadd.f32 %v285, %v297
      %v301 = vadd.f32 %v286, %v297
      %v302 = vadd.f32 %v287, %v297
      %v303 = vadd.f32 %v288, %v297
      %v304 = vadd.f32 %v289, %v297
      %v305 = vadd.f32 %v290, %v297
      %v306 = vadd.f32 %v291, %v297
      %v307 = vmax.f32 %v299, 0.0
      %v308 = vmax.f32 %v300, 0.0
      %v309 = vmax.f32 %v301, 0.0
      %v310 = vmax.f32 %v302, 0.0
      %v311 = vmax.f32 %v303, 0.0
      %v312 = vmax.f32 %v304, 0.0
      %v313 = vmax.f32 %v305, 0.0
      %v314 = vmax.f32 %v306, 0.0
      %vm315 = vcmask 261120
      %316 = vst.msk [vmem:[#allocation2] sm:$0xff] %vm315, 0.0
      %vm317 = vcmask 254976
      %318 = vst.msk [vmem:[#allocation2 + $0x8] sm:$0x3] %vm317, 0.0
      %319 = vst.msk [vmem:[#allocation2 + $0x10] sm:$0xff] %vm315, 0.0
      %320 = vst.msk [vmem:[#allocation2 + $0x18] sm:$0x3] %vm317, 0.0
      %321 = vst.msk [vmem:[#allocation2 + $0x20] sm:$0xff] %vm315, 0.0
      %322 = vst.msk [vmem:[#allocation2 + $0x28] sm:$0x3] %vm317, 0.0
      %323 = vst.msk [vmem:[#allocation2 + $0x30] sm:$0xff] %vm315, 0.0
      %324 = vst.msk [vmem:[#allocation2 + $0x38] sm:$0x3] %vm317, 0.0
      %325 = vst.msk [vmem:[#allocation2 + $0x40] sm:$0xff] %vm315, 0.0
      %326 = vst.msk [vmem:[#allocation2 + $0x48] sm:$0x3] %vm317, 0.0
      %327 = vst.msk [vmem:[#allocation2 + $0x50] sm:$0xff] %vm315, 0.0
      %328 = vst.msk [vmem:[#allocation2 + $0x58] sm:$0x3] %vm317, 0.0
      %329 = vst.msk [vmem:[#allocation2 + $0x60] sm:$0xff] %vm315, 0.0
      %330 = vst.msk [vmem:[#allocation2 + $0x68] sm:$0x3] %vm317, 0.0
      %331 = vst.msk [vmem:[#allocation2 + $0x70] sm:$0xff] %vm315, 0.0
      %332 = vst.msk [vmem:[#allocation2 + $0x78] sm:$0x3] %vm317, 0.0
      %333 = vst.msk [vmem:[#allocation2 + $0x80] sm:$0xff] %vm315, 0.0
      %334 = vst.msk [vmem:[#allocation2 + $0x88] sm:$0x3] %vm317, 0.0
      %335 = vst.msk [vmem:[#allocation2 + $0x90] sm:$0xff] %vm315, 0.0
      %336 = vst.msk [vmem:[#allocation2 + $0x98] sm:$0x3] %vm317, 0.0
      %s337 = scalar_lea.vmem [#allocation2], 16
      %338 = vst.msk [vmem:[%s337 + $0x1] sm:$0xff] %vm315, %v307
      %339 = vst.msk [vmem:[%s337 + $0x11] sm:$0xff] %vm315, %v308
      %340 = vst.msk [vmem:[%s337 + $0x21] sm:$0xff] %vm315, %v309
      %341 = vst.msk [vmem:[%s337 + $0x31] sm:$0xff] %vm315, %v310
      %342 = vst.msk [vmem:[%s337 + $0x41] sm:$0xff] %vm315, %v311
      %343 = vst.msk [vmem:[%s337 + $0x51] sm:$0xff] %vm315, %v312
      %344 = vst.msk [vmem:[%s337 + $0x61] sm:$0xff] %vm315, %v313
      %345 = vst.msk [vmem:[%s337 + $0x71] sm:$0xff] %vm315, %v314
      %v346 = vld [vmem:[#allocation2] sm:$0xff]
      %v347 = vld [vmem:[#allocation2 + $0x10] sm:$0xff]
      %v348 = vld [vmem:[#allocation2 + $0x20] sm:$0xff]
      %v349 = vld [vmem:[#allocation2 + $0x30] sm:$0xff]
      %v350 = vld [vmem:[#allocation2 + $0x40] sm:$0xff]
      %v351 = vld [vmem:[#allocation2 + $0x50] sm:$0xff]
      %v352 = vld [vmem:[#allocation2 + $0x60] sm:$0xff]
      %v353 = vld [vmem:[#allocation2 + $0x70] sm:$0xff]
      %v354 = vld [vmem:[%s1] sm:$0xff]
      %v355 = vld [vmem:[%s1 + $0x8] sm:$0xff]
      %v356 = vld [vmem:[%s1 + $0x10] sm:$0xff]
      %v357 = vld [vmem:[%s1 + $0x18] sm:$0xff]
      %v358 = vld [vmem:[#allocation2 + $0x1] sm:$0xff]
      %v359 = vld [vmem:[#allocation2 + $0x11] sm:$0xff]
      %v360 = vld [vmem:[#allocation2 + $0x21] sm:$0xff]
      %v361 = vld [vmem:[#allocation2 + $0x31] sm:$0xff]
      %v362 = vld [vmem:[#allocation2 + $0x41] sm:$0xff]
      %v363 = vld [vmem:[#allocation2 + $0x51] sm:$0xff]
      %v364 = vld [vmem:[#allocation2 + $0x61] sm:$0xff]
      %v365 = vld [vmem:[#allocation2 + $0x71] sm:$0xff]
      %s366 = scalar_lea.vmem %s1, 32
      %v367 = vld [vmem:[%s366] sm:$0xff]
      %v368 = vld [vmem:[%s366 + $0x8] sm:$0xff]
      %v369 = vld [vmem:[%s366 + $0x10] sm:$0xff]
      %v370 = vld [vmem:[%s366 + $0x18] sm:$0xff]
      %v372 = vsel %vm315, %v358, 0
      %v375 = vsel %vm315, %v359, 0
      %v378 = vsel %vm315, %v360, 0
      %v381 = vsel %vm315, %v361, 0
      %v384 = vsel %vm315, %v362, 0
      %v387 = vsel %vm315, %v363, 0
      %v390 = vsel %vm315, %v364, 0
      %v393 = vsel %vm315, %v365, 0
      %395 = vmatprep.subr.mxu0 0.0
      %396 = vmatpush1.msra.mxu0 0.0
      %397 = vmatprep.subr.mxu0 0.0
      %398 = vmatpush1.msra.mxu0 0.0
      %399 = vmatprep.subr.mxu0 0.0
      %400 = vmatpush1.msra.mxu0 0.0
      %401 = vmatprep.subr.mxu0 0.0
      %402 = vmatpush1.msra.mxu0 0.0
      %403 = vmatprep.subr.mxu0 0.0
      %404 = vmatpush1.msra.mxu0 0.0
      %405 = vmatprep.subr.mxu0 0.0
      %406 = vmatpush1.msra.mxu0 0.0
      %407 = vmatprep.subr.mxu0 0.0
      %408 = vmatpush1.msra.mxu0 0.0
      %409 = vmatprep.subr.mxu0 0.0
      %410 = vmatpush1.msra.mxu0 0.0
      %411 = vmatprep.subr.mxu0 0.0
      %412 = vmatpush1.msra.mxu0 0.0
      %413 = vmatprep.subr.mxu0 0.0
      %414 = vmatpush1.msra.mxu0 0.0
      %415 = vmatprep.subr.mxu0 0.0
      %416 = vmatpush1.msra.mxu0 0.0
      %417 = vmatprep.subr.mxu0 0.0
      %418 = vmatpush1.msra.mxu0 0.0
      %419 = vmatprep.subr.mxu0 0.0
      %420 = vmatpush1.msra.mxu0 %v370
      %421 = vmatprep.subr.mxu0 0.0
      %422 = vmatpush1.msra.mxu0 %v369
      %423 = vmatprep.subr.mxu0 0.0
      %424 = vmatpush1.msra.mxu0 %v368
      %425 = vmatprep.subr.mxu0 0.0
      %426 = vmatpush1.msra.mxu0 %v367
      %427 = vmatprep.subr.mxu0 0.0
      %428 = vmatpush2.msra.mxu0 0.0
      %429 = vmatprep.subr.mxu0 0.0
      %430 = vmatpush2.msra.mxu0 0.0
      %431 = vmatprep.subr.mxu0 0.0
      %432 = vmatpush2.msra.mxu0 0.0
      %433 = vmatprep.subr.mxu0 0.0
      %434 = vmatpush2.msra.mxu0 0.0
      %435 = vmatprep.subr.mxu0 0.0
      %436 = vmatpush2.msra.mxu0 0.0
      %437 = vmatprep.subr.mxu0 0.0
      %438 = vmatpush2.msra.mxu0 0.0
      %439 = vmatprep.subr.mxu0 0.0
      %440 = vmatpush2.msra.mxu0 0.0
      %441 = vmatprep.subr.mxu0 0.0
      %442 = vmatpush2.msra.mxu0 0.0
      %443 = vmatprep.subr.mxu0 0.0
      %444 = vmatpush2.msra.mxu0 0.0
      %445 = vmatprep.subr.mxu0 0.0
      %446 = vmatpush2.msra.mxu0 0.0
      %447 = vmatprep.subr.mxu0 0.0
      %448 = vmatpush2.msra.mxu0 0.0
      %449 = vmatprep.subr.mxu0 0.0
      %450 = vmatpush2.msra.mxu0 0.0
      %451 = vmatprep.subr.mxu0 0.0
      %452 = vmatpush2.msra.mxu0 0.0
      %453 = vmatprep.subr.mxu0 0.0
      %454 = vmatpush2.msra.mxu0 0.0
      %455 = vmatprep.subr.mxu0 0.0
      %456 = vmatpush2.msra.mxu0 0.0
      %457 = vmatprep.subr.mxu0 0.0
      %458 = vmatpush2.msra.mxu0 0.0
      %459 = vmatprep.mubr.f32.mxu0 0.0
      %460 = vmatmul.mubr.f32.gmra.mxu0 %v372
      %v461 = vpop.f32.mrf.mxu0
      %v462 = vadd.f32 0.0, %v461
      %v463 = vpop.f32.mrf.mxu0
      %464 = vmatprep.mubr.f32.mxu0 0.0
      %465 = vmatmul.mubr.f32.gmra.mxu0 %v375
      %v466 = vpop.f32.mrf.mxu0
      %v467 = vadd.f32 0.0, %v466
      %v468 = vpop.f32.mrf.mxu0
      %469 = vmatprep.mubr.f32.mxu0 0.0
      %470 = vmatmul.mubr.f32.gmra.mxu0 %v378
      %v471 = vpop.f32.mrf.mxu0
      %v472 = vadd.f32 0.0, %v471
      %v473 = vpop.f32.mrf.mxu0
      %474 = vmatprep.mubr.f32.mxu0 0.0
      %475 = vmatmul.mubr.f32.gmra.mxu0 %v381
      %v476 = vpop.f32.mrf.mxu0
      %v477 = vadd.f32 0.0, %v476
      %v478 = vpop.f32.mrf.mxu0
      %479 = vmatprep.mubr.f32.mxu0 0.0
      %480 = vmatmul.mubr.f32.gmra.mxu0 %v384
      %v481 = vpop.f32.mrf.mxu0
      %v482 = vadd.f32 0.0, %v481
      %v483 = vpop.f32.mrf.mxu0
      %484 = vmatprep.mubr.f32.mxu0 0.0
      %485 = vmatmul.mubr.f32.gmra.mxu0 %v387
      %v486 = vpop.f32.mrf.mxu0
      %v487 = vadd.f32 0.0, %v486
      %v488 = vpop.f32.mrf.mxu0
      %489 = vmatprep.mubr.f32.mxu0 0.0
      %490 = vmatmul.mubr.f32.gmra.mxu0 %v390
      %v491 = vpop.f32.mrf.mxu0
      %v492 = vadd.f32 0.0, %v491
      %v493 = vpop.f32.mrf.mxu0
      %494 = vmatprep.mubr.f32.mxu0 0.0
      %495 = vmatmul.mubr.f32.gmra.mxu0 %v393
      %v496 = vpop.f32.mrf.mxu0
      %v497 = vadd.f32 0.0, %v496
      %v498 = vpop.f32.mrf.mxu0
      %499 = vdwg.mxu0
      %v501 = vsel %vm315, %v346, 0
      %v504 = vsel %vm315, %v347, 0
      %v507 = vsel %vm315, %v348, 0
      %v510 = vsel %vm315, %v349, 0
      %v513 = vsel %vm315, %v350, 0
      %v516 = vsel %vm315, %v351, 0
      %v519 = vsel %vm315, %v352, 0
      %v522 = vsel %vm315, %v353, 0
      %524 = vmatprep.subr.mxu0 0.0
      %525 = vmatpush1.msra.mxu0 0.0
      %526 = vmatprep.subr.mxu0 0.0
      %527 = vmatpush1.msra.mxu0 0.0
      %528 = vmatprep.subr.mxu0 0.0
      %529 = vmatpush1.msra.mxu0 0.0
      %530 = vmatprep.subr.mxu0 0.0
      %531 = vmatpush1.msra.mxu0 0.0
      %532 = vmatprep.subr.mxu0 0.0
      %533 = vmatpush1.msra.mxu0 0.0
      %534 = vmatprep.subr.mxu0 0.0
      %535 = vmatpush1.msra.mxu0 0.0
      %536 = vmatprep.subr.mxu0 0.0
      %537 = vmatpush1.msra.mxu0 0.0
      %538 = vmatprep.subr.mxu0 0.0
      %539 = vmatpush1.msra.mxu0 0.0
      %540 = vmatprep.subr.mxu0 0.0
      %541 = vmatpush1.msra.mxu0 0.0
      %542 = vmatprep.subr.mxu0 0.0
      %543 = vmatpush1.msra.mxu0 0.0
      %544 = vmatprep.subr.mxu0 0.0
      %545 = vmatpush1.msra.mxu0 0.0
      %546 = vmatprep.subr.mxu0 0.0
      %547 = vmatpush1.msra.mxu0 0.0
      %548 = vmatprep.subr.mxu0 0.0
      %549 = vmatpush1.msra.mxu0 %v357
      %550 = vmatprep.subr.mxu0 0.0
      %551 = vmatpush1.msra.mxu0 %v356
      %552 = vmatprep.subr.mxu0 0.0
      %553 = vmatpush1.msra.mxu0 %v355
      %554 = vmatprep.subr.mxu0 0.0
      %555 = vmatpush1.msra.mxu0 %v354
      %556 = vmatprep.subr.mxu0 0.0
      %557 = vmatpush2.msra.mxu0 0.0
      %558 = vmatprep.subr.mxu0 0.0
      %559 = vmatpush2.msra.mxu0 0.0
      %560 = vmatprep.subr.mxu0 0.0
      %561 = vmatpush2.msra.mxu0 0.0
      %562 = vmatprep.subr.mxu0 0.0
      %563 = vmatpush2.msra.mxu0 0.0
      %564 = vmatprep.subr.mxu0 0.0
      %565 = vmatpush2.msra.mxu0 0.0
      %566 = vmatprep.subr.mxu0 0.0
      %567 = vmatpush2.msra.mxu0 0.0
      %568 = vmatprep.subr.mxu0 0.0
      %569 = vmatpush2.msra.mxu0 0.0
      %570 = vmatprep.subr.mxu0 0.0
      %571 = vmatpush2.msra.mxu0 0.0
      %572 = vmatprep.subr.mxu0 0.0
      %573 = vmatpush2.msra.mxu0 0.0
      %574 = vmatprep.subr.mxu0 0.0
      %575 = vmatpush2.msra.mxu0 0.0
      %576 = vmatprep.subr.mxu0 0.0
      %577 = vmatpush2.msra.mxu0 0.0
      %578 = vmatprep.subr.mxu0 0.0
      %579 = vmatpush2.msra.mxu0 0.0
      %580 = vmatprep.subr.mxu0 0.0
      %581 = vmatpush2.msra.mxu0 0.0
      %582 = vmatprep.subr.mxu0 0.0
      %583 = vmatpush2.msra.mxu0 0.0
      %584 = vmatprep.subr.mxu0 0.0
      %585 = vmatpush2.msra.mxu0 0.0
      %586 = vmatprep.subr.mxu0 0.0
      %587 = vmatpush2.msra.mxu0 0.0
      %588 = vmatprep.mubr.f32.mxu0 0.0
      %589 = vmatmul.mubr.f32.gmra.mxu0 %v501
      %v590 = vpop.f32.mrf.mxu0
      %v591 = vadd.f32 %v462, %v590
      %v592 = vpop.f32.mrf.mxu0
      %593 = vmatprep.mubr.f32.mxu0 0.0
      %594 = vmatmul.mubr.f32.gmra.mxu0 %v504
      %v595 = vpop.f32.mrf.mxu0
      %v596 = vadd.f32 %v467, %v595
      %v597 = vpop.f32.mrf.mxu0
      %598 = vmatprep.mubr.f32.mxu0 0.0
      %599 = vmatmul.mubr.f32.gmra.mxu0 %v507
      %v600 = vpop.f32.mrf.mxu0
      %v601 = vadd.f32 %v472, %v600
      %v602 = vpop.f32.mrf.mxu0
      %603 = vmatprep.mubr.f32.mxu0 0.0
      %604 = vmatmul.mubr.f32.gmra.mxu0 %v510
      %v605 = vpop.f32.mrf.mxu0
      %v606 = vadd.f32 %v477, %v605
      %v607 = vpop.f32.mrf.mxu0
      %608 = vmatprep.mubr.f32.mxu0 0.0
      %609 = vmatmul.mubr.f32.gmra.mxu0 %v513
      %v610 = vpop.f32.mrf.mxu0
      %v611 = vadd.f32 %v482, %v610
      %v612 = vpop.f32.mrf.mxu0
      %613 = vmatprep.mubr.f32.mxu0 0.0
      %614 = vmatmul.mubr.f32.gmra.mxu0 %v516
      %v615 = vpop.f32.mrf.mxu0
      %v616 = vadd.f32 %v487, %v615
      %v617 = vpop.f32.mrf.mxu0
      %618 = vmatprep.mubr.f32.mxu0 0.0
      %619 = vmatmul.mubr.f32.gmra.mxu0 %v519
      %v620 = vpop.f32.mrf.mxu0
      %v621 = vadd.f32 %v492, %v620
      %v622 = vpop.f32.mrf.mxu0
      %623 = vmatprep.mubr.f32.mxu0 0.0
      %624 = vmatmul.mubr.f32.gmra.mxu0 %v522
      %v625 = vpop.f32.mrf.mxu0
      %v626 = vadd.f32 %v497, %v625
      %v627 = vpop.f32.mrf.mxu0
      %628 = vdwg.mxu0
      %v629 = vld [vmem:[#allocation2 + $0x2] sm:$0xff]
      %v630 = vld [vmem:[#allocation2 + $0x12] sm:$0xff]
      %v631 = vld [vmem:[#allocation2 + $0x22] sm:$0xff]
      %v632 = vld [vmem:[#allocation2 + $0x32] sm:$0xff]
      %v633 = vld [vmem:[#allocation2 + $0x42] sm:$0xff]
      %v634 = vld [vmem:[#allocation2 + $0x52] sm:$0xff]
      %v635 = vld [vmem:[#allocation2 + $0x62] sm:$0xff]
      %v636 = vld [vmem:[#allocation2 + $0x72] sm:$0xff]
      %s637 = scalar_lea.vmem %s1, 64
      %v638 = vld [vmem:[%s637] sm:$0xff]
      %v639 = vld [vmem:[%s637 + $0x8] sm:$0xff]
      %v640 = vld [vmem:[%s637 + $0x10] sm:$0xff]
      %v641 = vld [vmem:[%s637 + $0x18] sm:$0xff]
      %v643 = vsel %vm315, %v629, 0
      %v646 = vsel %vm315, %v630, 0
      %v649 = vsel %vm315, %v631, 0
      %v652 = vsel %vm315, %v632, 0
      %v655 = vsel %vm315, %v633, 0
      %v658 = vsel %vm315, %v634, 0
      %v661 = vsel %vm315, %v635, 0
      %v664 = vsel %vm315, %v636, 0
      %666 = vmatprep.subr.mxu0 0.0
      %667 = vmatpush1.msra.mxu0 0.0
      %668 = vmatprep.subr.mxu0 0.0
      %669 = vmatpush1.msra.mxu0 0.0
      %670 = vmatprep.subr.mxu0 0.0
      %671 = vmatpush1.msra.mxu0 0.0
      %672 = vmatprep.subr.mxu0 0.0
      %673 = vmatpush1.msra.mxu0 0.0
      %674 = vmatprep.subr.mxu0 0.0
      %675 = vmatpush1.msra.mxu0 0.0
      %676 = vmatprep.subr.mxu0 0.0
      %677 = vmatpush1.msra.mxu0 0.0
      %678 = vmatprep.subr.mxu0 0.0
      %679 = vmatpush1.msra.mxu0 0.0
      %680 = vmatprep.subr.mxu0 0.0
      %681 = vmatpush1.msra.mxu0 0.0
      %682 = vmatprep.subr.mxu0 0.0
      %683 = vmatpush1.msra.mxu0 0.0
      %684 = vmatprep.subr.mxu0 0.0
      %685 = vmatpush1.msra.mxu0 0.0
      %686 = vmatprep.subr.mxu0 0.0
      %687 = vmatpush1.msra.mxu0 0.0
      %688 = vmatprep.subr.mxu0 0.0
      %689 = vmatpush1.msra.mxu0 0.0
      %690 = vmatprep.subr.mxu0 0.0
      %691 = vmatpush1.msra.mxu0 %v641
      %692 = vmatprep.subr.mxu0 0.0
      %693 = vmatpush1.msra.mxu0 %v640
      %694 = vmatprep.subr.mxu0 0.0
      %695 = vmatpush1.msra.mxu0 %v639
      %696 = vmatprep.subr.mxu0 0.0
      %697 = vmatpush1.msra.mxu0 %v638
      %698 = vmatprep.subr.mxu0 0.0
      %699 = vmatpush2.msra.mxu0 0.0
      %700 = vmatprep.subr.mxu0 0.0
      %701 = vmatpush2.msra.mxu0 0.0
      %702 = vmatprep.subr.mxu0 0.0
      %703 = vmatpush2.msra.mxu0 0.0
      %704 = vmatprep.subr.mxu0 0.0
      %705 = vmatpush2.msra.mxu0 0.0
      %706 = vmatprep.subr.mxu0 0.0
      %707 = vmatpush2.msra.mxu0 0.0
      %708 = vmatprep.subr.mxu0 0.0
      %709 = vmatpush2.msra.mxu0 0.0
      %710 = vmatprep.subr.mxu0 0.0
      %711 = vmatpush2.msra.mxu0 0.0
      %712 = vmatprep.subr.mxu0 0.0
      %713 = vmatpush2.msra.mxu0 0.0
      %714 = vmatprep.subr.mxu0 0.0
      %715 = vmatpush2.msra.mxu0 0.0
      %716 = vmatprep.subr.mxu0 0.0
      %717 = vmatpush2.msra.mxu0 0.0
      %718 = vmatprep.subr.mxu0 0.0
      %719 = vmatpush2.msra.mxu0 0.0
      %720 = vmatprep.subr.mxu0 0.0
      %721 = vmatpush2.msra.mxu0 0.0
      %722 = vmatprep.subr.mxu0 0.0
      %723 = vmatpush2.msra.mxu0 0.0
      %724 = vmatprep.subr.mxu0 0.0
      %725 = vmatpush2.msra.mxu0 0.0
      %726 = vmatprep.subr.mxu0 0.0
      %727 = vmatpush2.msra.mxu0 0.0
      %728 = vmatprep.subr.mxu0 0.0
      %729 = vmatpush2.msra.mxu0 0.0
      %730 = vmatprep.mubr.f32.mxu0 0.0
      %731 = vmatmul.mubr.f32.gmra.mxu0 %v643
      %v732 = vpop.f32.mrf.mxu0
      %v733 = vadd.f32 0.0, %v732
      %v734 = vpop.f32.mrf.mxu0
      %735 = vmatprep.mubr.f32.mxu0 0.0
      %736 = vmatmul.mubr.f32.gmra.mxu0 %v646
      %v737 = vpop.f32.mrf.mxu0
      %v738 = vadd.f32 0.0, %v737
      %v739 = vpop.f32.mrf.mxu0
      %740 = vmatprep.mubr.f32.mxu0 0.0
      %741 = vmatmul.mubr.f32.gmra.mxu0 %v649
      %v742 = vpop.f32.mrf.mxu0
      %v743 = vadd.f32 0.0, %v742
      %v744 = vpop.f32.mrf.mxu0
      %745 = vmatprep.mubr.f32.mxu0 0.0
      %746 = vmatmul.mubr.f32.gmra.mxu0 %v652
      %v747 = vpop.f32.mrf.mxu0
      %v748 = vadd.f32 0.0, %v747
      %v749 = vpop.f32.mrf.mxu0
      %750 = vmatprep.mubr.f32.mxu0 0.0
      %751 = vmatmul.mubr.f32.gmra.mxu0 %v655
      %v752 = vpop.f32.mrf.mxu0
      %v753 = vadd.f32 0.0, %v752
      %v754 = vpop.f32.mrf.mxu0
      %755 = vmatprep.mubr.f32.mxu0 0.0
      %756 = vmatmul.mubr.f32.gmra.mxu0 %v658
      %v757 = vpop.f32.mrf.mxu0
      %v758 = vadd.f32 0.0, %v757
      %v759 = vpop.f32.mrf.mxu0
      %760 = vmatprep.mubr.f32.mxu0 0.0
      %761 = vmatmul.mubr.f32.gmra.mxu0 %v661
      %v762 = vpop.f32.mrf.mxu0
      %v763 = vadd.f32 0.0, %v762
      %v764 = vpop.f32.mrf.mxu0
      %765 = vmatprep.mubr.f32.mxu0 0.0
      %766 = vmatmul.mubr.f32.gmra.mxu0 %v664
      %v767 = vpop.f32.mrf.mxu0
      %v768 = vadd.f32 0.0, %v767
      %v769 = vpop.f32.mrf.mxu0
      %770 = vdwg.mxu0
      %v771 = vadd.f32 %v591, %v733
      %v772 = vadd.f32 %v596, %v738
      %v773 = vadd.f32 %v601, %v743
      %v774 = vadd.f32 %v606, %v748
      %v775 = vadd.f32 %v611, %v753
      %v776 = vadd.f32 %v616, %v758
      %v777 = vadd.f32 %v621, %v763
      %v778 = vadd.f32 %v626, %v768
      %v779 = vld [vmem:[%s337] sm:$0xff]
      %v780 = vld [vmem:[%s337 + $0x10] sm:$0xff]
      %v781 = vld [vmem:[%s337 + $0x20] sm:$0xff]
      %v782 = vld [vmem:[%s337 + $0x30] sm:$0xff]
      %v783 = vld [vmem:[%s337 + $0x40] sm:$0xff]
      %v784 = vld [vmem:[%s337 + $0x50] sm:$0xff]
      %v785 = vld [vmem:[%s337 + $0x60] sm:$0xff]
      %v786 = vld [vmem:[%s337 + $0x70] sm:$0xff]
      %s787 = scalar_lea.vmem %s1, 96
      %v788 = vld [vmem:[%s787] sm:$0xff]
      %v789 = vld [vmem:[%s787 + $0x8] sm:$0xff]
      %v790 = vld [vmem:[%s787 + $0x10] sm:$0xff]
      %v791 = vld [vmem:[%s787 + $0x18] sm:$0xff]
      %v793 = vsel %vm315, %v779, 0
      %v796 = vsel %vm315, %v780, 0
      %v799 = vsel %vm315, %v781, 0
      %v802 = vsel %vm315, %v782, 0
      %v805 = vsel %vm315, %v783, 0
      %v808 = vsel %vm315, %v784, 0
      %v811 = vsel %vm315, %v785, 0
      %v814 = vsel %vm315, %v786, 0
      %816 = vmatprep.subr.mxu0 0.0
      %817 = vmatpush1.msra.mxu0 0.0
      %818 = vmatprep.subr.mxu0 0.0
      %819 = vmatpush1.msra.mxu0 0.0
      %820 = vmatprep.subr.mxu0 0.0
      %821 = vmatpush1.msra.mxu0 0.0
      %822 = vmatprep.subr.mxu0 0.0
      %823 = vmatpush1.msra.mxu0 0.0
      %824 = vmatprep.subr.mxu0 0.0
      %825 = vmatpush1.msra.mxu0 0.0
      %826 = vmatprep.subr.mxu0 0.0
      %827 = vmatpush1.msra.mxu0 0.0
      %828 = vmatprep.subr.mxu0 0.0
      %829 = vmatpush1.msra.mxu0 0.0
      %830 = vmatprep.subr.mxu0 0.0
      %831 = vmatpush1.msra.mxu0 0.0
      %832 = vmatprep.subr.mxu0 0.0
      %833 = vmatpush1.msra.mxu0 0.0
      %834 = vmatprep.subr.mxu0 0.0
      %835 = vmatpush1.msra.mxu0 0.0
      %836 = vmatprep.subr.mxu0 0.0
      %837 = vmatpush1.msra.mxu0 0.0
      %838 = vmatprep.subr.mxu0 0.0
      %839 = vmatpush1.msra.mxu0 0.0
      %840 = vmatprep.subr.mxu0 0.0
      %841 = vmatpush1.msra.mxu0 %v791
      %842 = vmatprep.subr.mxu0 0.0
      %843 = vmatpush1.msra.mxu0 %v790
      %844 = vmatprep.subr.mxu0 0.0
      %845 = vmatpush1.msra.mxu0 %v789
      %846 = vmatprep.subr.mxu0 0.0
      %847 = vmatpush1.msra.mxu0 %v788
      %848 = vmatprep.subr.mxu0 0.0
      %849 = vmatpush2.msra.mxu0 0.0
      %850 = vmatprep.subr.mxu0 0.0
      %851 = vmatpush2.msra.mxu0 0.0
      %852 = vmatprep.subr.mxu0 0.0
      %853 = vmatpush2.msra.mxu0 0.0
      %854 = vmatprep.subr.mxu0 0.0
      %855 = vmatpush2.msra.mxu0 0.0
      %856 = vmatprep.subr.mxu0 0.0
      %857 = vmatpush2.msra.mxu0 0.0
      %858 = vmatprep.subr.mxu0 0.0
      %859 = vmatpush2.msra.mxu0 0.0
      %860 = vmatprep.subr.mxu0 0.0
      %861 = vmatpush2.msra.mxu0 0.0
      %862 = vmatprep.subr.mxu0 0.0
      %863 = vmatpush2.msra.mxu0 0.0
      %864 = vmatprep.subr.mxu0 0.0
      %865 = vmatpush2.msra.mxu0 0.0
      %866 = vmatprep.subr.mxu0 0.0
      %867 = vmatpush2.msra.mxu0 0.0
      %868 = vmatprep.subr.mxu0 0.0
      %869 = vmatpush2.msra.mxu0 0.0
      %870 = vmatprep.subr.mxu0 0.0
      %871 = vmatpush2.msra.mxu0 0.0
      %872 = vmatprep.subr.mxu0 0.0
      %873 = vmatpush2.msra.mxu0 0.0
      %874 = vmatprep.subr.mxu0 0.0
      %875 = vmatpush2.msra.mxu0 0.0
      %876 = vmatprep.subr.mxu0 0.0
      %877 = vmatpush2.msra.mxu0 0.0
      %878 = vmatprep.subr.mxu0 0.0
      %879 = vmatpush2.msra.mxu0 0.0
      %880 = vmatprep.mubr.f32.mxu0 0.0
      %881 = vmatmul.mubr.f32.gmra.mxu0 %v793
      %v882 = vpop.f32.mrf.mxu0
      %v883 = vadd.f32 0.0, %v882
      %v884 = vpop.f32.mrf.mxu0
      %885 = vmatprep.mubr.f32.mxu0 0.0
      %886 = vmatmul.mubr.f32.gmra.mxu0 %v796
      %v887 = vpop.f32.mrf.mxu0
      %v888 = vadd.f32 0.0, %v887
      %v889 = vpop.f32.mrf.mxu0
      %890 = vmatprep.mubr.f32.mxu0 0.0
      %891 = vmatmul.mubr.f32.gmra.mxu0 %v799
      %v892 = vpop.f32.mrf.mxu0
      %v893 = vadd.f32 0.0, %v892
      %v894 = vpop.f32.mrf.mxu0
      %895 = vmatprep.mubr.f32.mxu0 0.0
      %896 = vmatmul.mubr.f32.gmra.mxu0 %v802
      %v897 = vpop.f32.mrf.mxu0
      %v898 = vadd.f32 0.0, %v897
      %v899 = vpop.f32.mrf.mxu0
      %900 = vmatprep.mubr.f32.mxu0 0.0
      %901 = vmatmul.mubr.f32.gmra.mxu0 %v805
      %v902 = vpop.f32.mrf.mxu0
      %v903 = vadd.f32 0.0, %v902
      %v904 = vpop.f32.mrf.mxu0
      %905 = vmatprep.mubr.f32.mxu0 0.0
      %906 = vmatmul.mubr.f32.gmra.mxu0 %v808
      %v907 = vpop.f32.mrf.mxu0
      %v908 = vadd.f32 0.0, %v907
      %v909 = vpop.f32.mrf.mxu0
      %910 = vmatprep.mubr.f32.mxu0 0.0
      %911 = vmatmul.mubr.f32.gmra.mxu0 %v811
      %v912 = vpop.f32.mrf.mxu0
      %v913 = vadd.f32 0.0, %v912
      %v914 = vpop.f32.mrf.mxu0
      %915 = vmatprep.mubr.f32.mxu0 0.0
      %916 = vmatmul.mubr.f32.gmra.mxu0 %v814
      %v917 = vpop.f32.mrf.mxu0
      %v918 = vadd.f32 0.0, %v917
      %v919 = vpop.f32.mrf.mxu0
      %920 = vdwg.mxu0
      %v921 = vadd.f32 %v771, %v883
      %v922 = vadd.f32 %v772, %v888
      %v923 = vadd.f32 %v773, %v893
      %v924 = vadd.f32 %v774, %v898
      %v925 = vadd.f32 %v775, %v903
      %v926 = vadd.f32 %v776, %v908
      %v927 = vadd.f32 %v777, %v913
      %v928 = vadd.f32 %v778, %v918
      %v929 = vld [vmem:[%s337 + $0x1] sm:$0xff]
      %v930 = vld [vmem:[%s337 + $0x11] sm:$0xff]
      %v931 = vld [vmem:[%s337 + $0x21] sm:$0xff]
      %v932 = vld [vmem:[%s337 + $0x31] sm:$0xff]
      %v933 = vld [vmem:[%s337 + $0x41] sm:$0xff]
      %v934 = vld [vmem:[%s337 + $0x51] sm:$0xff]
      %v935 = vld [vmem:[%s337 + $0x61] sm:$0xff]
      %v936 = vld [vmem:[%s337 + $0x71] sm:$0xff]
      %s937 = scalar_lea.vmem %s1, 128
      %v938 = vld [vmem:[%s937] sm:$0xff]
      %v939 = vld [vmem:[%s937 + $0x8] sm:$0xff]
      %v940 = vld [vmem:[%s937 + $0x10] sm:$0xff]
      %v941 = vld [vmem:[%s937 + $0x18] sm:$0xff]
      %v943 = vsel %vm315, %v929, 0
      %v946 = vsel %vm315, %v930, 0
      %v949 = vsel %vm315, %v931, 0
      %v952 = vsel %vm315, %v932, 0
      %v955 = vsel %vm315, %v933, 0
      %v958 = vsel %vm315, %v934, 0
      %v961 = vsel %vm315, %v935, 0
      %v964 = vsel %vm315, %v936, 0
      %966 = vmatprep.subr.mxu0 0.0
      %967 = vmatpush1.msra.mxu0 0.0
      %968 = vmatprep.subr.mxu0 0.0
      %969 = vmatpush1.msra.mxu0 0.0
      %970 = vmatprep.subr.mxu0 0.0
      %971 = vmatpush1.msra.mxu0 0.0
      %972 = vmatprep.subr.mxu0 0.0
      %973 = vmatpush1.msra.mxu0 0.0
      %974 = vmatprep.subr.mxu0 0.0
      %975 = vmatpush1.msra.mxu0 0.0
      %976 = vmatprep.subr.mxu0 0.0
      %977 = vmatpush1.msra.mxu0 0.0
      %978 = vmatprep.subr.mxu0 0.0
      %979 = vmatpush1.msra.mxu0 0.0
      %980 = vmatprep.subr.mxu0 0.0
      %981 = vmatpush1.msra.mxu0 0.0
      %982 = vmatprep.subr.mxu0 0.0
      %983 = vmatpush1.msra.mxu0 0.0
      %984 = vmatprep.subr.mxu0 0.0
      %985 = vmatpush1.msra.mxu0 0.0
      %986 = vmatprep.subr.mxu0 0.0
      %987 = vmatpush1.msra.mxu0 0.0
      %988 = vmatprep.subr.mxu0 0.0
      %989 = vmatpush1.msra.mxu0 0.0
      %990 = vmatprep.subr.mxu0 0.0
      %991 = vmatpush1.msra.mxu0 %v941
      %992 = vmatprep.subr.mxu0 0.0
      %993 = vmatpush1.msra.mxu0 %v940
      %994 = vmatprep.subr.mxu0 0.0
      %995 = vmatpush1.msra.mxu0 %v939
      %996 = vmatprep.subr.mxu0 0.0
      %997 = vmatpush1.msra.mxu0 %v938
      %998 = vmatprep.subr.mxu0 0.0
      %999 = vmatpush2.msra.mxu0 0.0
      %1000 = vmatprep.subr.mxu0 0.0
      %1001 = vmatpush2.msra.mxu0 0.0
      %1002 = vmatprep.subr.mxu0 0.0
      %1003 = vmatpush2.msra.mxu0 0.0
      %1004 = vmatprep.subr.mxu0 0.0
      %1005 = vmatpush2.msra.mxu0 0.0
      %1006 = vmatprep.subr.mxu0 0.0
      %1007 = vmatpush2.msra.mxu0 0.0
      %1008 = vmatprep.subr.mxu0 0.0
      %1009 = vmatpush2.msra.mxu0 0.0
      %1010 = vmatprep.subr.mxu0 0.0
      %1011 = vmatpush2.msra.mxu0 0.0
      %1012 = vmatprep.subr.mxu0 0.0
      %1013 = vmatpush2.msra.mxu0 0.0
      %1014 = vmatprep.subr.mxu0 0.0
      %1015 = vmatpush2.msra.mxu0 0.0
      %1016 = vmatprep.subr.mxu0 0.0
      %1017 = vmatpush2.msra.mxu0 0.0
      %1018 = vmatprep.subr.mxu0 0.0
      %1019 = vmatpush2.msra.mxu0 0.0
      %1020 = vmatprep.subr.mxu0 0.0
      %1021 = vmatpush2.msra.mxu0 0.0
      %1022 = vmatprep.subr.mxu0 0.0
      %1023 = vmatpush2.msra.mxu0 0.0
      %1024 = vmatprep.subr.mxu0 0.0
      %1025 = vmatpush2.msra.mxu0 0.0
      %1026 = vmatprep.subr.mxu0 0.0
      %1027 = vmatpush2.msra.mxu0 0.0
      %1028 = vmatprep.subr.mxu0 0.0
      %1029 = vmatpush2.msra.mxu0 0.0
      %1030 = vmatprep.mubr.f32.mxu0 0.0
      %1031 = vmatmul.mubr.f32.gmra.mxu0 %v943
      %v1032 = vpop.f32.mrf.mxu0
      %v1033 = vadd.f32 0.0, %v1032
      %v1034 = vpop.f32.mrf.mxu0
      %1035 = vmatprep.mubr.f32.mxu0 0.0
      %1036 = vmatmul.mubr.f32.gmra.mxu0 %v946
      %v1037 = vpop.f32.mrf.mxu0
      %v1038 = vadd.f32 0.0, %v1037
      %v1039 = vpop.f32.mrf.mxu0
      %1040 = vmatprep.mubr.f32.mxu0 0.0
      %1041 = vmatmul.mubr.f32.gmra.mxu0 %v949
      %v1042 = vpop.f32.mrf.mxu0
      %v1043 = vadd.f32 0.0, %v1042
      %v1044 = vpop.f32.mrf.mxu0
      %1045 = vmatprep.mubr.f32.mxu0 0.0
      %1046 = vmatmul.mubr.f32.gmra.mxu0 %v952
      %v1047 = vpop.f32.mrf.mxu0
      %v1048 = vadd.f32 0.0, %v1047
      %v1049 = vpop.f32.mrf.mxu0
      %1050 = vmatprep.mubr.f32.mxu0 0.0
      %1051 = vmatmul.mubr.f32.gmra.mxu0 %v955
      %v1052 = vpop.f32.mrf.mxu0
      %v1053 = vadd.f32 0.0, %v1052
      %v1054 = vpop.f32.mrf.mxu0
      %1055 = vmatprep.mubr.f32.mxu0 0.0
      %1056 = vmatmul.mubr.f32.gmra.mxu0 %v958
      %v1057 = vpop.f32.mrf.mxu0
      %v1058 = vadd.f32 0.0, %v1057
      %v1059 = vpop.f32.mrf.mxu0
      %1060 = vmatprep.mubr.f32.mxu0 0.0
      %1061 = vmatmul.mubr.f32.gmra.mxu0 %v961
      %v1062 = vpop.f32.mrf.mxu0
      %v1063 = vadd.f32 0.0, %v1062
      %v1064 = vpop.f32.mrf.mxu0
      %1065 = vmatprep.mubr.f32.mxu0 0.0
      %1066 = vmatmul.mubr.f32.gmra.mxu0 %v964
      %v1067 = vpop.f32.mrf.mxu0
      %v1068 = vadd.f32 0.0, %v1067
      %v1069 = vpop.f32.mrf.mxu0
      %1070 = vdwg.mxu0
      %v1071 = vadd.f32 %v921, %v1033
      %v1072 = vadd.f32 %v922, %v1038
      %v1073 = vadd.f32 %v923, %v1043
      %v1074 = vadd.f32 %v924, %v1048
      %v1075 = vadd.f32 %v925, %v1053
      %v1076 = vadd.f32 %v926, %v1058
      %v1077 = vadd.f32 %v927, %v1063
      %v1078 = vadd.f32 %v928, %v1068
      %v1079 = vld [vmem:[%s337 + $0x2] sm:$0xff]
      %v1080 = vld [vmem:[%s337 + $0x12] sm:$0xff]
      %v1081 = vld [vmem:[%s337 + $0x22] sm:$0xff]
      %v1082 = vld [vmem:[%s337 + $0x32] sm:$0xff]
      %v1083 = vld [vmem:[%s337 + $0x42] sm:$0xff]
      %v1084 = vld [vmem:[%s337 + $0x52] sm:$0xff]
      %v1085 = vld [vmem:[%s337 + $0x62] sm:$0xff]
      %v1086 = vld [vmem:[%s337 + $0x72] sm:$0xff]
      %s1087 = scalar_lea.vmem %s1, 160
      %v1088 = vld [vmem:[%s1087] sm:$0xff]
      %v1089 = vld [vmem:[%s1087 + $0x8] sm:$0xff]
      %v1090 = vld [vmem:[%s1087 + $0x10] sm:$0xff]
      %v1091 = vld [vmem:[%s1087 + $0x18] sm:$0xff]
      %v1093 = vsel %vm315, %v1079, 0
      %v1096 = vsel %vm315, %v1080, 0
      %v1099 = vsel %vm315, %v1081, 0
      %v1102 = vsel %vm315, %v1082, 0
      %v1105 = vsel %vm315, %v1083, 0
      %v1108 = vsel %vm315, %v1084, 0
      %v1111 = vsel %vm315, %v1085, 0
      %v1114 = vsel %vm315, %v1086, 0
      %1116 = vmatprep.subr.mxu0 0.0
      %1117 = vmatpush1.msra.mxu0 0.0
      %1118 = vmatprep.subr.mxu0 0.0
      %1119 = vmatpush1.msra.mxu0 0.0
      %1120 = vmatprep.subr.mxu0 0.0
      %1121 = vmatpush1.msra.mxu0 0.0
      %1122 = vmatprep.subr.mxu0 0.0
      %1123 = vmatpush1.msra.mxu0 0.0
      %1124 = vmatprep.subr.mxu0 0.0
      %1125 = vmatpush1.msra.mxu0 0.0
      %1126 = vmatprep.subr.mxu0 0.0
      %1127 = vmatpush1.msra.mxu0 0.0
      %1128 = vmatprep.subr.mxu0 0.0
      %1129 = vmatpush1.msra.mxu0 0.0
      %1130 = vmatprep.subr.mxu0 0.0
      %1131 = vmatpush1.msra.mxu0 0.0
      %1132 = vmatprep.subr.mxu0 0.0
      %1133 = vmatpush1.msra.mxu0 0.0
      %1134 = vmatprep.subr.mxu0 0.0
      %1135 = vmatpush1.msra.mxu0 0.0
      %1136 = vmatprep.subr.mxu0 0.0
      %1137 = vmatpush1.msra.mxu0 0.0
      %1138 = vmatprep.subr.mxu0 0.0
      %1139 = vmatpush1.msra.mxu0 0.0
      %1140 = vmatprep.subr.mxu0 0.0
      %1141 = vmatpush1.msra.mxu0 %v1091
      %1142 = vmatprep.subr.mxu0 0.0
      %1143 = vmatpush1.msra.mxu0 %v1090
      %1144 = vmatprep.subr.mxu0 0.0
      %1145 = vmatpush1.msra.mxu0 %v1089
      %1146 = vmatprep.subr.mxu0 0.0
      %1147 = vmatpush1.msra.mxu0 %v1088
      %1148 = vmatprep.subr.mxu0 0.0
      %1149 = vmatpush2.msra.mxu0 0.0
      %1150 = vmatprep.subr.mxu0 0.0
      %1151 = vmatpush2.msra.mxu0 0.0
      %1152 = vmatprep.subr.mxu0 0.0
      %1153 = vmatpush2.msra.mxu0 0.0
      %1154 = vmatprep.subr.mxu0 0.0
      %1155 = vmatpush2.msra.mxu0 0.0
      %1156 = vmatprep.subr.mxu0 0.0
      %1157 = vmatpush2.msra.mxu0 0.0
      %1158 = vmatprep.subr.mxu0 0.0
      %1159 = vmatpush2.msra.mxu0 0.0
      %1160 = vmatprep.subr.mxu0 0.0
      %1161 = vmatpush2.msra.mxu0 0.0
      %1162 = vmatprep.subr.mxu0 0.0
      %1163 = vmatpush2.msra.mxu0 0.0
      %1164 = vmatprep.subr.mxu0 0.0
      %1165 = vmatpush2.msra.mxu0 0.0
      %1166 = vmatprep.subr.mxu0 0.0
      %1167 = vmatpush2.msra.mxu0 0.0
      %1168 = vmatprep.subr.mxu0 0.0
      %1169 = vmatpush2.msra.mxu0 0.0
      %1170 = vmatprep.subr.mxu0 0.0
      %1171 = vmatpush2.msra.mxu0 0.0
      %1172 = vmatprep.subr.mxu0 0.0
      %1173 = vmatpush2.msra.mxu0 0.0
      %1174 = vmatprep.subr.mxu0 0.0
      %1175 = vmatpush2.msra.mxu0 0.0
      %1176 = vmatprep.subr.mxu0 0.0
      %1177 = vmatpush2.msra.mxu0 0.0
      %1178 = vmatprep.subr.mxu0 0.0
      %1179 = vmatpush2.msra.mxu0 0.0
      %1180 = vmatprep.mubr.f32.mxu0 0.0
      %1181 = vmatmul.mubr.f32.gmra.mxu0 %v1093
      %v1182 = vpop.f32.mrf.mxu0
      %v1183 = vadd.f32 0.0, %v1182
      %v1184 = vpop.f32.mrf.mxu0
      %1185 = vmatprep.mubr.f32.mxu0 0.0
      %1186 = vmatmul.mubr.f32.gmra.mxu0 %v1096
      %v1187 = vpop.f32.mrf.mxu0
      %v1188 = vadd.f32 0.0, %v1187
      %v1189 = vpop.f32.mrf.mxu0
      %1190 = vmatprep.mubr.f32.mxu0 0.0
      %1191 = vmatmul.mubr.f32.gmra.mxu0 %v1099
      %v1192 = vpop.f32.mrf.mxu0
      %v1193 = vadd.f32 0.0, %v1192
      %v1194 = vpop.f32.mrf.mxu0
      %1195 = vmatprep.mubr.f32.mxu0 0.0
      %1196 = vmatmul.mubr.f32.gmra.mxu0 %v1102
      %v1197 = vpop.f32.mrf.mxu0
      %v1198 = vadd.f32 0.0, %v1197
      %v1199 = vpop.f32.mrf.mxu0
      %1200 = vmatprep.mubr.f32.mxu0 0.0
      %1201 = vmatmul.mubr.f32.gmra.mxu0 %v1105
      %v1202 = vpop.f32.mrf.mxu0
      %v1203 = vadd.f32 0.0, %v1202
      %v1204 = vpop.f32.mrf.mxu0
      %1205 = vmatprep.mubr.f32.mxu0 0.0
      %1206 = vmatmul.mubr.f32.gmra.mxu0 %v1108
      %v1207 = vpop.f32.mrf.mxu0
      %v1208 = vadd.f32 0.0, %v1207
      %v1209 = vpop.f32.mrf.mxu0
      %1210 = vmatprep.mubr.f32.mxu0 0.0
      %1211 = vmatmul.mubr.f32.gmra.mxu0 %v1111
      %v1212 = vpop.f32.mrf.mxu0
      %v1213 = vadd.f32 0.0, %v1212
      %v1214 = vpop.f32.mrf.mxu0
      %1215 = vmatprep.mubr.f32.mxu0 0.0
      %1216 = vmatmul.mubr.f32.gmra.mxu0 %v1114
      %v1217 = vpop.f32.mrf.mxu0
      %v1218 = vadd.f32 0.0, %v1217
      %v1219 = vpop.f32.mrf.mxu0
      %1220 = vdwg.mxu0
      %v1221 = vadd.f32 %v1071, %v1183
      %v1222 = vadd.f32 %v1072, %v1188
      %v1223 = vadd.f32 %v1073, %v1193
      %v1224 = vadd.f32 %v1074, %v1198
      %v1225 = vadd.f32 %v1075, %v1203
      %v1226 = vadd.f32 %v1076, %v1208
      %v1227 = vadd.f32 %v1077, %v1213
      %v1228 = vadd.f32 %v1078, %v1218
      %s1229 = scalar_lea.vmem [#allocation2], 32
      %v1230 = vld [vmem:[%s1229] sm:$0xff]
      %v1231 = vld [vmem:[%s1229 + $0x10] sm:$0xff]
      %v1232 = vld [vmem:[%s1229 + $0x20] sm:$0xff]
      %v1233 = vld [vmem:[%s1229 + $0x30] sm:$0xff]
      %v1234 = vld [vmem:[%s1229 + $0x40] sm:$0xff]
      %v1235 = vld [vmem:[%s1229 + $0x50] sm:$0xff]
      %v1236 = vld [vmem:[%s1229 + $0x60] sm:$0xff]
      %v1237 = vld [vmem:[%s1229 + $0x70] sm:$0xff]
      %s1238 = scalar_lea.vmem %s1, 192
      %v1239 = vld [vmem:[%s1238] sm:$0xff]
      %v1240 = vld [vmem:[%s1238 + $0x8] sm:$0xff]
      %v1241 = vld [vmem:[%s1238 + $0x10] sm:$0xff]
      %v1242 = vld [vmem:[%s1238 + $0x18] sm:$0xff]
      %v1244 = vsel %vm315, %v1230, 0
      %v1247 = vsel %vm315, %v1231, 0
      %v1250 = vsel %vm315, %v1232, 0
      %v1253 = vsel %vm315, %v1233, 0
      %v1256 = vsel %vm315, %v1234, 0
      %v1259 = vsel %vm315, %v1235, 0
      %v1262 = vsel %vm315, %v1236, 0
      %v1265 = vsel %vm315, %v1237, 0
      %1267 = vmatprep.subr.mxu0 0.0
      %1268 = vmatpush1.msra.mxu0 0.0
      %1269 = vmatprep.subr.mxu0 0.0
      %1270 = vmatpush1.msra.mxu0 0.0
      %1271 = vmatprep.subr.mxu0 0.0
      %1272 = vmatpush1.msra.mxu0 0.0
      %1273 = vmatprep.subr.mxu0 0.0
      %1274 = vmatpush1.msra.mxu0 0.0
      %1275 = vmatprep.subr.mxu0 0.0
      %1276 = vmatpush1.msra.mxu0 0.0
      %1277 = vmatprep.subr.mxu0 0.0
      %1278 = vmatpush1.msra.mxu0 0.0
      %1279 = vmatprep.subr.mxu0 0.0
      %1280 = vmatpush1.msra.mxu0 0.0
      %1281 = vmatprep.subr.mxu0 0.0
      %1282 = vmatpush1.msra.mxu0 0.0
      %1283 = vmatprep.subr.mxu0 0.0
      %1284 = vmatpush1.msra.mxu0 0.0
      %1285 = vmatprep.subr.mxu0 0.0
      %1286 = vmatpush1.msra.mxu0 0.0
      %1287 = vmatprep.subr.mxu0 0.0
      %1288 = vmatpush1.msra.mxu0 0.0
      %1289 = vmatprep.subr.mxu0 0.0
      %1290 = vmatpush1.msra.mxu0 0.0
      %1291 = vmatprep.subr.mxu0 0.0
      %1292 = vmatpush1.msra.mxu0 %v1242
      %1293 = vmatprep.subr.mxu0 0.0
      %1294 = vmatpush1.msra.mxu0 %v1241
      %1295 = vmatprep.subr.mxu0 0.0
      %1296 = vmatpush1.msra.mxu0 %v1240
      %1297 = vmatprep.subr.mxu0 0.0
      %1298 = vmatpush1.msra.mxu0 %v1239
      %1299 = vmatprep.subr.mxu0 0.0
      %1300 = vmatpush2.msra.mxu0 0.0
      %1301 = vmatprep.subr.mxu0 0.0
      %1302 = vmatpush2.msra.mxu0 0.0
      %1303 = vmatprep.subr.mxu0 0.0
      %1304 = vmatpush2.msra.mxu0 0.0
      %1305 = vmatprep.subr.mxu0 0.0
      %1306 = vmatpush2.msra.mxu0 0.0
      %1307 = vmatprep.subr.mxu0 0.0
      %1308 = vmatpush2.msra.mxu0 0.0
      %1309 = vmatprep.subr.mxu0 0.0
      %1310 = vmatpush2.msra.mxu0 0.0
      %1311 = vmatprep.subr.mxu0 0.0
      %1312 = vmatpush2.msra.mxu0 0.0
      %1313 = vmatprep.subr.mxu0 0.0
      %1314 = vmatpush2.msra.mxu0 0.0
      %1315 = vmatprep.subr.mxu0 0.0
      %1316 = vmatpush2.msra.mxu0 0.0
      %1317 = vmatprep.subr.mxu0 0.0
      %1318 = vmatpush2.msra.mxu0 0.0
      %1319 = vmatprep.subr.mxu0 0.0
      %1320 = vmatpush2.msra.mxu0 0.0
      %1321 = vmatprep.subr.mxu0 0.0
      %1322 = vmatpush2.msra.mxu0 0.0
      %1323 = vmatprep.subr.mxu0 0.0
      %1324 = vmatpush2.msra.mxu0 0.0
      %1325 = vmatprep.subr.mxu0 0.0
      %1326 = vmatpush2.msra.mxu0 0.0
      %1327 = vmatprep.subr.mxu0 0.0
      %1328 = vmatpush2.msra.mxu0 0.0
      %1329 = vmatprep.subr.mxu0 0.0
      %1330 = vmatpush2.msra.mxu0 0.0
      %1331 = vmatprep.mubr.f32.mxu0 0.0
      %1332 = vmatmul.mubr.f32.gmra.mxu0 %v1244
      %v1333 = vpop.f32.mrf.mxu0
      %v1334 = vadd.f32 0.0, %v1333
      %v1335 = vpop.f32.mrf.mxu0
      %1336 = vmatprep.mubr.f32.mxu0 0.0
      %1337 = vmatmul.mubr.f32.gmra.mxu0 %v1247
      %v1338 = vpop.f32.mrf.mxu0
      %v1339 = vadd.f32 0.0, %v1338
      %v1340 = vpop.f32.mrf.mxu0
      %1341 = vmatprep.mubr.f32.mxu0 0.0
      %1342 = vmatmul.mubr.f32.gmra.mxu0 %v1250
      %v1343 = vpop.f32.mrf.mxu0
      %v1344 = vadd.f32 0.0, %v1343
      %v1345 = vpop.f32.mrf.mxu0
      %1346 = vmatprep.mubr.f32.mxu0 0.0
      %1347 = vmatmul.mubr.f32.gmra.mxu0 %v1253
      %v1348 = vpop.f32.mrf.mxu0
      %v1349 = vadd.f32 0.0, %v1348
      %v1350 = vpop.f32.mrf.mxu0
      %1351 = vmatprep.mubr.f32.mxu0 0.0
      %1352 = vmatmul.mubr.f32.gmra.mxu0 %v1256
      %v1353 = vpop.f32.mrf.mxu0
      %v1354 = vadd.f32 0.0, %v1353
      %v1355 = vpop.f32.mrf.mxu0
      %1356 = vmatprep.mubr.f32.mxu0 0.0
      %1357 = vmatmul.mubr.f32.gmra.mxu0 %v1259
      %v1358 = vpop.f32.mrf.mxu0
      %v1359 = vadd.f32 0.0, %v1358
      %v1360 = vpop.f32.mrf.mxu0
      %1361 = vmatprep.mubr.f32.mxu0 0.0
      %1362 = vmatmul.mubr.f32.gmra.mxu0 %v1262
      %v1363 = vpop.f32.mrf.mxu0
      %v1364 = vadd.f32 0.0, %v1363
      %v1365 = vpop.f32.mrf.mxu0
      %1366 = vmatprep.mubr.f32.mxu0 0.0
      %1367 = vmatmul.mubr.f32.gmra.mxu0 %v1265
      %v1368 = vpop.f32.mrf.mxu0
      %v1369 = vadd.f32 0.0, %v1368
      %v1370 = vpop.f32.mrf.mxu0
      %1371 = vdwg.mxu0
      %v1372 = vadd.f32 %v1221, %v1334
      %v1373 = vadd.f32 %v1222, %v1339
      %v1374 = vadd.f32 %v1223, %v1344
      %v1375 = vadd.f32 %v1224, %v1349
      %v1376 = vadd.f32 %v1225, %v1354
      %v1377 = vadd.f32 %v1226, %v1359
      %v1378 = vadd.f32 %v1227, %v1364
      %v1379 = vadd.f32 %v1228, %v1369
      %v1380 = vld [vmem:[%s1229 + $0x1] sm:$0xff]
      %v1381 = vld [vmem:[%s1229 + $0x11] sm:$0xff]
      %v1382 = vld [vmem:[%s1229 + $0x21] sm:$0xff]
      %v1383 = vld [vmem:[%s1229 + $0x31] sm:$0xff]
      %v1384 = vld [vmem:[%s1229 + $0x41] sm:$0xff]
      %v1385 = vld [vmem:[%s1229 + $0x51] sm:$0xff]
      %v1386 = vld [vmem:[%s1229 + $0x61] sm:$0xff]
      %v1387 = vld [vmem:[%s1229 + $0x71] sm:$0xff]
      %s1388 = scalar_lea.vmem %s1, 224
      %v1389 = vld [vmem:[%s1388] sm:$0xff]
      %v1390 = vld [vmem:[%s1388 + $0x8] sm:$0xff]
      %v1391 = vld [vmem:[%s1388 + $0x10] sm:$0xff]
      %v1392 = vld [vmem:[%s1388 + $0x18] sm:$0xff]
      %v1394 = vsel %vm315, %v1380, 0
      %v1397 = vsel %vm315, %v1381, 0
      %v1400 = vsel %vm315, %v1382, 0
      %v1403 = vsel %vm315, %v1383, 0
      %v1406 = vsel %vm315, %v1384, 0
      %v1409 = vsel %vm315, %v1385, 0
      %v1412 = vsel %vm315, %v1386, 0
      %v1415 = vsel %vm315, %v1387, 0
      %1417 = vmatprep.subr.mxu0 0.0
      %1418 = vmatpush1.msra.mxu0 0.0
      %1419 = vmatprep.subr.mxu0 0.0
      %1420 = vmatpush1.msra.mxu0 0.0
      %1421 = vmatprep.subr.mxu0 0.0
      %1422 = vmatpush1.msra.mxu0 0.0
      %1423 = vmatprep.subr.mxu0 0.0
      %1424 = vmatpush1.msra.mxu0 0.0
      %1425 = vmatprep.subr.mxu0 0.0
      %1426 = vmatpush1.msra.mxu0 0.0
      %1427 = vmatprep.subr.mxu0 0.0
      %1428 = vmatpush1.msra.mxu0 0.0
      %1429 = vmatprep.subr.mxu0 0.0
      %1430 = vmatpush1.msra.mxu0 0.0
      %1431 = vmatprep.subr.mxu0 0.0
      %1432 = vmatpush1.msra.mxu0 0.0
      %1433 = vmatprep.subr.mxu0 0.0
      %1434 = vmatpush1.msra.mxu0 0.0
      %1435 = vmatprep.subr.mxu0 0.0
      %1436 = vmatpush1.msra.mxu0 0.0
      %1437 = vmatprep.subr.mxu0 0.0
      %1438 = vmatpush1.msra.mxu0 0.0
      %1439 = vmatprep.subr.mxu0 0.0
      %1440 = vmatpush1.msra.mxu0 0.0
      %1441 = vmatprep.subr.mxu0 0.0
      %1442 = vmatpush1.msra.mxu0 %v1392
      %1443 = vmatprep.subr.mxu0 0.0
      %1444 = vmatpush1.msra.mxu0 %v1391
      %1445 = vmatprep.subr.mxu0 0.0
      %1446 = vmatpush1.msra.mxu0 %v1390
      %1447 = vmatprep.subr.mxu0 0.0
      %1448 = vmatpush1.msra.mxu0 %v1389
      %1449 = vmatprep.subr.mxu0 0.0
      %1450 = vmatpush2.msra.mxu0 0.0
      %1451 = vmatprep.subr.mxu0 0.0
      %1452 = vmatpush2.msra.mxu0 0.0
      %1453 = vmatprep.subr.mxu0 0.0
      %1454 = vmatpush2.msra.mxu0 0.0
      %1455 = vmatprep.subr.mxu0 0.0
      %1456 = vmatpush2.msra.mxu0 0.0
      %1457 = vmatprep.subr.mxu0 0.0
      %1458 = vmatpush2.msra.mxu0 0.0
      %1459 = vmatprep.subr.mxu0 0.0
      %1460 = vmatpush2.msra.mxu0 0.0
      %1461 = vmatprep.subr.mxu0 0.0
      %1462 = vmatpush2.msra.mxu0 0.0
      %1463 = vmatprep.subr.mxu0 0.0
      %1464 = vmatpush2.msra.mxu0 0.0
      %1465 = vmatprep.subr.mxu0 0.0
      %1466 = vmatpush2.msra.mxu0 0.0
      %1467 = vmatprep.subr.mxu0 0.0
      %1468 = vmatpush2.msra.mxu0 0.0
      %1469 = vmatprep.subr.mxu0 0.0
      %1470 = vmatpush2.msra.mxu0 0.0
      %1471 = vmatprep.subr.mxu0 0.0
      %1472 = vmatpush2.msra.mxu0 0.0
      %1473 = vmatprep.subr.mxu0 0.0
      %1474 = vmatpush2.msra.mxu0 0.0
      %1475 = vmatprep.subr.mxu0 0.0
      %1476 = vmatpush2.msra.mxu0 0.0
      %1477 = vmatprep.subr.mxu0 0.0
      %1478 = vmatpush2.msra.mxu0 0.0
      %1479 = vmatprep.subr.mxu0 0.0
      %1480 = vmatpush2.msra.mxu0 0.0
      %1481 = vmatprep.mubr.f32.mxu0 0.0
      %1482 = vmatmul.mubr.f32.gmra.mxu0 %v1394
      %v1483 = vpop.f32.mrf.mxu0
      %v1484 = vadd.f32 0.0, %v1483
      %v1485 = vpop.f32.mrf.mxu0
      %1486 = vmatprep.mubr.f32.mxu0 0.0
      %1487 = vmatmul.mubr.f32.gmra.mxu0 %v1397
      %v1488 = vpop.f32.mrf.mxu0
      %v1489 = vadd.f32 0.0, %v1488
      %v1490 = vpop.f32.mrf.mxu0
      %1491 = vmatprep.mubr.f32.mxu0 0.0
      %1492 = vmatmul.mubr.f32.gmra.mxu0 %v1400
      %v1493 = vpop.f32.mrf.mxu0
      %v1494 = vadd.f32 0.0, %v1493
      %v1495 = vpop.f32.mrf.mxu0
      %1496 = vmatprep.mubr.f32.mxu0 0.0
      %1497 = vmatmul.mubr.f32.gmra.mxu0 %v1403
      %v1498 = vpop.f32.mrf.mxu0
      %v1499 = vadd.f32 0.0, %v1498
      %v1500 = vpop.f32.mrf.mxu0
      %1501 = vmatprep.mubr.f32.mxu0 0.0
      %1502 = vmatmul.mubr.f32.gmra.mxu0 %v1406
      %v1503 = vpop.f32.mrf.mxu0
      %v1504 = vadd.f32 0.0, %v1503
      %v1505 = vpop.f32.mrf.mxu0
      %1506 = vmatprep.mubr.f32.mxu0 0.0
      %1507 = vmatmul.mubr.f32.gmra.mxu0 %v1409
      %v1508 = vpop.f32.mrf.mxu0
      %v1509 = vadd.f32 0.0, %v1508
      %v1510 = vpop.f32.mrf.mxu0
      %1511 = vmatprep.mubr.f32.mxu0 0.0
      %1512 = vmatmul.mubr.f32.gmra.mxu0 %v1412
      %v1513 = vpop.f32.mrf.mxu0
      %v1514 = vadd.f32 0.0, %v1513
      %v1515 = vpop.f32.mrf.mxu0
      %1516 = vmatprep.mubr.f32.mxu0 0.0
      %1517 = vmatmul.mubr.f32.gmra.mxu0 %v1415
      %v1518 = vpop.f32.mrf.mxu0
      %v1519 = vadd.f32 0.0, %v1518
      %v1520 = vpop.f32.mrf.mxu0
      %1521 = vdwg.mxu0
      %v1522 = vadd.f32 %v1372, %v1484
      %v1523 = vadd.f32 %v1373, %v1489
      %v1524 = vadd.f32 %v1374, %v1494
      %v1525 = vadd.f32 %v1375, %v1499
      %v1526 = vadd.f32 %v1376, %v1504
      %v1527 = vadd.f32 %v1377, %v1509
      %v1528 = vadd.f32 %v1378, %v1514
      %v1529 = vadd.f32 %v1379, %v1519
      %v1530 = vld [vmem:[%s1229 + $0x2] sm:$0xff]
      %v1531 = vld [vmem:[%s1229 + $0x12] sm:$0xff]
      %v1532 = vld [vmem:[%s1229 + $0x22] sm:$0xff]
      %v1533 = vld [vmem:[%s1229 + $0x32] sm:$0xff]
      %v1534 = vld [vmem:[%s1229 + $0x42] sm:$0xff]
      %v1535 = vld [vmem:[%s1229 + $0x52] sm:$0xff]
      %v1536 = vld [vmem:[%s1229 + $0x62] sm:$0xff]
      %v1537 = vld [vmem:[%s1229 + $0x72] sm:$0xff]
      %s1538 = scalar_lea.vmem %s1, 256
      %v1539 = vld [vmem:[%s1538] sm:$0xff]
      %v1540 = vld [vmem:[%s1538 + $0x8] sm:$0xff]
      %v1541 = vld [vmem:[%s1538 + $0x10] sm:$0xff]
      %v1542 = vld [vmem:[%s1538 + $0x18] sm:$0xff]
      %v1544 = vsel %vm315, %v1530, 0
      %v1547 = vsel %vm315, %v1531, 0
      %v1550 = vsel %vm315, %v1532, 0
      %v1553 = vsel %vm315, %v1533, 0
      %v1556 = vsel %vm315, %v1534, 0
      %v1559 = vsel %vm315, %v1535, 0
      %v1562 = vsel %vm315, %v1536, 0
      %v1565 = vsel %vm315, %v1537, 0
      %1567 = vmatprep.subr.mxu0 0.0
      %1568 = vmatpush1.msra.mxu0 0.0
      %1569 = vmatprep.subr.mxu0 0.0
      %1570 = vmatpush1.msra.mxu0 0.0
      %1571 = vmatprep.subr.mxu0 0.0
      %1572 = vmatpush1.msra.mxu0 0.0
      %1573 = vmatprep.subr.mxu0 0.0
      %1574 = vmatpush1.msra.mxu0 0.0
      %1575 = vmatprep.subr.mxu0 0.0
      %1576 = vmatpush1.msra.mxu0 0.0
      %1577 = vmatprep.subr.mxu0 0.0
      %1578 = vmatpush1.msra.mxu0 0.0
      %1579 = vmatprep.subr.mxu0 0.0
      %1580 = vmatpush1.msra.mxu0 0.0
      %1581 = vmatprep.subr.mxu0 0.0
      %1582 = vmatpush1.msra.mxu0 0.0
      %1583 = vmatprep.subr.mxu0 0.0
      %1584 = vmatpush1.msra.mxu0 0.0
      %1585 = vmatprep.subr.mxu0 0.0
      %1586 = vmatpush1.msra.mxu0 0.0
      %1587 = vmatprep.subr.mxu0 0.0
      %1588 = vmatpush1.msra.mxu0 0.0
      %1589 = vmatprep.subr.mxu0 0.0
      %1590 = vmatpush1.msra.mxu0 0.0
      %1591 = vmatprep.subr.mxu0 0.0
      %1592 = vmatpush1.msra.mxu0 %v1542
      %1593 = vmatprep.subr.mxu0 0.0
      %1594 = vmatpush1.msra.mxu0 %v1541
      %1595 = vmatprep.subr.mxu0 0.0
      %1596 = vmatpush1.msra.mxu0 %v1540
      %1597 = vmatprep.subr.mxu0 0.0
      %1598 = vmatpush1.msra.mxu0 %v1539
      %1599 = vmatprep.subr.mxu0 0.0
      %1600 = vmatpush2.msra.mxu0 0.0
      %1601 = vmatprep.subr.mxu0 0.0
      %1602 = vmatpush2.msra.mxu0 0.0
      %1603 = vmatprep.subr.mxu0 0.0
      %1604 = vmatpush2.msra.mxu0 0.0
      %1605 = vmatprep.subr.mxu0 0.0
      %1606 = vmatpush2.msra.mxu0 0.0
      %1607 = vmatprep.subr.mxu0 0.0
      %1608 = vmatpush2.msra.mxu0 0.0
      %1609 = vmatprep.subr.mxu0 0.0
      %1610 = vmatpush2.msra.mxu0 0.0
      %1611 = vmatprep.subr.mxu0 0.0
      %1612 = vmatpush2.msra.mxu0 0.0
      %1613 = vmatprep.subr.mxu0 0.0
      %1614 = vmatpush2.msra.mxu0 0.0
      %1615 = vmatprep.subr.mxu0 0.0
      %1616 = vmatpush2.msra.mxu0 0.0
      %1617 = vmatprep.subr.mxu0 0.0
      %1618 = vmatpush2.msra.mxu0 0.0
      %1619 = vmatprep.subr.mxu0 0.0
      %1620 = vmatpush2.msra.mxu0 0.0
      %1621 = vmatprep.subr.mxu0 0.0
      %1622 = vmatpush2.msra.mxu0 0.0
      %1623 = vmatprep.subr.mxu0 0.0
      %1624 = vmatpush2.msra.mxu0 0.0
      %1625 = vmatprep.subr.mxu0 0.0
      %1626 = vmatpush2.msra.mxu0 0.0
      %1627 = vmatprep.subr.mxu0 0.0
      %1628 = vmatpush2.msra.mxu0 0.0
      %1629 = vmatprep.subr.mxu0 0.0
      %1630 = vmatpush2.msra.mxu0 0.0
      %1631 = vmatprep.mubr.f32.mxu0 0.0
      %1632 = vmatmul.mubr.f32.gmra.mxu0 %v1544
      %v1633 = vpop.f32.mrf.mxu0
      %v1634 = vadd.f32 0.0, %v1633
      %v1635 = vpop.f32.mrf.mxu0
      %1636 = vmatprep.mubr.f32.mxu0 0.0
      %1637 = vmatmul.mubr.f32.gmra.mxu0 %v1547
      %v1638 = vpop.f32.mrf.mxu0
      %v1639 = vadd.f32 0.0, %v1638
      %v1640 = vpop.f32.mrf.mxu0
      %1641 = vmatprep.mubr.f32.mxu0 0.0
      %1642 = vmatmul.mubr.f32.gmra.mxu0 %v1550
      %v1643 = vpop.f32.mrf.mxu0
      %v1644 = vadd.f32 0.0, %v1643
      %v1645 = vpop.f32.mrf.mxu0
      %1646 = vmatprep.mubr.f32.mxu0 0.0
      %1647 = vmatmul.mubr.f32.gmra.mxu0 %v1553
      %v1648 = vpop.f32.mrf.mxu0
      %v1649 = vadd.f32 0.0, %v1648
      %v1650 = vpop.f32.mrf.mxu0
      %1651 = vmatprep.mubr.f32.mxu0 0.0
      %1652 = vmatmul.mubr.f32.gmra.mxu0 %v1556
      %v1653 = vpop.f32.mrf.mxu0
      %v1654 = vadd.f32 0.0, %v1653
      %v1655 = vpop.f32.mrf.mxu0
      %1656 = vmatprep.mubr.f32.mxu0 0.0
      %1657 = vmatmul.mubr.f32.gmra.mxu0 %v1559
      %v1658 = vpop.f32.mrf.mxu0
      %v1659 = vadd.f32 0.0, %v1658
      %v1660 = vpop.f32.mrf.mxu0
      %1661 = vmatprep.mubr.f32.mxu0 0.0
      %1662 = vmatmul.mubr.f32.gmra.mxu0 %v1562
      %v1663 = vpop.f32.mrf.mxu0
      %v1664 = vadd.f32 0.0, %v1663
      %v1665 = vpop.f32.mrf.mxu0
      %1666 = vmatprep.mubr.f32.mxu0 0.0
      %1667 = vmatmul.mubr.f32.gmra.mxu0 %v1565
      %v1668 = vpop.f32.mrf.mxu0
      %v1669 = vadd.f32 0.0, %v1668
      %v1670 = vpop.f32.mrf.mxu0
      %1671 = vdwg.mxu0
      %v1672 = vadd.f32 %v1522, %v1634
      %v1673 = vadd.f32 %v1523, %v1639
      %v1674 = vadd.f32 %v1524, %v1644
      %v1675 = vadd.f32 %v1525, %v1649
      %v1676 = vadd.f32 %v1526, %v1654
      %v1677 = vadd.f32 %v1527, %v1659
      %v1678 = vadd.f32 %v1528, %v1664
      %v1679 = vadd.f32 %v1529, %v1669
      %vm1680 = vcmask 523264
      %1681 = vst.msk [vmem:[%s262] sm:$0xff] %vm1680, %v1672
      %1682 = vst.msk [vmem:[%s262 + $0x8] sm:$0xff] %vm1680, %v1673
      %1683 = vst.msk [vmem:[%s262 + $0x10] sm:$0xff] %vm1680, %v1674
      %1684 = vst.msk [vmem:[%s262 + $0x18] sm:$0xff] %vm1680, %v1675
      %1685 = vst.msk [vmem:[%s262 + $0x20] sm:$0xff] %vm1680, %v1676
      %1686 = vst.msk [vmem:[%s262 + $0x28] sm:$0xff] %vm1680, %v1677
      %1687 = vst.msk [vmem:[%s262 + $0x30] sm:$0xff] %vm1680, %v1678
      %1688 = vst.msk [vmem:[%s262 + $0x38] sm:$0xff] %vm1680, %v1679
      %v1689 = vsel %vm1680, %v1672, 0.0
      %v1690 = vsel %vm1680, %v1673, 0.0
      %v1691 = vadd.f32 %v1689, %v1690
      %v1692 = vsel %vm1680, %v1674, 0.0
      %v1693 = vadd.f32 %v1691, %v1692
      %v1694 = vsel %vm1680, %v1675, 0.0
      %v1695 = vadd.f32 %v1693, %v1694
      %v1696 = vsel %vm1680, %v1676, 0.0
      %v1697 = vadd.f32 %v1695, %v1696
      %v1698 = vsel %vm1680, %v1677, 0.0
      %v1699 = vadd.f32 %v1697, %v1698
      %v1700 = vsel %vm1680, %v1678, 0.0
      %v1701 = vadd.f32 %v1699, %v1700
      %v1702 = vsel %vm1680, %v1679, 0.0
      %v1703 = vadd.f32 %v1701, %v1702
      %v1704 = vrot.slane %v1703, 4
      %v1705 = vadd.f32 %v1703, %v1704
      %v1706 = vrot.slane %v1705, 2
      %v1707 = vadd.f32 %v1705, %v1706
      %v1708 = vrot.slane %v1707, 1
      %v1709 = vadd.f32 %v1707, %v1708
      %vm1710 = vcmask 516096
      %1711 = vst.msk [vmem:[%s265] sm:$0x1] %vm1710, %v1709
      %v1712 = vmul.f32 %v1672, %v1672
      %v1713 = vmul.f32 %v1673, %v1673
      %v1714 = vmul.f32 %v1674, %v1674
      %v1715 = vmul.f32 %v1675, %v1675
      %v1716 = vmul.f32 %v1676, %v1676
      %v1717 = vmul.f32 %v1677, %v1677
      %v1718 = vmul.f32 %v1678, %v1678
      %v1719 = vmul.f32 %v1679, %v1679
      %v1720 = vsel %vm1680, %v1712, 0.0
      %v1721 = vsel %vm1680, %v1713, 0.0
      %v1722 = vadd.f32 %v1720, %v1721
      %v1723 = vsel %vm1680, %v1714, 0.0
      %v1724 = vadd.f32 %v1722, %v1723
      %v1725 = vsel %vm1680, %v1715, 0.0
      %v1726 = vadd.f32 %v1724, %v1725
      %v1727 = vsel %vm1680, %v1716, 0.0
      %v1728 = vadd.f32 %v1726, %v1727
      %v1729 = vsel %vm1680, %v1717, 0.0
      %v1730 = vadd.f32 %v1728, %v1729
      %v1731 = vsel %vm1680, %v1718, 0.0
      %v1732 = vadd.f32 %v1730, %v1731
      %v1733 = vsel %vm1680, %v1719, 0.0
      %v1734 = vadd.f32 %v1732, %v1733
      %v1735 = vrot.slane %v1734, 4
      %v1736 = vadd.f32 %v1734, %v1735
      %v1737 = vrot.slane %v1736, 2
      %v1738 = vadd.f32 %v1736, %v1737
      %v1739 = vrot.slane %v1738, 1
      %v1740 = vadd.f32 %v1738, %v1739
      %1741 = vst.msk [vmem:[%s268] sm:$0x1] %vm1710, %v1740
      %p1742 = scmp.lt.s32.totalorder %s18, 1
      %s1743 = scalar_select %p1742, %s18, 1
      %s1744 = smul.addr %s1743, 8
      %s1745 = smul.addr %s1744, 8
      %s1746 = scalar_lea.vmem %s4, %s1745
      %p1747 = scmp.lt.s32.totalorder %s18, 1
      %s1748 = scalar_select %p1747, %s18, 1
      %s1749 = scalar_lea.vmem %s5, %s1748
      %p1750 = scmp.lt.s32.totalorder %s18, 1
      %s1751 = scalar_select %p1750, %s18, 1
      %s1752 = scalar_lea.vmem %s6, %s1751
      // Predicated region
      $region37: #{conv_block_forward.4} parent=35 // pred_check
        %p1753 = pneg %p125
      $region38: #{conv_block_forward.4} parent=35 // pred_check_branch
        %1755 = sbr.rel (%p1753) target = $region40
      $region39: #{conv_block_forward.4} parent=35 // pred_region
        _
      $region40: #{conv_block_forward.4} parent=35 // pred_fallthru
        _
      // Predicated region
      $region41: #{conv_block_forward.4} parent=35 // pred_check
        %p1756 = pneg %p151
      $region42: #{conv_block_forward.4} parent=35 // pred_check_branch
        %1758 = sbr.rel (%p1756) target = $region44
      $region43: #{conv_block_forward.4} parent=35 // pred_region
        _
      $region44: #{conv_block_forward.4} parent=35 // pred_fallthru
        _
      // Predicated region
      $region45: #{conv_block_forward.4} parent=35 // pred_check
        %p1759 = pneg %p177
      $region46: #{conv_block_forward.4} parent=35 // pred_check_branch
        %1761 = sbr.rel (%p1759) target = $region48
      $region47: #{conv_block_forward.4} parent=35 // pred_region
        _
      $region48: #{conv_block_forward.4} parent=35 // pred_fallthru
        _
    $region36: #{conv_block_forward.4} parent=5 // pred_fallthru
      _
    %p1762 = scmp.le.s32.totalorder 2, %s13
    // Predicated region
    $region49: #{conv_block_forward.4} parent=5 // pred_check
      %p1763 = pneg %p1762
    $region50: #{conv_block_forward.4} parent=5 // pred_check_branch
      %1765 = sbr.rel (%p1763) target = $region52
    $region51: #{conv_block_forward.4} parent=5 // pred_region
      %s1766 = ssub.s32 %s13, 2
      // Predicated region
      $region53: #{conv_block_forward.4} parent=51 // pred_check
        %p1767 = pneg %p131
      $region54: #{conv_block_forward.4} parent=51 // pred_check_branch
        %1769 = sbr.rel (%p1767) target = $region56
      $region55: #{conv_block_forward.4} parent=51 // pred_region
        %p1770 = scmp.lt.s32.totalorder %s19, 1
        %s1771 = scalar_select %p1770, %s19, 1
        %s1772 = smul.addr %s1771, 8
        %s1773 = smul.addr %s1772, 8
        %s1774 = scalar_lea.vmem %s4, %s1773
      $region56: #{conv_block_forward.4} parent=51 // pred_fallthru
        _
      // Predicated region
      $region57: #{conv_block_forward.4} parent=51 // pred_check
        %p1775 = pneg %p157
      $region58: #{conv_block_forward.4} parent=51 // pred_check_branch
        %1777 = sbr.rel (%p1775) target = $region60
      $region59: #{conv_block_forward.4} parent=51 // pred_region
        %p1778 = scmp.lt.s32.totalorder %s19, 1
        %s1779 = scalar_select %p1778, %s19, 1
        %s1780 = scalar_lea.vmem %s5, %s1779
      $region60: #{conv_block_forward.4} parent=51 // pred_fallthru
        _
      // Predicated region
      $region61: #{conv_block_forward.4} parent=51 // pred_check
        %p1781 = pneg %p183
      $region62: #{conv_block_forward.4} parent=51 // pred_check_branch
        %1783 = sbr.rel (%p1781) target = $region64
      $region63: #{conv_block_forward.4} parent=51 // pred_region
        %p1784 = scmp.lt.s32.totalorder %s19, 1
        %s1785 = scalar_select %p1784, %s19, 1
        %s1786 = scalar_lea.vmem %s6, %s1785
      $region64: #{conv_block_forward.4} parent=51 // pred_fallthru
        _
    $region52: #{conv_block_forward.4} parent=5 // pred_fallthru
      _
  $region6: #{conv_block_forward.4} parent=0 // loop_footer
    %s17 = sadd.s32 1, %s13
  $region7: #{conv_block_forward.4} parent=0 // loop_footer_branch
    %12 = sbr.rel target = $region3
  $region8: #{conv_block_forward.4} parent=0 // loop_exit
    _

</llo_original>
